<compile_context>
chip_gen: v7x
topology: tpu7x:2x2x1
jax: 0.10.0
libtpu: 0.0.40
codegen_flags: <defaults>
</compile_context>

<pallas_src>
import functools

import jax
import jax.numpy as jnp
import numpy as np
from jax.experimental import pallas as pl
from jax.experimental.pallas import tpu as pltpu

C1, C2, C3 = 128, 256, 128        # channel widths of conv1/conv2/conv3
K1, K2, K3 = 7, 5, 3              # time-kernel sizes
P1, P2, P3 = 3, 2, 1              # time paddings
MATMUL_DTYPE = jnp.bfloat16       # matmul-input dtype (f32 accumulation)


def _round_up(v, m):
    return ((v + m - 1) // m) * m


def _shifted_rows(h, d):
    """out[i] = h[i + d], zero-filled outside [0, N).  Static shift."""
    if d == 0:
        return h
    n, c = h.shape
    z = jnp.zeros((abs(d), c), h.dtype)
    if d > 0:
        return jnp.concatenate([h[d:], z], axis=0)
    return jnp.concatenate([z, h[: n + d]], axis=0)


def _im2col_taps(h_f32, tpos, T, K, P, out_dtype):
    """Lane-concat K time-shifted copies of flat (N, C) activations.

    Per-sample zero padding is realized by masking rows whose tap would cross
    a sample boundary (tpos is the time index of each row within its sample).
    """
    cols = []
    for k in range(K):
        d = k - P
        s = _shifted_rows(h_f32, d)
        if d != 0:
            valid = jnp.logical_and(tpos + d >= 0, tpos + d < T)
            s = jnp.where(valid, s, 0.0)
        cols.append(s.astype(out_dtype))
    return jnp.concatenate(cols, axis=1)


def _convnet_kernel(T, x_ref, pool_ref, w1_ref, t1_ref, w2_ref, t2_ref,
                    w3_ref, t3_ref, w4_ref, b4_ref, out_ref):
    N = x_ref.shape[0]                                   # B_tile * T
    # time position of each flattened row within its sample
    row = jax.lax.broadcasted_iota(jnp.int32, (N, 1), 0)
    tpos = row % T

    # ---- conv1 (+folded BN1) + ReLU : (N, K1) @ (K1, C1) ----
    h1 = jnp.dot(x_ref[...], w1_ref[...], preferred_element_type=jnp.float32)
    h1 = jnp.maximum(h1 + t1_ref[...], 0.0)

    # ---- conv2 (+folded BN2) + ReLU : (N, K2*C1) @ (K2*C1, C2) ----
    lhs2 = _im2col_taps(h1, tpos, T, K2, P2, w2_ref.dtype)
    h2 = jnp.dot(lhs2, w2_ref[...], preferred_element_type=jnp.float32)
    h2 = jnp.maximum(h2 + t2_ref[...], 0.0)

    # ---- conv3 (+folded BN3) + ReLU : (N, K3*C2) @ (K3*C2, C3) ----
    lhs3 = _im2col_taps(h2, tpos, T, K3, P3, w3_ref.dtype)
    h3 = jnp.dot(lhs3, w3_ref[...], preferred_element_type=jnp.float32)
    h3 = jnp.maximum(h3 + t3_ref[...], 0.0)

    # ---- avg_pool2d(2) over time, then mean over time ----
    # == per-sample mean over the first 2*(T//2) steps; one tiny matmul.
    feat = jnp.dot(pool_ref[...], h3.astype(pool_ref.dtype),
                   preferred_element_type=jnp.float32)    # (B_tile, C3)

    # ---- fc4 + log_softmax (lane-dense; padded logits carry -1e30 bias) ----
    logits = jnp.dot(feat.astype(w4_ref.dtype), w4_ref[...],
                     preferred_element_type=jnp.float32) + b4_ref[...]
    m = jnp.max(logits, axis=1, keepdims=True)
    z = logits - m
    lse = jnp.log(jnp.sum(jnp.exp(z), axis=1, keepdims=True))
    out_ref[...] = (z - lse).astype(out_ref.dtype)


def convnet_forward(x, params, n_classes, *, batch_tile=None):
    """x: (B, n_in) float32 -> (B, n_classes) log-probabilities."""
    (w1f, t1, w2f, t2, w3f, t3, w4p, b4p) = params
    B, T = x.shape
    nc_pad = w4p.shape[1]

    if batch_tile is None:
        # Fill the MXU M dimension (>=256 rows for v6e/v7x, >=128 for v5e)
        # and keep the output block's sublane dim a multiple of 8.
        batch_tile = max(8, _round_up(pl.cdiv(256, T), 8))
    bt = batch_tile
    n_tiles = pl.cdiv(B, bt)
    B_pad = n_tiles * bt
    N = bt * T

    # host-side glue: per-sample time padding + im2col for the 1-channel conv1
    xp = jnp.pad(x.astype(jnp.float32), ((0, B_pad - B), (P1, P1)))
    xc = jnp.stack([xp[:, k:k + T] for k in range(K1)], axis=-1)   # (B_pad,T,K1)
    xc = xc.reshape(B_pad * T, K1).astype(MATMUL_DTYPE)

    # pooling matrix: per-sample mean over the first 2*(T//2) time steps
    Tp = 2 * (T // 2)
    rows = np.arange(bt).reshape(-1, 1)
    cols = np.arange(N).reshape(1, -1)
    pool_np = np.where((cols // T == rows) & ((cols % T) < Tp), 1.0 / Tp, 0.0)
    pool = jnp.asarray(pool_np, jnp.float32).astype(MATMUL_DTYPE)  # (bt, N)

    kernel = functools.partial(_convnet_kernel, T)
    grid_spec = pltpu.PrefetchScalarGridSpec(
        num_scalar_prefetch=0,
        grid=(n_tiles,),
        in_specs=[
            pl.BlockSpec((N, K1), lambda b: (b, 0)),            # x im2col
            pl.BlockSpec((bt, N), lambda b: (0, 0)),            # pooling matrix
            pl.BlockSpec((K1, C1), lambda b: (0, 0)),           # w1 (BN-folded)
            pl.BlockSpec((1, C1), lambda b: (0, 0)),            # shift1
            pl.BlockSpec((K2 * C1, C2), lambda b: (0, 0)),      # w2 im2col
            pl.BlockSpec((1, C2), lambda b: (0, 0)),            # shift2
            pl.BlockSpec((K3 * C2, C3), lambda b: (0, 0)),      # w3 im2col
            pl.BlockSpec((1, C3), lambda b: (0, 0)),            # shift3
            pl.BlockSpec((C3, nc_pad), lambda b: (0, 0)),       # w4 (padded)
            pl.BlockSpec((1, nc_pad), lambda b: (0, 0)),        # b4 (padded)
        ],
        out_specs=pl.BlockSpec((bt, nc_pad), lambda b: (b, 0)),
    )
    out = pl.pallas_call(
        kernel,
        out_shape=jax.ShapeDtypeStruct((B_pad, nc_pad), jnp.float32),
        grid_spec=grid_spec,
        compiler_params=pltpu.CompilerParams(
            dimension_semantics=("parallel",),
            # well under v7x's 64 MiB physical VMEM; plenty on v5e/v6e
            vmem_limit_bytes=48 * 1024 * 1024),
    )(xc, pool, w1f, t1, w2f, t2, w3f, t3, w4p, b4p)
    return out[:B, :n_classes]


def convnet_reference(x, params, n_classes):
    """Pure-JAX reference of the same math (bf16 matmul inputs, f32 accum)."""
    (w1f, t1, w2f, t2, w3f, t3, w4p, b4p) = params
    B, T = x.shape
    xp = jnp.pad(x.astype(jnp.float32), ((0, 0), (P1, P1)))
    xc = jnp.stack([xp[:, k:k + T] for k in range(K1)], axis=-1)   # (B, T, K1)
    h1 = jax.nn.relu(
        jnp.einsum('btk,kc->btc', xc.astype(w1f.dtype), w1f,
                   preferred_element_type=jnp.float32) + t1)

    def conv_bn_relu(h, w_flat, shift, K, P):
        hb = h.astype(w_flat.dtype)
        hp = jnp.pad(hb, ((0, 0), (P, P), (0, 0)))
        lhs = jnp.concatenate([hp[:, k:k + T, :] for k in range(K)], axis=-1)
        out = jnp.einsum('btk,kc->btc', lhs, w_flat,
                         preferred_element_type=jnp.float32)
        return jax.nn.relu(out + shift)

    h2 = conv_bn_relu(h1, w2f, t2, K2, P2)
    h3 = conv_bn_relu(h2, w3f, t3, K3, P3)

    Tp = 2 * (T // 2)
    pw = jnp.zeros((T,), jnp.float32).at[:Tp].set(1.0 / Tp).astype(w2f.dtype)
    feat = jnp.einsum('t,btc->bc', pw, h3.astype(w2f.dtype),
                      preferred_element_type=jnp.float32)

    logits = jnp.dot(feat.astype(w4p.dtype), w4p[:, :n_classes],
                     preferred_element_type=jnp.float32) + b4p[:, :n_classes]
    return jax.nn.log_softmax(logits, axis=1)


def _fold_conv_bn(b_conv, gamma, beta, mean, var, eps=1e-5):
    scale = gamma * jax.lax.rsqrt(var + eps)
    shift = beta + (b_conv - mean) * scale
    return scale, shift


def make_params(key, n_classes):
    ks = jax.random.split(key, 20)
    f32 = jnp.float32
    nc_pad = _round_up(max(n_classes, 1), 128)

    def norm(k, shape, s=0.1):
        return (s * jax.random.normal(k, shape)).astype(f32)

    def bn(k0, k1, k2, k3, c):
        gamma = (1.0 + 0.1 * jax.random.normal(k0, (c,))).astype(f32)
        beta = norm(k1, (c,))
        mean = norm(k2, (c,))
        var = jax.random.uniform(k3, (c,), minval=0.5, maxval=1.5).astype(f32)
        return gamma, beta, mean, var

    # conv weights in (kernel_tap, in_ch, out_ch) layout; conv1 has in_ch == 1
    w1 = norm(ks[0], (K1, C1), 0.3)
    b1 = norm(ks[1], (C1,))
    w2 = norm(ks[2], (K2, C1, C2), 0.05)
    b2 = norm(ks[3], (C2,))
    w3 = norm(ks[4], (K3, C2, C3), 0.05)
    b3 = norm(ks[5], (C3,))
    w4 = norm(ks[6], (C3, n_classes), 0.1)
    b4 = norm(ks[7], (1, n_classes))

    s1, t1 = _fold_conv_bn(b1, *bn(ks[8], ks[9], ks[10], ks[11], C1))
    s2, t2 = _fold_conv_bn(b2, *bn(ks[12], ks[13], ks[14], ks[15], C2))
    s3, t3 = _fold_conv_bn(b3, *bn(ks[16], ks[17], ks[18], ks[19], C3))

    # fold the BN scale into the conv weights; reshape to im2col (K*Cin, Cout)
    w1f = (w1 * s1[None, :]).astype(MATMUL_DTYPE)                    # (K1, C1)
    w2f = (w2 * s2[None, None, :]).reshape(K2 * C1, C2).astype(MATMUL_DTYPE)
    w3f = (w3 * s3[None, None, :]).reshape(K3 * C2, C3).astype(MATMUL_DTYPE)

    # fc4 padded to a lane-dense output; padded logits get a -1e30 bias so
    # they never win the max and contribute exp(.) == 0 to the softmax sum.
    w4p = jnp.zeros((C3, nc_pad), f32).at[:, :n_classes].set(w4)
    w4p = w4p.astype(MATMUL_DTYPE)
    b4p = jnp.full((1, nc_pad), -1e30, f32).at[:, :n_classes].set(b4)

    return (w1f, t1[None, :], w2f, t2[None, :], w3f, t3[None, :], w4p, b4p)


if __name__ == "__main__":
    B, n_in, n_classes = 2, 16, 10
    key = jax.random.PRNGKey(0)
    kx, kp = jax.random.split(key)

    params = make_params(kp, n_classes)
    x = jax.random.normal(kx, (B, n_in), dtype=jnp.float32)

    out = convnet_forward(x, params, n_classes)
    out = jax.block_until_ready(out)

    ref = convnet_reference(x, params, n_classes)
    assert out.shape == (B, n_classes)
    assert np.allclose(np.asarray(out), np.asarray(ref), atol=2e-3, rtol=2e-3), (
        "Pallas kernel mismatch vs pure-JAX reference")
    print("KERNEL_OK")
</pallas_src>

<mosaic_0001>
module attributes {stable_mosaic.version = 11 : i64} {
  func.func @_convnet_kernel(%arg0: i32, %arg1: memref<256x7xbf16, #tpu.memory_space<vmem>>, %arg2: memref<16x256xbf16, #tpu.memory_space<vmem>>, %arg3: memref<7x128xbf16, #tpu.memory_space<vmem>>, %arg4: memref<1x128xf32, #tpu.memory_space<vmem>>, %arg5: memref<640x256xbf16, #tpu.memory_space<vmem>>, %arg6: memref<1x256xf32, #tpu.memory_space<vmem>>, %arg7: memref<768x128xbf16, #tpu.memory_space<vmem>>, %arg8: memref<1x128xf32, #tpu.memory_space<vmem>>, %arg9: memref<128x128xbf16, #tpu.memory_space<vmem>>, %arg10: memref<1x128xf32, #tpu.memory_space<vmem>>, %arg11: memref<16x128xf32, #tpu.memory_space<vmem>>) attributes {dimension_semantics = [#tpu.dimension_semantics<parallel>], iteration_bounds = array<i64: 1>, scalar_prefetch = 0 : i64, scratch_operands = 0 : i64, tpu.core_type = #tpu.core_type<tc>, window_params = [{transform_indices = @transform_0, window_bounds = array<i64: 256, 7>}, {pipeline_mode = #tpu.pipeline_mode<synchronous>, transform_indices = @transform_1, window_bounds = array<i64: 16, 256>}, {pipeline_mode = #tpu.pipeline_mode<synchronous>, transform_indices = @transform_2, window_bounds = array<i64: 7, 128>}, {pipeline_mode = #tpu.pipeline_mode<synchronous>, transform_indices = @transform_3, window_bounds = array<i64: 1, 128>}, {pipeline_mode = #tpu.pipeline_mode<synchronous>, transform_indices = @transform_4, window_bounds = array<i64: 640, 256>}, {pipeline_mode = #tpu.pipeline_mode<synchronous>, transform_indices = @transform_5, window_bounds = array<i64: 1, 256>}, {pipeline_mode = #tpu.pipeline_mode<synchronous>, transform_indices = @transform_6, window_bounds = array<i64: 768, 128>}, {pipeline_mode = #tpu.pipeline_mode<synchronous>, transform_indices = @transform_7, window_bounds = array<i64: 1, 128>}, {pipeline_mode = #tpu.pipeline_mode<synchronous>, transform_indices = @transform_8, window_bounds = array<i64: 128, 128>}, {pipeline_mode = #tpu.pipeline_mode<synchronous>, transform_indices = @transform_9, window_bounds = array<i64: 1, 128>}, {transform_indices = @transform_10, window_bounds = array<i64: 16, 128>}]} {
    %0 = tpu.iota {dimensions = array<i32: 0>} : vector<256x1xi32>
    %c16_i32 = arith.constant 16 : i32
    %c0_i32 = arith.constant 0 : i32
    %1 = arith.cmpi eq, %c16_i32, %c0_i32 : i32
    %c1_i32 = arith.constant 1 : i32
    %2 = arith.select %1, %c1_i32, %c16_i32 : i32
    %3 = vector.broadcast %2 : i32 to vector<256x1xi32>
    %4 = arith.remsi %0, %3 : vector<256x1xi32>
    %c0_i32_0 = arith.constant 0 : i32
    %5 = vector.broadcast %c0_i32_0 : i32 to vector<256x1xi32>
    %6 = arith.cmpi ne, %4, %5 : vector<256x1xi32>
    %c0_i32_1 = arith.constant 0 : i32
    %7 = vector.broadcast %c0_i32_1 : i32 to vector<256x1xi32>
    %8 = arith.cmpi slt, %4, %7 : vector<256x1xi32>
    %c0_i32_2 = arith.constant 0 : i32
    %9 = arith.cmpi slt, %2, %c0_i32_2 : i32
    %10 = vector.broadcast %9 : i1 to vector<256x1xi1>
    %11 = vector.broadcast %10 : vector<256x1xi1> to vector<256x1xi1>
    %12 = arith.xori %8, %11 : vector<256x1xi1>
    %13 = arith.andi %12, %6 : vector<256x1xi1>
    %14 = vector.broadcast %2 : i32 to vector<256x1xi32>
    %15 = arith.addi %4, %14 : vector<256x1xi32>
    %16 = arith.select %13, %15, %4 : vector<256x1xi1>, vector<256x1xi32>
    %c0 = arith.constant 0 : index
    %c0_3 = arith.constant 0 : index
    %17 = vector.load %arg1[%c0, %c0_3] : memref<256x7xbf16, #tpu.memory_space<vmem>>, vector<256x7xbf16>
    %c0_4 = arith.constant 0 : index
    %c0_5 = arith.constant 0 : index
    %18 = vector.load %arg3[%c0_4, %c0_5] : memref<7x128xbf16, #tpu.memory_space<vmem>>, vector<7x128xbf16>
    %cst = arith.constant dense<0.000000e+00> : vector<256x128xf32>
    %19 = tpu.matmul %17, %18, %cst {dimension_numbers = #tpu.dot_dimension_numbers<[1], [0], [0], [1], [0, 0, 1, 1], [], []>} : vector<256x7xbf16>, vector<7x128xbf16>, vector<256x128xf32> -> vector<256x128xf32>
    %c0_6 = arith.constant 0 : index
    %c0_7 = arith.constant 0 : index
    %20 = vector.load %arg4[%c0_6, %c0_7] : memref<1x128xf32, #tpu.memory_space<vmem>>, vector<1x128xf32>
    %21 = vector.broadcast %20 : vector<1x128xf32> to vector<256x128xf32>
    %22 = arith.addf %19, %21 : vector<256x128xf32>
    %cst_8 = arith.constant 0.000000e+00 : f32
    %23 = vector.broadcast %cst_8 : f32 to vector<256x128xf32>
    %24 = arith.maximumf %22, %23 : vector<256x128xf32>
    %cst_9 = arith.constant 0.000000e+00 : f32
    %25 = vector.broadcast %cst_9 : f32 to vector<2x128xf32>
    %26 = vector.extract_strided_slice %24 {offsets = [0, 0], sizes = [254, 128], strides = [1, 1]} : vector<256x128xf32> to vector<254x128xf32>
    %27 = tpu.concatenate %25, %26 in 0 : vector<2x128xf32>, vector<254x128xf32> -> vector<256x128xf32>
    %c-2_i32 = arith.constant -2 : i32
    %28 = vector.broadcast %c-2_i32 : i32 to vector<256x1xi32>
    %29 = arith.addi %16, %28 : vector<256x1xi32>
    %c0_i32_10 = arith.constant 0 : i32
    %30 = vector.broadcast %c0_i32_10 : i32 to vector<256x1xi32>
    %31 = arith.cmpi sge, %29, %30 : vector<256x1xi32>
    %c-2_i32_11 = arith.constant -2 : i32
    %32 = vector.broadcast %c-2_i32_11 : i32 to vector<256x1xi32>
    %33 = arith.addi %16, %32 : vector<256x1xi32>
    %c16_i32_12 = arith.constant 16 : i32
    %34 = vector.broadcast %c16_i32_12 : i32 to vector<256x1xi32>
    %35 = arith.cmpi slt, %33, %34 : vector<256x1xi32>
    %36 = arith.andi %31, %35 : vector<256x1xi1>
    %cst_13 = arith.constant 0.000000e+00 : f32
    %37 = vector.shape_cast %36 : vector<256x1xi1> to vector<256x1xi1>
    %38 = vector.broadcast %37 : vector<256x1xi1> to vector<256x128xi1>
    %39 = vector.broadcast %cst_13 : f32 to vector<256x128xf32>
    %40 = arith.select %38, %27, %39 : vector<256x128xi1>, vector<256x128xf32>
    %41 = arith.truncf %40 : vector<256x128xf32> to vector<256x128xbf16>
    %cst_14 = arith.constant 0.000000e+00 : f32
    %42 = vector.broadcast %cst_14 : f32 to vector<1x128xf32>
    %43 = vector.extract_strided_slice %24 {offsets = [0, 0], sizes = [255, 128], strides = [1, 1]} : vector<256x128xf32> to vector<255x128xf32>
    %44 = tpu.concatenate %42, %43 in 0 : vector<1x128xf32>, vector<255x128xf32> -> vector<256x128xf32>
    %c-1_i32 = arith.constant -1 : i32
    %45 = vector.broadcast %c-1_i32 : i32 to vector<256x1xi32>
    %46 = arith.addi %16, %45 : vector<256x1xi32>
    %c0_i32_15 = arith.constant 0 : i32
    %47 = vector.broadcast %c0_i32_15 : i32 to vector<256x1xi32>
    %48 = arith.cmpi sge, %46, %47 : vector<256x1xi32>
    %c-1_i32_16 = arith.constant -1 : i32
    %49 = vector.broadcast %c-1_i32_16 : i32 to vector<256x1xi32>
    %50 = arith.addi %16, %49 : vector<256x1xi32>
    %c16_i32_17 = arith.constant 16 : i32
    %51 = vector.broadcast %c16_i32_17 : i32 to vector<256x1xi32>
    %52 = arith.cmpi slt, %50, %51 : vector<256x1xi32>
    %53 = arith.andi %48, %52 : vector<256x1xi1>
    %cst_18 = arith.constant 0.000000e+00 : f32
    %54 = vector.shape_cast %53 : vector<256x1xi1> to vector<256x1xi1>
    %55 = vector.broadcast %54 : vector<256x1xi1> to vector<256x128xi1>
    %56 = vector.broadcast %cst_18 : f32 to vector<256x128xf32>
    %57 = arith.select %55, %44, %56 : vector<256x128xi1>, vector<256x128xf32>
    %58 = arith.truncf %57 : vector<256x128xf32> to vector<256x128xbf16>
    %59 = arith.truncf %24 : vector<256x128xf32> to vector<256x128xbf16>
    %cst_19 = arith.constant 0.000000e+00 : f32
    %60 = vector.broadcast %cst_19 : f32 to vector<1x128xf32>
    %61 = vector.extract_strided_slice %24 {offsets = [1, 0], sizes = [255, 128], strides = [1, 1]} : vector<256x128xf32> to vector<255x128xf32>
    %62 = tpu.concatenate %61, %60 in 0 : vector<255x128xf32>, vector<1x128xf32> -> vector<256x128xf32>
    %c1_i32_20 = arith.constant 1 : i32
    %63 = vector.broadcast %c1_i32_20 : i32 to vector<256x1xi32>
    %64 = arith.addi %16, %63 : vector<256x1xi32>
    %c0_i32_21 = arith.constant 0 : i32
    %65 = vector.broadcast %c0_i32_21 : i32 to vector<256x1xi32>
    %66 = arith.cmpi sge, %64, %65 : vector<256x1xi32>
    %c1_i32_22 = arith.constant 1 : i32
    %67 = vector.broadcast %c1_i32_22 : i32 to vector<256x1xi32>
    %68 = arith.addi %16, %67 : vector<256x1xi32>
    %c16_i32_23 = arith.constant 16 : i32
    %69 = vector.broadcast %c16_i32_23 : i32 to vector<256x1xi32>
    %70 = arith.cmpi slt, %68, %69 : vector<256x1xi32>
    %71 = arith.andi %66, %70 : vector<256x1xi1>
    %cst_24 = arith.constant 0.000000e+00 : f32
    %72 = vector.shape_cast %71 : vector<256x1xi1> to vector<256x1xi1>
    %73 = vector.broadcast %72 : vector<256x1xi1> to vector<256x128xi1>
    %74 = vector.broadcast %cst_24 : f32 to vector<256x128xf32>
    %75 = arith.select %73, %62, %74 : vector<256x128xi1>, vector<256x128xf32>
    %76 = arith.truncf %75 : vector<256x128xf32> to vector<256x128xbf16>
    %cst_25 = arith.constant 0.000000e+00 : f32
    %77 = vector.broadcast %cst_25 : f32 to vector<2x128xf32>
    %78 = vector.extract_strided_slice %24 {offsets = [2, 0], sizes = [254, 128], strides = [1, 1]} : vector<256x128xf32> to vector<254x128xf32>
    %79 = tpu.concatenate %78, %77 in 0 : vector<254x128xf32>, vector<2x128xf32> -> vector<256x128xf32>
    %c2_i32 = arith.constant 2 : i32
    %80 = vector.broadcast %c2_i32 : i32 to vector<256x1xi32>
    %81 = arith.addi %16, %80 : vector<256x1xi32>
    %c0_i32_26 = arith.constant 0 : i32
    %82 = vector.broadcast %c0_i32_26 : i32 to vector<256x1xi32>
    %83 = arith.cmpi sge, %81, %82 : vector<256x1xi32>
    %c2_i32_27 = arith.constant 2 : i32
    %84 = vector.broadcast %c2_i32_27 : i32 to vector<256x1xi32>
    %85 = arith.addi %16, %84 : vector<256x1xi32>
    %c16_i32_28 = arith.constant 16 : i32
    %86 = vector.broadcast %c16_i32_28 : i32 to vector<256x1xi32>
    %87 = arith.cmpi slt, %85, %86 : vector<256x1xi32>
    %88 = arith.andi %83, %87 : vector<256x1xi1>
    %cst_29 = arith.constant 0.000000e+00 : f32
    %89 = vector.shape_cast %88 : vector<256x1xi1> to vector<256x1xi1>
    %90 = vector.broadcast %89 : vector<256x1xi1> to vector<256x128xi1>
    %91 = vector.broadcast %cst_29 : f32 to vector<256x128xf32>
    %92 = arith.select %90, %79, %91 : vector<256x128xi1>, vector<256x128xf32>
    %93 = arith.truncf %92 : vector<256x128xf32> to vector<256x128xbf16>
    %94 = tpu.concatenate %41, %58, %59, %76, %93 in 1 : vector<256x128xbf16>, vector<256x128xbf16>, vector<256x128xbf16>, vector<256x128xbf16>, vector<256x128xbf16> -> vector<256x640xbf16>
    %c0_30 = arith.constant 0 : index
    %c0_31 = arith.constant 0 : index
    %95 = vector.load %arg5[%c0_30, %c0_31] : memref<640x256xbf16, #tpu.memory_space<vmem>>, vector<640x256xbf16>
    %cst_32 = arith.constant dense<0.000000e+00> : vector<256x256xf32>
    %96 = tpu.matmul %94, %95, %cst_32 {dimension_numbers = #tpu.dot_dimension_numbers<[1], [0], [0], [1], [0, 0, 1, 1], [], []>} : vector<256x640xbf16>, vector<640x256xbf16>, vector<256x256xf32> -> vector<256x256xf32>
    %c0_33 = arith.constant 0 : index
    %c0_34 = arith.constant 0 : index
    %97 = vector.load %arg6[%c0_33, %c0_34] : memref<1x256xf32, #tpu.memory_space<vmem>>, vector<1x256xf32>
    %98 = vector.broadcast %97 : vector<1x256xf32> to vector<256x256xf32>
    %99 = arith.addf %96, %98 : vector<256x256xf32>
    %cst_35 = arith.constant 0.000000e+00 : f32
    %100 = vector.broadcast %cst_35 : f32 to vector<256x256xf32>
    %101 = arith.maximumf %99, %100 : vector<256x256xf32>
    %cst_36 = arith.constant 0.000000e+00 : f32
    %102 = vector.broadcast %cst_36 : f32 to vector<1x256xf32>
    %103 = vector.extract_strided_slice %101 {offsets = [0, 0], sizes = [255, 256], strides = [1, 1]} : vector<256x256xf32> to vector<255x256xf32>
    %104 = tpu.concatenate %102, %103 in 0 : vector<1x256xf32>, vector<255x256xf32> -> vector<256x256xf32>
    %c-1_i32_37 = arith.constant -1 : i32
    %105 = vector.broadcast %c-1_i32_37 : i32 to vector<256x1xi32>
    %106 = arith.addi %16, %105 : vector<256x1xi32>
    %c0_i32_38 = arith.constant 0 : i32
    %107 = vector.broadcast %c0_i32_38 : i32 to vector<256x1xi32>
    %108 = arith.cmpi sge, %106, %107 : vector<256x1xi32>
    %c-1_i32_39 = arith.constant -1 : i32
    %109 = vector.broadcast %c-1_i32_39 : i32 to vector<256x1xi32>
    %110 = arith.addi %16, %109 : vector<256x1xi32>
    %c16_i32_40 = arith.constant 16 : i32
    %111 = vector.broadcast %c16_i32_40 : i32 to vector<256x1xi32>
    %112 = arith.cmpi slt, %110, %111 : vector<256x1xi32>
    %113 = arith.andi %108, %112 : vector<256x1xi1>
    %cst_41 = arith.constant 0.000000e+00 : f32
    %114 = vector.shape_cast %113 : vector<256x1xi1> to vector<256x1xi1>
    %115 = vector.broadcast %114 : vector<256x1xi1> to vector<256x256xi1>
    %116 = vector.broadcast %cst_41 : f32 to vector<256x256xf32>
    %117 = arith.select %115, %104, %116 : vector<256x256xi1>, vector<256x256xf32>
    %118 = arith.truncf %117 : vector<256x256xf32> to vector<256x256xbf16>
    %119 = arith.truncf %101 : vector<256x256xf32> to vector<256x256xbf16>
    %cst_42 = arith.constant 0.000000e+00 : f32
    %120 = vector.broadcast %cst_42 : f32 to vector<1x256xf32>
    %121 = vector.extract_strided_slice %101 {offsets = [1, 0], sizes = [255, 256], strides = [1, 1]} : vector<256x256xf32> to vector<255x256xf32>
    %122 = tpu.concatenate %121, %120 in 0 : vector<255x256xf32>, vector<1x256xf32> -> vector<256x256xf32>
    %c1_i32_43 = arith.constant 1 : i32
    %123 = vector.broadcast %c1_i32_43 : i32 to vector<256x1xi32>
    %124 = arith.addi %16, %123 : vector<256x1xi32>
    %c0_i32_44 = arith.constant 0 : i32
    %125 = vector.broadcast %c0_i32_44 : i32 to vector<256x1xi32>
    %126 = arith.cmpi sge, %124, %125 : vector<256x1xi32>
    %c1_i32_45 = arith.constant 1 : i32
    %127 = vector.broadcast %c1_i32_45 : i32 to vector<256x1xi32>
    %128 = arith.addi %16, %127 : vector<256x1xi32>
    %c16_i32_46 = arith.constant 16 : i32
    %129 = vector.broadcast %c16_i32_46 : i32 to vector<256x1xi32>
    %130 = arith.cmpi slt, %128, %129 : vector<256x1xi32>
    %131 = arith.andi %126, %130 : vector<256x1xi1>
    %cst_47 = arith.constant 0.000000e+00 : f32
    %132 = vector.shape_cast %131 : vector<256x1xi1> to vector<256x1xi1>
    %133 = vector.broadcast %132 : vector<256x1xi1> to vector<256x256xi1>
    %134 = vector.broadcast %cst_47 : f32 to vector<256x256xf32>
    %135 = arith.select %133, %122, %134 : vector<256x256xi1>, vector<256x256xf32>
    %136 = arith.truncf %135 : vector<256x256xf32> to vector<256x256xbf16>
    %137 = tpu.concatenate %118, %119, %136 in 1 : vector<256x256xbf16>, vector<256x256xbf16>, vector<256x256xbf16> -> vector<256x768xbf16>
    %c0_48 = arith.constant 0 : index
    %c0_49 = arith.constant 0 : index
    %138 = vector.load %arg7[%c0_48, %c0_49] : memref<768x128xbf16, #tpu.memory_space<vmem>>, vector<768x128xbf16>
    %cst_50 = arith.constant dense<0.000000e+00> : vector<256x128xf32>
    %139 = tpu.matmul %137, %138, %cst_50 {dimension_numbers = #tpu.dot_dimension_numbers<[1], [0], [0], [1], [0, 0, 1, 1], [], []>} : vector<256x768xbf16>, vector<768x128xbf16>, vector<256x128xf32> -> vector<256x128xf32>
    %c0_51 = arith.constant 0 : index
    %c0_52 = arith.constant 0 : index
    %140 = vector.load %arg8[%c0_51, %c0_52] : memref<1x128xf32, #tpu.memory_space<vmem>>, vector<1x128xf32>
    %141 = vector.broadcast %140 : vector<1x128xf32> to vector<256x128xf32>
    %142 = arith.addf %139, %141 : vector<256x128xf32>
    %cst_53 = arith.constant 0.000000e+00 : f32
    %143 = vector.broadcast %cst_53 : f32 to vector<256x128xf32>
    %144 = arith.maximumf %142, %143 : vector<256x128xf32>
    %c0_54 = arith.constant 0 : index
    %c0_55 = arith.constant 0 : index
    %145 = vector.load %arg2[%c0_54, %c0_55] : memref<16x256xbf16, #tpu.memory_space<vmem>>, vector<16x256xbf16>
    %146 = arith.truncf %144 : vector<256x128xf32> to vector<256x128xbf16>
    %cst_56 = arith.constant dense<0.000000e+00> : vector<16x128xf32>
    %147 = tpu.matmul %145, %146, %cst_56 {dimension_numbers = #tpu.dot_dimension_numbers<[1], [0], [0], [1], [0, 0, 1, 1], [], []>} : vector<16x256xbf16>, vector<256x128xbf16>, vector<16x128xf32> -> vector<16x128xf32>
    %148 = arith.truncf %147 : vector<16x128xf32> to vector<16x128xbf16>
    %c0_57 = arith.constant 0 : index
    %c0_58 = arith.constant 0 : index
    %149 = vector.load %arg9[%c0_57, %c0_58] : memref<128x128xbf16, #tpu.memory_space<vmem>>, vector<128x128xbf16>
    %cst_59 = arith.constant dense<0.000000e+00> : vector<16x128xf32>
    %150 = tpu.matmul %148, %149, %cst_59 {dimension_numbers = #tpu.dot_dimension_numbers<[1], [0], [0], [1], [0, 0, 1, 1], [], []>} : vector<16x128xbf16>, vector<128x128xbf16>, vector<16x128xf32> -> vector<16x128xf32>
    %c0_60 = arith.constant 0 : index
    %c0_61 = arith.constant 0 : index
    %151 = vector.load %arg10[%c0_60, %c0_61] : memref<1x128xf32, #tpu.memory_space<vmem>>, vector<1x128xf32>
    %152 = vector.broadcast %151 : vector<1x128xf32> to vector<16x128xf32>
    %153 = arith.addf %150, %152 : vector<16x128xf32>
    %cst_62 = arith.constant dense<0xFF800000> : vector<16xf32>
    %154 = vector.multi_reduction <maximumf>, %153, %cst_62 [1] : vector<16x128xf32> to vector<16xf32>
    %155 = vector.shape_cast %154 : vector<16xf32> to vector<16x1xf32>
    %156 = vector.broadcast %155 : vector<16x1xf32> to vector<16x128xf32>
    %157 = arith.subf %153, %156 : vector<16x128xf32>
    %158 = math.exp %157 : vector<16x128xf32>
    %cst_63 = arith.constant dense<0.000000e+00> : vector<16xf32>
    %159 = vector.multi_reduction <add>, %158, %cst_63 [1] : vector<16x128xf32> to vector<16xf32>
    %160 = vector.shape_cast %159 : vector<16xf32> to vector<16x1xf32>
    %161 = math.log %160 : vector<16x1xf32>
    %162 = vector.broadcast %161 : vector<16x1xf32> to vector<16x128xf32>
    %163 = arith.subf %157, %162 : vector<16x128xf32>
    %c0_64 = arith.constant 0 : index
    %c0_65 = arith.constant 0 : index
    %164 = vector.load %arg11[%c0_64, %c0_65] : memref<16x128xf32, #tpu.memory_space<vmem>>, vector<16x128xf32>
    tpu.vector_store %arg11[%c0_64, %c0_65], %163 {strides = array<i32>} : memref<16x128xf32, #tpu.memory_space<vmem>>, vector<16x128xf32>,
    return
  }
  func.func @transform_0(%arg0: i32) -> (i32, i32) {
    %c0_i32 = arith.constant 0 : i32
    %c0_i32_0 = arith.constant 0 : i32
    return %arg0, %c0_i32 : i32, i32
  }
  func.func @transform_1(%arg0: i32) -> (i32, i32) {
    %c0_i32 = arith.constant 0 : i32
    %c0_i32_0 = arith.constant 0 : i32
    %c0_i32_1 = arith.constant 0 : i32
    return %c0_i32, %c0_i32_0 : i32, i32
  }
  func.func @transform_2(%arg0: i32) -> (i32, i32) {
    %c0_i32 = arith.constant 0 : i32
    %c0_i32_0 = arith.constant 0 : i32
    %c0_i32_1 = arith.constant 0 : i32
    return %c0_i32, %c0_i32_0 : i32, i32
  }
  func.func @transform_3(%arg0: i32) -> (i32, i32) {
    %c0_i32 = arith.constant 0 : i32
    %c0_i32_0 = arith.constant 0 : i32
    %c0_i32_1 = arith.constant 0 : i32
    return %c0_i32, %c0_i32_0 : i32, i32
  }
  func.func @transform_4(%arg0: i32) -> (i32, i32) {
    %c0_i32 = arith.constant 0 : i32
    %c0_i32_0 = arith.constant 0 : i32
    %c0_i32_1 = arith.constant 0 : i32
    return %c0_i32, %c0_i32_0 : i32, i32
  }
  func.func @transform_5(%arg0: i32) -> (i32, i32) {
    %c0_i32 = arith.constant 0 : i32
    %c0_i32_0 = arith.constant 0 : i32
    %c0_i32_1 = arith.constant 0 : i32
    return %c0_i32, %c0_i32_0 : i32, i32
  }
  func.func @transform_6(%arg0: i32) -> (i32, i32) {
    %c0_i32 = arith.constant 0 : i32
    %c0_i32_0 = arith.constant 0 : i32
    %c0_i32_1 = arith.constant 0 : i32
    return %c0_i32, %c0_i32_0 : i32, i32
  }
  func.func @transform_7(%arg0: i32) -> (i32, i32) {
    %c0_i32 = arith.constant 0 : i32
    %c0_i32_0 = arith.constant 0 : i32
    %c0_i32_1 = arith.constant 0 : i32
    return %c0_i32, %c0_i32_0 : i32, i32
  }
  func.func @transform_8(%arg0: i32) -> (i32, i32) {
    %c0_i32 = arith.constant 0 : i32
    %c0_i32_0 = arith.constant 0 : i32
    %c0_i32_1 = arith.constant 0 : i32
    return %c0_i32, %c0_i32_0 : i32, i32
  }
  func.func @transform_9(%arg0: i32) -> (i32, i32) {
    %c0_i32 = arith.constant 0 : i32
    %c0_i32_0 = arith.constant 0 : i32
    %c0_i32_1 = arith.constant 0 : i32
    return %c0_i32, %c0_i32_0 : i32, i32
  }
  func.func @transform_10(%arg0: i32) -> (i32, i32) {
    %c0_i32 = arith.constant 0 : i32
    %c0_i32_0 = arith.constant 0 : i32
    return %arg0, %c0_i32 : i32, i32
  }
}

</mosaic_0001>

<llo_original>
// kernel: tpu_custom_call.1
$region0: #{tpu_custom_call.1}
  #allocation0 [shape = 'u32[]', space=smem, size = 0x4, offset = 0x4, fixed_abs, tag = 'smem constant byte address 0x4 - core index']
  #allocation1 [shape = 'u32[144,128]{1,0:T(1,128)}', space=vmem, size = 0x12000, scoped, tag = 'internal scratch']
  %s0 = inlined_call_operand.vmem [shape: bf16[256,7], index: 0, kind: input, shape index: {}]
  %s1 = inlined_call_operand.vmem [shape: bf16[16,256], index: 1, kind: input, shape index: {}]
  %s2 = inlined_call_operand.vmem [shape: bf16[7,128], index: 2, kind: input, shape index: {}]
  %s3 = inlined_call_operand.vmem [shape: f32[1,128], index: 3, kind: input, shape index: {}]
  %s4 = inlined_call_operand.hbm [shape: bf16[640,256], index: 4, kind: input, shape index: {}]
  %s5 = inlined_call_operand.vmem [shape: f32[1,256], index: 5, kind: input, shape index: {}]
  %s6 = inlined_call_operand.hbm [shape: bf16[768,128], index: 6, kind: input, shape index: {}]
  %s7 = inlined_call_operand.vmem [shape: f32[1,128], index: 7, kind: input, shape index: {}]
  %s8 = inlined_call_operand.vmem [shape: bf16[128,128], index: 8, kind: input, shape index: {}]
  %s9 = inlined_call_operand.vmem [shape: f32[1,128], index: 9, kind: input, shape index: {}]
  %s10 = inlined_call_operand.hbm [shape: f32[16,128], index: 10, kind: output, shape index: {}]
  %s11 = sld [smem:[#allocation0]]
  $region58: #{tpu_custom_call.1} parent=0
    _
  %s13 = ssub.s32 1, %s11
  %s14 = scalar_select 0, %s13, %s11
  $region1: #{tpu_custom_call.1} parent=0
    #allocation2 [shape = 'u8[327680]{0}', space=vmem, size = 0x50000, scoped, tag = 'input window, operand 4, single buffered']
    #allocation3 [shape = 's32[1]{0}', space=sflag, size = 0x4, scoped, tag = 'scoped memory for tpu_custom_call.1']
    #allocation4 [shape = 's32[1]{0}', space=sflag, size = 0x4, scoped, tag = 'scoped memory for tpu_custom_call.1']
    #allocation5 [shape = 'u8[196608]{0}', space=vmem, size = 0x30000, scoped, tag = 'input window, operand 6, single buffered']
    #allocation6 [shape = 's32[1]{0}', space=sflag, size = 0x4, scoped, tag = 'scoped memory for tpu_custom_call.1']
    #allocation7 [shape = 'u8[8192]{0}', space=vmem, size = 0x2000, scoped, tag = 'output window, operand 0, single buffered']
    %15 = vsyncpa [#allocation3], 0
    %16 = vsyncpa [#allocation6], 0
    %17 = vsyncpa [#allocation4], 0
    // Predicated region
    $region2: #{tpu_custom_call.1} parent=1 // pred_check
      _
    $region3: #{tpu_custom_call.1} parent=1 // pred_check_branch
      %19 = sbr.rel (0) target = $region5
    $region4: #{tpu_custom_call.1} parent=1 // pred_region
      _
    $region5: #{tpu_custom_call.1} parent=1 // pred_fallthru
      _
    // Predicated region
    $region6: #{tpu_custom_call.1} parent=1 // pred_check
      _
    $region7: #{tpu_custom_call.1} parent=1 // pred_check_branch
      %21 = sbr.rel (0) target = $region9
    $region8: #{tpu_custom_call.1} parent=1 // pred_region
      _
    $region9: #{tpu_custom_call.1} parent=1 // pred_fallthru
      _
    // Predicated region
    $region10: #{tpu_custom_call.1} parent=1 // pred_check
      _
    $region11: #{tpu_custom_call.1} parent=1 // pred_check_branch
      %23 = sbr.rel (0) target = $region13
    $region12: #{tpu_custom_call.1} parent=1 // pred_region
      _
    $region13: #{tpu_custom_call.1} parent=1 // pred_fallthru
      _
    // Predicated region
    $region14: #{tpu_custom_call.1} parent=1 // pred_check
      _
    $region15: #{tpu_custom_call.1} parent=1 // pred_check_branch
      %25 = sbr.rel (0) target = $region17
    $region16: #{tpu_custom_call.1} parent=1 // pred_region
      _
    $region17: #{tpu_custom_call.1} parent=1 // pred_fallthru
      _
    // Predicated region
    $region18: #{tpu_custom_call.1} parent=1 // pred_check
      _
    $region19: #{tpu_custom_call.1} parent=1 // pred_check_branch
      %27 = sbr.rel (0) target = $region21
    $region20: #{tpu_custom_call.1} parent=1 // pred_region
      %s29 = ssub.s32 10240, 10240
      %30 = vsyncadd [#allocation3], %s29
      %s31 = sshll.u32 [#allocation2], 4
      %s32 = int_to_ptr.vmem [resolvable:$true] %s31
      %37 = dma.hbm_to_vmem [thread:$0]  %s4, 10240, %s32, [#allocation3], 128, 128, 8
    $region21: #{tpu_custom_call.1} parent=1 // pred_fallthru
      _
    // Predicated region
    $region22: #{tpu_custom_call.1} parent=1 // pred_check
      _
    $region23: #{tpu_custom_call.1} parent=1 // pred_check_branch
      %39 = sbr.rel (0) target = $region25
    $region24: #{tpu_custom_call.1} parent=1 // pred_region
      _
    $region25: #{tpu_custom_call.1} parent=1 // pred_fallthru
      _
    // Predicated region
    $region26: #{tpu_custom_call.1} parent=1 // pred_check
      _
    $region27: #{tpu_custom_call.1} parent=1 // pred_check_branch
      %41 = sbr.rel (0) target = $region29
    $region28: #{tpu_custom_call.1} parent=1 // pred_region
      %s43 = ssub.s32 6144, 6144
      %44 = vsyncadd [#allocation6], %s43
      %s45 = sshll.u32 [#allocation5], 4
      %s46 = int_to_ptr.vmem [resolvable:$true] %s45
      %51 = dma.hbm_to_vmem [thread:$0]  %s6, 6144, %s46, [#allocation6], 64, 64, 4
    $region29: #{tpu_custom_call.1} parent=1 // pred_fallthru
      _
    // Predicated region
    $region30: #{tpu_custom_call.1} parent=1 // pred_check
      _
    $region31: #{tpu_custom_call.1} parent=1 // pred_check_branch
      %53 = sbr.rel (0) target = $region33
    $region32: #{tpu_custom_call.1} parent=1 // pred_region
      _
    $region33: #{tpu_custom_call.1} parent=1 // pred_fallthru
      _
    // Predicated region
    $region34: #{tpu_custom_call.1} parent=1 // pred_check
      _
    $region35: #{tpu_custom_call.1} parent=1 // pred_check_branch
      %55 = sbr.rel (0) target = $region37
    $region36: #{tpu_custom_call.1} parent=1 // pred_region
      _
    $region37: #{tpu_custom_call.1} parent=1 // pred_fallthru
      _
    // Predicated region
    $region38: #{tpu_custom_call.1} parent=1 // pred_check
      _
    $region39: #{tpu_custom_call.1} parent=1 // pred_check_branch
      %57 = sbr.rel (0) target = $region41
    $region40: #{tpu_custom_call.1} parent=1 // pred_region
      _
    $region41: #{tpu_custom_call.1} parent=1 // pred_fallthru
      _
    // Predicated region
    $region42: #{tpu_custom_call.1} parent=1 // pred_check
      _
    $region43: #{tpu_custom_call.1} parent=1 // pred_check_branch
      %59 = sbr.rel (0) target = $region45
    $region44: #{tpu_custom_call.1} parent=1 // pred_region
      %60 = dma.done [#allocation3], 10240
    $region45: #{tpu_custom_call.1} parent=1 // pred_fallthru
      _
    // Predicated region
    $region46: #{tpu_custom_call.1} parent=1 // pred_check
      _
    $region47: #{tpu_custom_call.1} parent=1 // pred_check_branch
      %62 = sbr.rel (0) target = $region49
    $region48: #{tpu_custom_call.1} parent=1 // pred_region
      %63 = dma.done [#allocation6], 6144
    $region49: #{tpu_custom_call.1} parent=1 // pred_fallthru
      _
    %v65 = vlaneseq
    %v66 = vshrl.u32 %v65, 7
    %v67 = vadd.s32 %v66, 8
    %v68 = vadd.s32 %v66, 16
    %v69 = vadd.s32 %v66, 24
    %v70 = vadd.s32 %v66, 32
    %v71 = vadd.s32 %v66, 40
    %v72 = vadd.s32 %v66, 48
    %v73 = vadd.s32 %v66, 56
    %v74 = vadd.s32 %v66, 64
    %v75 = vadd.s32 %v66, 72
    %v76 = vadd.s32 %v66, 80
    %v77 = vadd.s32 %v66, 88
    %v78 = vadd.s32 %v66, 96
    %v79 = vadd.s32 %v66, 104
    %v80 = vadd.s32 %v66, 112
    %v81 = vadd.s32 %v66, 120
    %v82 = vadd.s32 %v66, 128
    %v83 = vadd.s32 %v66, 136
    %v84 = vadd.s32 %v66, 144
    %v85 = vadd.s32 %v66, 152
    %v86 = vadd.s32 %v66, 160
    %v87 = vadd.s32 %v66, 168
    %v88 = vadd.s32 %v66, 176
    %v89 = vadd.s32 %v66, 184
    %v90 = vadd.s32 %v66, 192
    %v91 = vadd.s32 %v66, 200
    %v92 = vadd.s32 %v66, 208
    %v93 = vadd.s32 %v66, 216
    %v94 = vadd.s32 %v66, 224
    %v95 = vadd.s32 %v66, 232
    %v96 = vadd.s32 %v66, 240
    %v97 = vadd.s32 %v66, 248
    %vm98 = vcmp.lt.s32.totalorder %v66, 0
    %v99 = vsub.s32 0, %v66
    %v100 = vsel %vm98, %v99, %v66
    %v101 = vshrl.u32 %v100, 4
    %v102 = vand.u32 %v100, 15
    %v103 = vsub.s32 0, %v102
    %v104 = vsel %vm98, %v103, %v102
    %vm105 = vcmp.lt.s32.totalorder %v67, 0
    %v106 = vsub.s32 0, %v67
    %v107 = vsel %vm105, %v106, %v67
    %v108 = vshrl.u32 %v107, 4
    %v109 = vand.u32 %v107, 15
    %v110 = vsub.s32 0, %v109
    %v111 = vsel %vm105, %v110, %v109
    %vm112 = vcmp.lt.s32.totalorder %v68, 0
    %v113 = vsub.s32 0, %v68
    %v114 = vsel %vm112, %v113, %v68
    %v115 = vshrl.u32 %v114, 4
    %v116 = vand.u32 %v114, 15
    %v117 = vsub.s32 0, %v116
    %v118 = vsel %vm112, %v117, %v116
    %vm119 = vcmp.lt.s32.totalorder %v69, 0
    %v120 = vsub.s32 0, %v69
    %v121 = vsel %vm119, %v120, %v69
    %v122 = vshrl.u32 %v121, 4
    %v123 = vand.u32 %v121, 15
    %v124 = vsub.s32 0, %v123
    %v125 = vsel %vm119, %v124, %v123
    %vm126 = vcmp.lt.s32.totalorder %v70, 0
    %v127 = vsub.s32 0, %v70
    %v128 = vsel %vm126, %v127, %v70
    %v129 = vshrl.u32 %v128, 4
    %v130 = vand.u32 %v128, 15
    %v131 = vsub.s32 0, %v130
    %v132 = vsel %vm126, %v131, %v130
    %vm133 = vcmp.lt.s32.totalorder %v71, 0
    %v134 = vsub.s32 0, %v71
    %v135 = vsel %vm133, %v134, %v71
    %v136 = vshrl.u32 %v135, 4
    %v137 = vand.u32 %v135, 15
    %v138 = vsub.s32 0, %v137
    %v139 = vsel %vm133, %v138, %v137
    %vm140 = vcmp.lt.s32.totalorder %v72, 0
    %v141 = vsub.s32 0, %v72
    %v142 = vsel %vm140, %v141, %v72
    %v143 = vshrl.u32 %v142, 4
    %v144 = vand.u32 %v142, 15
    %v145 = vsub.s32 0, %v144
    %v146 = vsel %vm140, %v145, %v144
    %vm147 = vcmp.lt.s32.totalorder %v73, 0
    %v148 = vsub.s32 0, %v73
    %v149 = vsel %vm147, %v148, %v73
    %v150 = vshrl.u32 %v149, 4
    %v151 = vand.u32 %v149, 15
    %v152 = vsub.s32 0, %v151
    %v153 = vsel %vm147, %v152, %v151
    %vm154 = vcmp.lt.s32.totalorder %v74, 0
    %v155 = vsub.s32 0, %v74
    %v156 = vsel %vm154, %v155, %v74
    %v157 = vshrl.u32 %v156, 4
    %v158 = vand.u32 %v156, 15
    %v159 = vsub.s32 0, %v158
    %v160 = vsel %vm154, %v159, %v158
    %vm161 = vcmp.lt.s32.totalorder %v75, 0
    %v162 = vsub.s32 0, %v75
    %v163 = vsel %vm161, %v162, %v75
    %v164 = vshrl.u32 %v163, 4
    %v165 = vand.u32 %v163, 15
    %v166 = vsub.s32 0, %v165
    %v167 = vsel %vm161, %v166, %v165
    %vm168 = vcmp.lt.s32.totalorder %v76, 0
    %v169 = vsub.s32 0, %v76
    %v170 = vsel %vm168, %v169, %v76
    %v171 = vshrl.u32 %v170, 4
    %v172 = vand.u32 %v170, 15
    %v173 = vsub.s32 0, %v172
    %v174 = vsel %vm168, %v173, %v172
    %vm175 = vcmp.lt.s32.totalorder %v77, 0
    %v176 = vsub.s32 0, %v77
    %v177 = vsel %vm175, %v176, %v77
    %v178 = vshrl.u32 %v177, 4
    %v179 = vand.u32 %v177, 15
    %v180 = vsub.s32 0, %v179
    %v181 = vsel %vm175, %v180, %v179
    %vm182 = vcmp.lt.s32.totalorder %v78, 0
    %v183 = vsub.s32 0, %v78
    %v184 = vsel %vm182, %v183, %v78
    %v185 = vshrl.u32 %v184, 4
    %v186 = vand.u32 %v184, 15
    %v187 = vsub.s32 0, %v186
    %v188 = vsel %vm182, %v187, %v186
    %vm189 = vcmp.lt.s32.totalorder %v79, 0
    %v190 = vsub.s32 0, %v79
    %v191 = vsel %vm189, %v190, %v79
    %v192 = vshrl.u32 %v191, 4
    %v193 = vand.u32 %v191, 15
    %v194 = vsub.s32 0, %v193
    %v195 = vsel %vm189, %v194, %v193
    %vm196 = vcmp.lt.s32.totalorder %v80, 0
    %v197 = vsub.s32 0, %v80
    %v198 = vsel %vm196, %v197, %v80
    %v199 = vshrl.u32 %v198, 4
    %v200 = vand.u32 %v198, 15
    %v201 = vsub.s32 0, %v200
    %v202 = vsel %vm196, %v201, %v200
    %vm203 = vcmp.lt.s32.totalorder %v81, 0
    %v204 = vsub.s32 0, %v81
    %v205 = vsel %vm203, %v204, %v81
    %v206 = vshrl.u32 %v205, 4
    %v207 = vand.u32 %v205, 15
    %v208 = vsub.s32 0, %v207
    %v209 = vsel %vm203, %v208, %v207
    %vm210 = vcmp.lt.s32.totalorder %v82, 0
    %v211 = vsub.s32 0, %v82
    %v212 = vsel %vm210, %v211, %v82
    %v213 = vshrl.u32 %v212, 4
    %v214 = vand.u32 %v212, 15
    %v215 = vsub.s32 0, %v214
    %v216 = vsel %vm210, %v215, %v214
    %vm217 = vcmp.lt.s32.totalorder %v83, 0
    %v218 = vsub.s32 0, %v83
    %v219 = vsel %vm217, %v218, %v83
    %v220 = vshrl.u32 %v219, 4
    %v221 = vand.u32 %v219, 15
    %v222 = vsub.s32 0, %v221
    %v223 = vsel %vm217, %v222, %v221
    %vm224 = vcmp.lt.s32.totalorder %v84, 0
    %v225 = vsub.s32 0, %v84
    %v226 = vsel %vm224, %v225, %v84
    %v227 = vshrl.u32 %v226, 4
    %v228 = vand.u32 %v226, 15
    %v229 = vsub.s32 0, %v228
    %v230 = vsel %vm224, %v229, %v228
    %vm231 = vcmp.lt.s32.totalorder %v85, 0
    %v232 = vsub.s32 0, %v85
    %v233 = vsel %vm231, %v232, %v85
    %v234 = vshrl.u32 %v233, 4
    %v235 = vand.u32 %v233, 15
    %v236 = vsub.s32 0, %v235
    %v237 = vsel %vm231, %v236, %v235
    %vm238 = vcmp.lt.s32.totalorder %v86, 0
    %v239 = vsub.s32 0, %v86
    %v240 = vsel %vm238, %v239, %v86
    %v241 = vshrl.u32 %v240, 4
    %v242 = vand.u32 %v240, 15
    %v243 = vsub.s32 0, %v242
    %v244 = vsel %vm238, %v243, %v242
    %vm245 = vcmp.lt.s32.totalorder %v87, 0
    %v246 = vsub.s32 0, %v87
    %v247 = vsel %vm245, %v246, %v87
    %v248 = vshrl.u32 %v247, 4
    %v249 = vand.u32 %v247, 15
    %v250 = vsub.s32 0, %v249
    %v251 = vsel %vm245, %v250, %v249
    %vm252 = vcmp.lt.s32.totalorder %v88, 0
    %v253 = vsub.s32 0, %v88
    %v254 = vsel %vm252, %v253, %v88
    %v255 = vshrl.u32 %v254, 4
    %v256 = vand.u32 %v254, 15
    %v257 = vsub.s32 0, %v256
    %v258 = vsel %vm252, %v257, %v256
    %vm259 = vcmp.lt.s32.totalorder %v89, 0
    %v260 = vsub.s32 0, %v89
    %v261 = vsel %vm259, %v260, %v89
    %v262 = vshrl.u32 %v261, 4
    %v263 = vand.u32 %v261, 15
    %v264 = vsub.s32 0, %v263
    %v265 = vsel %vm259, %v264, %v263
    %vm266 = vcmp.lt.s32.totalorder %v90, 0
    %v267 = vsub.s32 0, %v90
    %v268 = vsel %vm266, %v267, %v90
    %v269 = vshrl.u32 %v268, 4
    %v270 = vand.u32 %v268, 15
    %v271 = vsub.s32 0, %v270
    %v272 = vsel %vm266, %v271, %v270
    %vm273 = vcmp.lt.s32.totalorder %v91, 0
    %v274 = vsub.s32 0, %v91
    %v275 = vsel %vm273, %v274, %v91
    %v276 = vshrl.u32 %v275, 4
    %v277 = vand.u32 %v275, 15
    %v278 = vsub.s32 0, %v277
    %v279 = vsel %vm273, %v278, %v277
    %vm280 = vcmp.lt.s32.totalorder %v92, 0
    %v281 = vsub.s32 0, %v92
    %v282 = vsel %vm280, %v281, %v92
    %v283 = vshrl.u32 %v282, 4
    %v284 = vand.u32 %v282, 15
    %v285 = vsub.s32 0, %v284
    %v286 = vsel %vm280, %v285, %v284
    %vm287 = vcmp.lt.s32.totalorder %v93, 0
    %v288 = vsub.s32 0, %v93
    %v289 = vsel %vm287, %v288, %v93
    %v290 = vshrl.u32 %v289, 4
    %v291 = vand.u32 %v289, 15
    %v292 = vsub.s32 0, %v291
    %v293 = vsel %vm287, %v292, %v291
    %vm294 = vcmp.lt.s32.totalorder %v94, 0
    %v295 = vsub.s32 0, %v94
    %v296 = vsel %vm294, %v295, %v94
    %v297 = vshrl.u32 %v296, 4
    %v298 = vand.u32 %v296, 15
    %v299 = vsub.s32 0, %v298
    %v300 = vsel %vm294, %v299, %v298
    %vm301 = vcmp.lt.s32.totalorder %v95, 0
    %v302 = vsub.s32 0, %v95
    %v303 = vsel %vm301, %v302, %v95
    %v304 = vshrl.u32 %v303, 4
    %v305 = vand.u32 %v303, 15
    %v306 = vsub.s32 0, %v305
    %v307 = vsel %vm301, %v306, %v305
    %vm308 = vcmp.lt.s32.totalorder %v96, 0
    %v309 = vsub.s32 0, %v96
    %v310 = vsel %vm308, %v309, %v96
    %v311 = vshrl.u32 %v310, 4
    %v312 = vand.u32 %v310, 15
    %v313 = vsub.s32 0, %v312
    %v314 = vsel %vm308, %v313, %v312
    %vm315 = vcmp.lt.s32.totalorder %v97, 0
    %v316 = vsub.s32 0, %v97
    %v317 = vsel %vm315, %v316, %v97
    %v318 = vshrl.u32 %v317, 4
    %v319 = vand.u32 %v317, 15
    %v320 = vsub.s32 0, %v319
    %v321 = vsel %vm315, %v320, %v319
    %vm322 = vcmp.ne.s32.totalorder %v104, 0
    %vm323 = vcmp.ne.s32.totalorder %v111, 0
    %vm324 = vcmp.ne.s32.totalorder %v118, 0
    %vm325 = vcmp.ne.s32.totalorder %v125, 0
    %vm326 = vcmp.ne.s32.totalorder %v132, 0
    %vm327 = vcmp.ne.s32.totalorder %v139, 0
    %vm328 = vcmp.ne.s32.totalorder %v146, 0
    %vm329 = vcmp.ne.s32.totalorder %v153, 0
    %vm330 = vcmp.ne.s32.totalorder %v160, 0
    %vm331 = vcmp.ne.s32.totalorder %v167, 0
    %vm332 = vcmp.ne.s32.totalorder %v174, 0
    %vm333 = vcmp.ne.s32.totalorder %v181, 0
    %vm334 = vcmp.ne.s32.totalorder %v188, 0
    %vm335 = vcmp.ne.s32.totalorder %v195, 0
    %vm336 = vcmp.ne.s32.totalorder %v202, 0
    %vm337 = vcmp.ne.s32.totalorder %v209, 0
    %vm338 = vcmp.ne.s32.totalorder %v216, 0
    %vm339 = vcmp.ne.s32.totalorder %v223, 0
    %vm340 = vcmp.ne.s32.totalorder %v230, 0
    %vm341 = vcmp.ne.s32.totalorder %v237, 0
    %vm342 = vcmp.ne.s32.totalorder %v244, 0
    %vm343 = vcmp.ne.s32.totalorder %v251, 0
    %vm344 = vcmp.ne.s32.totalorder %v258, 0
    %vm345 = vcmp.ne.s32.totalorder %v265, 0
    %vm346 = vcmp.ne.s32.totalorder %v272, 0
    %vm347 = vcmp.ne.s32.totalorder %v279, 0
    %vm348 = vcmp.ne.s32.totalorder %v286, 0
    %vm349 = vcmp.ne.s32.totalorder %v293, 0
    %vm350 = vcmp.ne.s32.totalorder %v300, 0
    %vm351 = vcmp.ne.s32.totalorder %v307, 0
    %vm352 = vcmp.ne.s32.totalorder %v314, 0
    %vm353 = vcmp.ne.s32.totalorder %v321, 0
    %vm354 = vcmp.lt.s32.totalorder %v104, 0
    %vm355 = vcmp.lt.s32.totalorder %v111, 0
    %vm356 = vcmp.lt.s32.totalorder %v118, 0
    %vm357 = vcmp.lt.s32.totalorder %v125, 0
    %vm358 = vcmp.lt.s32.totalorder %v132, 0
    %vm359 = vcmp.lt.s32.totalorder %v139, 0
    %vm360 = vcmp.lt.s32.totalorder %v146, 0
    %vm361 = vcmp.lt.s32.totalorder %v153, 0
    %vm362 = vcmp.lt.s32.totalorder %v160, 0
    %vm363 = vcmp.lt.s32.totalorder %v167, 0
    %vm364 = vcmp.lt.s32.totalorder %v174, 0
    %vm365 = vcmp.lt.s32.totalorder %v181, 0
    %vm366 = vcmp.lt.s32.totalorder %v188, 0
    %vm367 = vcmp.lt.s32.totalorder %v195, 0
    %vm368 = vcmp.lt.s32.totalorder %v202, 0
    %vm369 = vcmp.lt.s32.totalorder %v209, 0
    %vm370 = vcmp.lt.s32.totalorder %v216, 0
    %vm371 = vcmp.lt.s32.totalorder %v223, 0
    %vm372 = vcmp.lt.s32.totalorder %v230, 0
    %vm373 = vcmp.lt.s32.totalorder %v237, 0
    %vm374 = vcmp.lt.s32.totalorder %v244, 0
    %vm375 = vcmp.lt.s32.totalorder %v251, 0
    %vm376 = vcmp.lt.s32.totalorder %v258, 0
    %vm377 = vcmp.lt.s32.totalorder %v265, 0
    %vm378 = vcmp.lt.s32.totalorder %v272, 0
    %vm379 = vcmp.lt.s32.totalorder %v279, 0
    %vm380 = vcmp.lt.s32.totalorder %v286, 0
    %vm381 = vcmp.lt.s32.totalorder %v293, 0
    %vm382 = vcmp.lt.s32.totalorder %v300, 0
    %vm383 = vcmp.lt.s32.totalorder %v307, 0
    %vm384 = vcmp.lt.s32.totalorder %v314, 0
    %vm385 = vcmp.lt.s32.totalorder %v321, 0
    %vm386 = vmand %vm354, %vm322
    %vm387 = vmand %vm355, %vm323
    %vm388 = vmand %vm356, %vm324
    %vm389 = vmand %vm357, %vm325
    %vm390 = vmand %vm358, %vm326
    %vm391 = vmand %vm359, %vm327
    %vm392 = vmand %vm360, %vm328
    %vm393 = vmand %vm361, %vm329
    %vm394 = vmand %vm362, %vm330
    %vm395 = vmand %vm363, %vm331
    %vm396 = vmand %vm364, %vm332
    %vm397 = vmand %vm365, %vm333
    %vm398 = vmand %vm366, %vm334
    %vm399 = vmand %vm367, %vm335
    %vm400 = vmand %vm368, %vm336
    %vm401 = vmand %vm369, %vm337
    %vm402 = vmand %vm370, %vm338
    %vm403 = vmand %vm371, %vm339
    %vm404 = vmand %vm372, %vm340
    %vm405 = vmand %vm373, %vm341
    %vm406 = vmand %vm374, %vm342
    %vm407 = vmand %vm375, %vm343
    %vm408 = vmand %vm376, %vm344
    %vm409 = vmand %vm377, %vm345
    %vm410 = vmand %vm378, %vm346
    %vm411 = vmand %vm379, %vm347
    %vm412 = vmand %vm380, %vm348
    %vm413 = vmand %vm381, %vm349
    %vm414 = vmand %vm382, %vm350
    %vm415 = vmand %vm383, %vm351
    %vm416 = vmand %vm384, %vm352
    %vm417 = vmand %vm385, %vm353
    %v418 = vadd.s32 %v104, 16
    %v419 = vadd.s32 %v111, 16
    %v420 = vadd.s32 %v118, 16
    %v421 = vadd.s32 %v125, 16
    %v422 = vadd.s32 %v132, 16
    %v423 = vadd.s32 %v139, 16
    %v424 = vadd.s32 %v146, 16
    %v425 = vadd.s32 %v153, 16
    %v426 = vadd.s32 %v160, 16
    %v427 = vadd.s32 %v167, 16
    %v428 = vadd.s32 %v174, 16
    %v429 = vadd.s32 %v181, 16
    %v430 = vadd.s32 %v188, 16
    %v431 = vadd.s32 %v195, 16
    %v432 = vadd.s32 %v202, 16
    %v433 = vadd.s32 %v209, 16
    %v434 = vadd.s32 %v216, 16
    %v435 = vadd.s32 %v223, 16
    %v436 = vadd.s32 %v230, 16
    %v437 = vadd.s32 %v237, 16
    %v438 = vadd.s32 %v244, 16
    %v439 = vadd.s32 %v251, 16
    %v440 = vadd.s32 %v258, 16
    %v441 = vadd.s32 %v265, 16
    %v442 = vadd.s32 %v272, 16
    %v443 = vadd.s32 %v279, 16
    %v444 = vadd.s32 %v286, 16
    %v445 = vadd.s32 %v293, 16
    %v446 = vadd.s32 %v300, 16
    %v447 = vadd.s32 %v307, 16
    %v448 = vadd.s32 %v314, 16
    %v449 = vadd.s32 %v321, 16
    %v450 = vsel %vm386, %v418, %v104
    %v451 = vsel %vm387, %v419, %v111
    %v452 = vsel %vm388, %v420, %v118
    %v453 = vsel %vm389, %v421, %v125
    %v454 = vsel %vm390, %v422, %v132
    %v455 = vsel %vm391, %v423, %v139
    %v456 = vsel %vm392, %v424, %v146
    %v457 = vsel %vm393, %v425, %v153
    %v458 = vsel %vm394, %v426, %v160
    %v459 = vsel %vm395, %v427, %v167
    %v460 = vsel %vm396, %v428, %v174
    %v461 = vsel %vm397, %v429, %v181
    %v462 = vsel %vm398, %v430, %v188
    %v463 = vsel %vm399, %v431, %v195
    %v464 = vsel %vm400, %v432, %v202
    %v465 = vsel %vm401, %v433, %v209
    %v466 = vsel %vm402, %v434, %v216
    %v467 = vsel %vm403, %v435, %v223
    %v468 = vsel %vm404, %v436, %v230
    %v469 = vsel %vm405, %v437, %v237
    %v470 = vsel %vm406, %v438, %v244
    %v471 = vsel %vm407, %v439, %v251
    %v472 = vsel %vm408, %v440, %v258
    %v473 = vsel %vm409, %v441, %v265
    %v474 = vsel %vm410, %v442, %v272
    %v475 = vsel %vm411, %v443, %v279
    %v476 = vsel %vm412, %v444, %v286
    %v477 = vsel %vm413, %v445, %v293
    %v478 = vsel %vm414, %v446, %v300
    %v479 = vsel %vm415, %v447, %v307
    %v480 = vsel %vm416, %v448, %v314
    %v481 = vsel %vm417, %v449, %v321
    %v482 = vld [vmem:[%s0] sm:$0xf]
    %v483 = vld [vmem:[%s0 + $0x4] sm:$0xf]
    %v484 = vld [vmem:[%s0 + $0x8] sm:$0xf]
    %v485 = vld [vmem:[%s0 + $0xc] sm:$0xf]
    %v486 = vld [vmem:[%s0 + $0x10] sm:$0xf]
    %v487 = vld [vmem:[%s0 + $0x14] sm:$0xf]
    %v488 = vld [vmem:[%s0 + $0x18] sm:$0xf]
    %v489 = vld [vmem:[%s0 + $0x1c] sm:$0xf]
    %v490 = vld [vmem:[%s0 + $0x20] sm:$0xf]
    %v491 = vld [vmem:[%s0 + $0x24] sm:$0xf]
    %v492 = vld [vmem:[%s0 + $0x28] sm:$0xf]
    %v493 = vld [vmem:[%s0 + $0x2c] sm:$0xf]
    %v494 = vld [vmem:[%s0 + $0x30] sm:$0xf]
    %v495 = vld [vmem:[%s0 + $0x34] sm:$0xf]
    %v496 = vld [vmem:[%s0 + $0x38] sm:$0xf]
    %v497 = vld [vmem:[%s0 + $0x3c] sm:$0xf]
    %v498 = vld [vmem:[%s0 + $0x40] sm:$0xf]
    %v499 = vld [vmem:[%s0 + $0x44] sm:$0xf]
    %v500 = vld [vmem:[%s0 + $0x48] sm:$0xf]
    %v501 = vld [vmem:[%s0 + $0x4c] sm:$0xf]
    %v502 = vld [vmem:[%s0 + $0x50] sm:$0xf]
    %v503 = vld [vmem:[%s0 + $0x54] sm:$0xf]
    %v504 = vld [vmem:[%s0 + $0x58] sm:$0xf]
    %v505 = vld [vmem:[%s0 + $0x5c] sm:$0xf]
    %v506 = vld [vmem:[%s0 + $0x60] sm:$0xf]
    %v507 = vld [vmem:[%s0 + $0x64] sm:$0xf]
    %v508 = vld [vmem:[%s0 + $0x68] sm:$0xf]
    %v509 = vld [vmem:[%s0 + $0x6c] sm:$0xf]
    %v510 = vld [vmem:[%s0 + $0x70] sm:$0xf]
    %v511 = vld [vmem:[%s0 + $0x74] sm:$0xf]
    %v512 = vld [vmem:[%s0 + $0x78] sm:$0xf]
    %v513 = vld [vmem:[%s0 + $0x7c] sm:$0xf]
    %v514 = vld [vmem:[%s2] sm:$0xf]
    %v515 = vld [vmem:[%s3] sm:$0x1]
    %v517 = vlaneseq
    %v518 = vshrl.u32 %v517, 7
    %v519 = vsub.s32 0, %v518
    %v520 = vrot.slane %v515, %v519
    %v554 = vunpack.c.l.b16 %v482
    %v555 = vunpack.c.l.b16 %v483
    %v556 = vunpack.c.l.b16 %v484
    %v557 = vunpack.c.l.b16 %v485
    %v558 = vunpack.c.l.b16 %v486
    %v559 = vunpack.c.l.b16 %v487
    %v560 = vunpack.c.l.b16 %v488
    %v561 = vunpack.c.l.b16 %v489
    %v562 = vunpack.c.l.b16 %v490
    %v563 = vunpack.c.l.b16 %v491
    %v564 = vunpack.c.l.b16 %v492
    %v565 = vunpack.c.l.b16 %v493
    %v566 = vunpack.c.l.b16 %v494
    %v567 = vunpack.c.l.b16 %v495
    %v568 = vunpack.c.l.b16 %v496
    %v569 = vunpack.c.l.b16 %v497
    %v570 = vunpack.c.l.b16 %v498
    %v571 = vunpack.c.l.b16 %v499
    %v572 = vunpack.c.l.b16 %v500
    %v573 = vunpack.c.l.b16 %v501
    %v574 = vunpack.c.l.b16 %v502
    %v575 = vunpack.c.l.b16 %v503
    %v576 = vunpack.c.l.b16 %v504
    %v577 = vunpack.c.l.b16 %v505
    %v578 = vunpack.c.l.b16 %v506
    %v579 = vunpack.c.l.b16 %v507
    %v580 = vunpack.c.l.b16 %v508
    %v581 = vunpack.c.l.b16 %v509
    %v582 = vunpack.c.l.b16 %v510
    %v583 = vunpack.c.l.b16 %v511
    %v584 = vunpack.c.l.b16 %v512
    %v585 = vunpack.c.l.b16 %v513
    %v586 = vpack.c.b16 %v555, %v554
    %v587 = vpack.c.b16 %v557, %v556
    %v588 = vpack.c.b16 %v559, %v558
    %v589 = vpack.c.b16 %v561, %v560
    %v590 = vpack.c.b16 %v563, %v562
    %v591 = vpack.c.b16 %v565, %v564
    %v592 = vpack.c.b16 %v567, %v566
    %v593 = vpack.c.b16 %v569, %v568
    %v594 = vpack.c.b16 %v571, %v570
    %v595 = vpack.c.b16 %v573, %v572
    %v596 = vpack.c.b16 %v575, %v574
    %v597 = vpack.c.b16 %v577, %v576
    %v598 = vpack.c.b16 %v579, %v578
    %v599 = vpack.c.b16 %v581, %v580
    %v600 = vpack.c.b16 %v583, %v582
    %v601 = vpack.c.b16 %v585, %v584
    %vm602 = vcmask 56320
    %v604 = vsel %vm602, %v586, 0
    %v607 = vsel %vm602, %v587, 0
    %v610 = vsel %vm602, %v588, 0
    %v613 = vsel %vm602, %v589, 0
    %v616 = vsel %vm602, %v590, 0
    %v619 = vsel %vm602, %v591, 0
    %v622 = vsel %vm602, %v592, 0
    %v625 = vsel %vm602, %v593, 0
    %v628 = vsel %vm602, %v594, 0
    %v631 = vsel %vm602, %v595, 0
    %v634 = vsel %vm602, %v596, 0
    %v637 = vsel %vm602, %v597, 0
    %v640 = vsel %vm602, %v598, 0
    %v643 = vsel %vm602, %v599, 0
    %v646 = vsel %vm602, %v600, 0
    %v649 = vsel %vm602, %v601, 0
    %vm651 = vcmask 1042432
    %vm652 = vcmask 1043456
    %v653 = vsel %vm651, 4294967295, 65535
    %v654 = vsel %vm652, %v653, 0
    %v656 = vand.u32 %v514, %v654
    %658 = vmatprep.subr.bf16.mxu0 0
    %659 = vmatpush1.bf16.msra.mxu0 %v656
    %660 = vmatprep.subr.bf16.mxu0 0
    %661 = vmatpush1.bf16.msra.mxu0 0
    %662 = vmatprep.subr.bf16.mxu0 0
    %663 = vmatpush1.bf16.msra.mxu0 0
    %664 = vmatprep.subr.bf16.mxu0 0
    %665 = vmatpush1.bf16.msra.mxu0 0
    %666 = vmatprep.subr.bf16.mxu0 0
    %667 = vmatpush1.bf16.msra.mxu0 0
    %668 = vmatprep.subr.bf16.mxu0 0
    %669 = vmatpush1.bf16.msra.mxu0 0
    %670 = vmatprep.subr.bf16.mxu0 0
    %671 = vmatpush1.bf16.msra.mxu0 0
    %672 = vmatprep.subr.bf16.mxu0 0
    %673 = vmatpush1.bf16.msra.mxu0 0
    %674 = vmatprep.subr.bf16.mxu0 0
    %675 = vmatpush1.bf16.msra.mxu0 0
    %676 = vmatprep.subr.bf16.mxu0 0
    %677 = vmatpush1.bf16.msra.mxu0 0
    %678 = vmatprep.subr.bf16.mxu0 0
    %679 = vmatpush1.bf16.msra.mxu0 0
    %680 = vmatprep.subr.bf16.mxu0 0
    %681 = vmatpush1.bf16.msra.mxu0 0
    %682 = vmatprep.subr.bf16.mxu0 0
    %683 = vmatpush1.bf16.msra.mxu0 0
    %684 = vmatprep.subr.bf16.mxu0 0
    %685 = vmatpush1.bf16.msra.mxu0 0
    %686 = vmatprep.subr.bf16.mxu0 0
    %687 = vmatpush1.bf16.msra.mxu0 0
    %688 = vmatprep.subr.bf16.mxu0 0
    %689 = vmatpush1.bf16.msra.mxu0 0
    %690 = vmatprep.mubr.bf16.mxu0 0
    %691 = vmatmul.mubr.bf16.gmra.mrb[0].mxu0 %v604
    %v692 = vpop.f32.mrb[0].mxu0
    %v693 = vadd.f32 %v520, %v692
    %v694 = vpop.f32.mrb[0].mxu0
    %v695 = vpop.f32.mrb[0].mxu0
    %v696 = vadd.f32 %v520, %v695
    %v697 = vpop.f32.mrb[0].mxu0
    %698 = vmatprep.mubr.bf16.mxu0 0
    %699 = vmatmul.mubr.bf16.gmra.mrb[0].mxu0 %v607
    %v700 = vpop.f32.mrb[0].mxu0
    %v701 = vadd.f32 %v520, %v700
    %v702 = vpop.f32.mrb[0].mxu0
    %v703 = vpop.f32.mrb[0].mxu0
    %v704 = vadd.f32 %v520, %v703
    %v705 = vpop.f32.mrb[0].mxu0
    %706 = vmatprep.mubr.bf16.mxu0 0
    %707 = vmatmul.mubr.bf16.gmra.mrb[0].mxu0 %v610
    %v708 = vpop.f32.mrb[0].mxu0
    %v709 = vadd.f32 %v520, %v708
    %v710 = vpop.f32.mrb[0].mxu0
    %v711 = vpop.f32.mrb[0].mxu0
    %v712 = vadd.f32 %v520, %v711
    %v713 = vpop.f32.mrb[0].mxu0
    %714 = vmatprep.mubr.bf16.mxu0 0
    %715 = vmatmul.mubr.bf16.gmra.mrb[0].mxu0 %v613
    %v716 = vpop.f32.mrb[0].mxu0
    %v717 = vadd.f32 %v520, %v716
    %v718 = vpop.f32.mrb[0].mxu0
    %v719 = vpop.f32.mrb[0].mxu0
    %v720 = vadd.f32 %v520, %v719
    %v721 = vpop.f32.mrb[0].mxu0
    %722 = vmatprep.mubr.bf16.mxu0 0
    %723 = vmatmul.mubr.bf16.gmra.mrb[0].mxu0 %v616
    %v724 = vpop.f32.mrb[0].mxu0
    %v725 = vadd.f32 %v520, %v724
    %v726 = vpop.f32.mrb[0].mxu0
    %v727 = vpop.f32.mrb[0].mxu0
    %v728 = vadd.f32 %v520, %v727
    %v729 = vpop.f32.mrb[0].mxu0
    %730 = vmatprep.mubr.bf16.mxu0 0
    %731 = vmatmul.mubr.bf16.gmra.mrb[0].mxu0 %v619
    %v732 = vpop.f32.mrb[0].mxu0
    %v733 = vadd.f32 %v520, %v732
    %v734 = vpop.f32.mrb[0].mxu0
    %v735 = vpop.f32.mrb[0].mxu0
    %v736 = vadd.f32 %v520, %v735
    %v737 = vpop.f32.mrb[0].mxu0
    %738 = vmatprep.mubr.bf16.mxu0 0
    %739 = vmatmul.mubr.bf16.gmra.mrb[0].mxu0 %v622
    %v740 = vpop.f32.mrb[0].mxu0
    %v741 = vadd.f32 %v520, %v740
    %v742 = vpop.f32.mrb[0].mxu0
    %v743 = vpop.f32.mrb[0].mxu0
    %v744 = vadd.f32 %v520, %v743
    %v745 = vpop.f32.mrb[0].mxu0
    %746 = vmatprep.mubr.bf16.mxu0 0
    %747 = vmatmul.mubr.bf16.gmra.mrb[0].mxu0 %v625
    %v748 = vpop.f32.mrb[0].mxu0
    %v749 = vadd.f32 %v520, %v748
    %v750 = vpop.f32.mrb[0].mxu0
    %v751 = vpop.f32.mrb[0].mxu0
    %v752 = vadd.f32 %v520, %v751
    %v753 = vpop.f32.mrb[0].mxu0
    %754 = vmatprep.mubr.bf16.mxu0 0
    %755 = vmatmul.mubr.bf16.gmra.mrb[0].mxu0 %v628
    %v756 = vpop.f32.mrb[0].mxu0
    %v757 = vadd.f32 %v520, %v756
    %v758 = vpop.f32.mrb[0].mxu0
    %v759 = vpop.f32.mrb[0].mxu0
    %v760 = vadd.f32 %v520, %v759
    %v761 = vpop.f32.mrb[0].mxu0
    %762 = vmatprep.mubr.bf16.mxu0 0
    %763 = vmatmul.mubr.bf16.gmra.mrb[0].mxu0 %v631
    %v764 = vpop.f32.mrb[0].mxu0
    %v765 = vadd.f32 %v520, %v764
    %v766 = vpop.f32.mrb[0].mxu0
    %v767 = vpop.f32.mrb[0].mxu0
    %v768 = vadd.f32 %v520, %v767
    %v769 = vpop.f32.mrb[0].mxu0
    %770 = vmatprep.mubr.bf16.mxu0 0
    %771 = vmatmul.mubr.bf16.gmra.mrb[0].mxu0 %v634
    %v772 = vpop.f32.mrb[0].mxu0
    %v773 = vadd.f32 %v520, %v772
    %v774 = vpop.f32.mrb[0].mxu0
    %v775 = vpop.f32.mrb[0].mxu0
    %v776 = vadd.f32 %v520, %v775
    %v777 = vpop.f32.mrb[0].mxu0
    %778 = vmatprep.mubr.bf16.mxu0 0
    %779 = vmatmul.mubr.bf16.gmra.mrb[0].mxu0 %v637
    %v780 = vpop.f32.mrb[0].mxu0
    %v781 = vadd.f32 %v520, %v780
    %v782 = vpop.f32.mrb[0].mxu0
    %v783 = vpop.f32.mrb[0].mxu0
    %v784 = vadd.f32 %v520, %v783
    %v785 = vpop.f32.mrb[0].mxu0
    %786 = vmatprep.mubr.bf16.mxu0 0
    %787 = vmatmul.mubr.bf16.gmra.mrb[0].mxu0 %v640
    %v788 = vpop.f32.mrb[0].mxu0
    %v789 = vadd.f32 %v520, %v788
    %v790 = vpop.f32.mrb[0].mxu0
    %v791 = vpop.f32.mrb[0].mxu0
    %v792 = vadd.f32 %v520, %v791
    %v793 = vpop.f32.mrb[0].mxu0
    %794 = vmatprep.mubr.bf16.mxu0 0
    %795 = vmatmul.mubr.bf16.gmra.mrb[0].mxu0 %v643
    %v796 = vpop.f32.mrb[0].mxu0
    %v797 = vadd.f32 %v520, %v796
    %v798 = vpop.f32.mrb[0].mxu0
    %v799 = vpop.f32.mrb[0].mxu0
    %v800 = vadd.f32 %v520, %v799
    %v801 = vpop.f32.mrb[0].mxu0
    %802 = vmatprep.mubr.bf16.mxu0 0
    %803 = vmatmul.mubr.bf16.gmra.mrb[0].mxu0 %v646
    %v804 = vpop.f32.mrb[0].mxu0
    %v805 = vadd.f32 %v520, %v804
    %v806 = vpop.f32.mrb[0].mxu0
    %v807 = vpop.f32.mrb[0].mxu0
    %v808 = vadd.f32 %v520, %v807
    %v809 = vpop.f32.mrb[0].mxu0
    %810 = vmatprep.mubr.bf16.mxu0 0
    %811 = vmatmul.mubr.bf16.gmra.mrb[0].mxu0 %v649
    %v812 = vpop.f32.mrb[0].mxu0
    %v813 = vadd.f32 %v520, %v812
    %v814 = vpop.f32.mrb[0].mxu0
    %v815 = vpop.f32.mrb[0].mxu0
    %v816 = vadd.f32 %v520, %v815
    %v817 = vpop.f32.mrb[0].mxu0
    %818 = vdwg.mxu0
    %v819 = vmax.f32 %v693, 0.0
    %v820 = vmax.f32 %v696, 0.0
    %v821 = vmax.f32 %v701, 0.0
    %v822 = vmax.f32 %v704, 0.0
    %v823 = vmax.f32 %v709, 0.0
    %v824 = vmax.f32 %v712, 0.0
    %v825 = vmax.f32 %v717, 0.0
    %v826 = vmax.f32 %v720, 0.0
    %v827 = vmax.f32 %v725, 0.0
    %v828 = vmax.f32 %v728, 0.0
    %v829 = vmax.f32 %v733, 0.0
    %v830 = vmax.f32 %v736, 0.0
    %v831 = vmax.f32 %v741, 0.0
    %v832 = vmax.f32 %v744, 0.0
    %v833 = vmax.f32 %v749, 0.0
    %v834 = vmax.f32 %v752, 0.0
    %v835 = vmax.f32 %v757, 0.0
    %v836 = vmax.f32 %v760, 0.0
    %v837 = vmax.f32 %v765, 0.0
    %v838 = vmax.f32 %v768, 0.0
    %v839 = vmax.f32 %v773, 0.0
    %v840 = vmax.f32 %v776, 0.0
    %v841 = vmax.f32 %v781, 0.0
    %v842 = vmax.f32 %v784, 0.0
    %v843 = vmax.f32 %v789, 0.0
    %v844 = vmax.f32 %v792, 0.0
    %v845 = vmax.f32 %v797, 0.0
    %v846 = vmax.f32 %v800, 0.0
    %v847 = vmax.f32 %v805, 0.0
    %v848 = vmax.f32 %v808, 0.0
    %v849 = vmax.f32 %v813, 0.0
    %v850 = vmax.f32 %v816, 0.0
    %vm883 = vcmask 1041408
    %v884 = vrot.slane %v819, 6
    %v885 = vrot.slane %v820, 6
    %v886 = vsel %vm883, %v884, %v885
    %v887 = vrot.slane %v821, 6
    %v888 = vsel %vm883, %v885, %v887
    %v889 = vrot.slane %v822, 6
    %v890 = vsel %vm883, %v887, %v889
    %v891 = vrot.slane %v823, 6
    %v892 = vsel %vm883, %v889, %v891
    %v893 = vrot.slane %v824, 6
    %v894 = vsel %vm883, %v891, %v893
    %v895 = vrot.slane %v825, 6
    %v896 = vsel %vm883, %v893, %v895
    %v897 = vrot.slane %v826, 6
    %v898 = vsel %vm883, %v895, %v897
    %v899 = vrot.slane %v827, 6
    %v900 = vsel %vm883, %v897, %v899
    %v901 = vrot.slane %v828, 6
    %v902 = vsel %vm883, %v899, %v901
    %v903 = vrot.slane %v829, 6
    %v904 = vsel %vm883, %v901, %v903
    %v905 = vrot.slane %v830, 6
    %v906 = vsel %vm883, %v903, %v905
    %v907 = vrot.slane %v831, 6
    %v908 = vsel %vm883, %v905, %v907
    %v909 = vrot.slane %v832, 6
    %v910 = vsel %vm883, %v907, %v909
    %v911 = vrot.slane %v833, 6
    %v912 = vsel %vm883, %v909, %v911
    %v913 = vrot.slane %v834, 6
    %v914 = vsel %vm883, %v911, %v913
    %v915 = vrot.slane %v835, 6
    %v916 = vsel %vm883, %v913, %v915
    %v917 = vrot.slane %v836, 6
    %v918 = vsel %vm883, %v915, %v917
    %v919 = vrot.slane %v837, 6
    %v920 = vsel %vm883, %v917, %v919
    %v921 = vrot.slane %v838, 6
    %v922 = vsel %vm883, %v919, %v921
    %v923 = vrot.slane %v839, 6
    %v924 = vsel %vm883, %v921, %v923
    %v925 = vrot.slane %v840, 6
    %v926 = vsel %vm883, %v923, %v925
    %v927 = vrot.slane %v841, 6
    %v928 = vsel %vm883, %v925, %v927
    %v929 = vrot.slane %v842, 6
    %v930 = vsel %vm883, %v927, %v929
    %v931 = vrot.slane %v843, 6
    %v932 = vsel %vm883, %v929, %v931
    %v933 = vrot.slane %v844, 6
    %v934 = vsel %vm883, %v931, %v933
    %v935 = vrot.slane %v845, 6
    %v936 = vsel %vm883, %v933, %v935
    %v937 = vrot.slane %v846, 6
    %v938 = vsel %vm883, %v935, %v937
    %v939 = vrot.slane %v847, 6
    %v940 = vsel %vm883, %v937, %v939
    %v941 = vrot.slane %v848, 6
    %v942 = vsel %vm883, %v939, %v941
    %v943 = vrot.slane %v849, 6
    %v944 = vsel %vm883, %v941, %v943
    %v945 = vrot.slane %v850, 6
    %v946 = vsel %vm883, %v943, %v945
    %v979 = vsel %vm883, 0.0, %v884
    %v980 = vadd.s32 %v450, 4294967294
    %v981 = vadd.s32 %v451, 4294967294
    %v982 = vadd.s32 %v452, 4294967294
    %v983 = vadd.s32 %v453, 4294967294
    %v984 = vadd.s32 %v454, 4294967294
    %v985 = vadd.s32 %v455, 4294967294
    %v986 = vadd.s32 %v456, 4294967294
    %v987 = vadd.s32 %v457, 4294967294
    %v988 = vadd.s32 %v458, 4294967294
    %v989 = vadd.s32 %v459, 4294967294
    %v990 = vadd.s32 %v460, 4294967294
    %v991 = vadd.s32 %v461, 4294967294
    %v992 = vadd.s32 %v462, 4294967294
    %v993 = vadd.s32 %v463, 4294967294
    %v994 = vadd.s32 %v464, 4294967294
    %v995 = vadd.s32 %v465, 4294967294
    %v996 = vadd.s32 %v466, 4294967294
    %v997 = vadd.s32 %v467, 4294967294
    %v998 = vadd.s32 %v468, 4294967294
    %v999 = vadd.s32 %v469, 4294967294
    %v1000 = vadd.s32 %v470, 4294967294
    %v1001 = vadd.s32 %v471, 4294967294
    %v1002 = vadd.s32 %v472, 4294967294
    %v1003 = vadd.s32 %v473, 4294967294
    %v1004 = vadd.s32 %v474, 4294967294
    %v1005 = vadd.s32 %v475, 4294967294
    %v1006 = vadd.s32 %v476, 4294967294
    %v1007 = vadd.s32 %v477, 4294967294
    %v1008 = vadd.s32 %v478, 4294967294
    %v1009 = vadd.s32 %v479, 4294967294
    %v1010 = vadd.s32 %v480, 4294967294
    %v1011 = vadd.s32 %v481, 4294967294
    %vm1012 = vcmp.ge.s32.totalorder %v980, 0
    %vm1013 = vcmp.ge.s32.totalorder %v981, 0
    %vm1014 = vcmp.ge.s32.totalorder %v982, 0
    %vm1015 = vcmp.ge.s32.totalorder %v983, 0
    %vm1016 = vcmp.ge.s32.totalorder %v984, 0
    %vm1017 = vcmp.ge.s32.totalorder %v985, 0
    %vm1018 = vcmp.ge.s32.totalorder %v986, 0
    %vm1019 = vcmp.ge.s32.totalorder %v987, 0
    %vm1020 = vcmp.ge.s32.totalorder %v988, 0
    %vm1021 = vcmp.ge.s32.totalorder %v989, 0
    %vm1022 = vcmp.ge.s32.totalorder %v990, 0
    %vm1023 = vcmp.ge.s32.totalorder %v991, 0
    %vm1024 = vcmp.ge.s32.totalorder %v992, 0
    %vm1025 = vcmp.ge.s32.totalorder %v993, 0
    %vm1026 = vcmp.ge.s32.totalorder %v994, 0
    %vm1027 = vcmp.ge.s32.totalorder %v995, 0
    %vm1028 = vcmp.ge.s32.totalorder %v996, 0
    %vm1029 = vcmp.ge.s32.totalorder %v997, 0
    %vm1030 = vcmp.ge.s32.totalorder %v998, 0
    %vm1031 = vcmp.ge.s32.totalorder %v999, 0
    %vm1032 = vcmp.ge.s32.totalorder %v1000, 0
    %vm1033 = vcmp.ge.s32.totalorder %v1001, 0
    %vm1034 = vcmp.ge.s32.totalorder %v1002, 0
    %vm1035 = vcmp.ge.s32.totalorder %v1003, 0
    %vm1036 = vcmp.ge.s32.totalorder %v1004, 0
    %vm1037 = vcmp.ge.s32.totalorder %v1005, 0
    %vm1038 = vcmp.ge.s32.totalorder %v1006, 0
    %vm1039 = vcmp.ge.s32.totalorder %v1007, 0
    %vm1040 = vcmp.ge.s32.totalorder %v1008, 0
    %vm1041 = vcmp.ge.s32.totalorder %v1009, 0
    %vm1042 = vcmp.ge.s32.totalorder %v1010, 0
    %vm1043 = vcmp.ge.s32.totalorder %v1011, 0
    %vm1044 = vcmp.lt.s32.totalorder %v980, 16
    %vm1045 = vcmp.lt.s32.totalorder %v981, 16
    %vm1046 = vcmp.lt.s32.totalorder %v982, 16
    %vm1047 = vcmp.lt.s32.totalorder %v983, 16
    %vm1048 = vcmp.lt.s32.totalorder %v984, 16
    %vm1049 = vcmp.lt.s32.totalorder %v985, 16
    %vm1050 = vcmp.lt.s32.totalorder %v986, 16
    %vm1051 = vcmp.lt.s32.totalorder %v987, 16
    %vm1052 = vcmp.lt.s32.totalorder %v988, 16
    %vm1053 = vcmp.lt.s32.totalorder %v989, 16
    %vm1054 = vcmp.lt.s32.totalorder %v990, 16
    %vm1055 = vcmp.lt.s32.totalorder %v991, 16
    %vm1056 = vcmp.lt.s32.totalorder %v992, 16
    %vm1057 = vcmp.lt.s32.totalorder %v993, 16
    %vm1058 = vcmp.lt.s32.totalorder %v994, 16
    %vm1059 = vcmp.lt.s32.totalorder %v995, 16
    %vm1060 = vcmp.lt.s32.totalorder %v996, 16
    %vm1061 = vcmp.lt.s32.totalorder %v997, 16
    %vm1062 = vcmp.lt.s32.totalorder %v998, 16
    %vm1063 = vcmp.lt.s32.totalorder %v999, 16
    %vm1064 = vcmp.lt.s32.totalorder %v1000, 16
    %vm1065 = vcmp.lt.s32.totalorder %v1001, 16
    %vm1066 = vcmp.lt.s32.totalorder %v1002, 16
    %vm1067 = vcmp.lt.s32.totalorder %v1003, 16
    %vm1068 = vcmp.lt.s32.totalorder %v1004, 16
    %vm1069 = vcmp.lt.s32.totalorder %v1005, 16
    %vm1070 = vcmp.lt.s32.totalorder %v1006, 16
    %vm1071 = vcmp.lt.s32.totalorder %v1007, 16
    %vm1072 = vcmp.lt.s32.totalorder %v1008, 16
    %vm1073 = vcmp.lt.s32.totalorder %v1009, 16
    %vm1074 = vcmp.lt.s32.totalorder %v1010, 16
    %vm1075 = vcmp.lt.s32.totalorder %v1011, 16
    %vm1076 = vmand %vm1012, %vm1044
    %vm1077 = vmand %vm1013, %vm1045
    %vm1078 = vmand %vm1014, %vm1046
    %vm1079 = vmand %vm1015, %vm1047
    %vm1080 = vmand %vm1016, %vm1048
    %vm1081 = vmand %vm1017, %vm1049
    %vm1082 = vmand %vm1018, %vm1050
    %vm1083 = vmand %vm1019, %vm1051
    %vm1084 = vmand %vm1020, %vm1052
    %vm1085 = vmand %vm1021, %vm1053
    %vm1086 = vmand %vm1022, %vm1054
    %vm1087 = vmand %vm1023, %vm1055
    %vm1088 = vmand %vm1024, %vm1056
    %vm1089 = vmand %vm1025, %vm1057
    %vm1090 = vmand %vm1026, %vm1058
    %vm1091 = vmand %vm1027, %vm1059
    %vm1092 = vmand %vm1028, %vm1060
    %vm1093 = vmand %vm1029, %vm1061
    %vm1094 = vmand %vm1030, %vm1062
    %vm1095 = vmand %vm1031, %vm1063
    %vm1096 = vmand %vm1032, %vm1064
    %vm1097 = vmand %vm1033, %vm1065
    %vm1098 = vmand %vm1034, %vm1066
    %vm1099 = vmand %vm1035, %vm1067
    %vm1100 = vmand %vm1036, %vm1068
    %vm1101 = vmand %vm1037, %vm1069
    %vm1102 = vmand %vm1038, %vm1070
    %vm1103 = vmand %vm1039, %vm1071
    %vm1104 = vmand %vm1040, %vm1072
    %vm1105 = vmand %vm1041, %vm1073
    %vm1106 = vmand %vm1042, %vm1074
    %vm1107 = vmand %vm1043, %vm1075
    %v1108 = vsel %vm1076, 1, 0
    %v1109 = vsel %vm1077, 1, 0
    %v1110 = vsel %vm1078, 1, 0
    %v1111 = vsel %vm1079, 1, 0
    %v1112 = vsel %vm1080, 1, 0
    %v1113 = vsel %vm1081, 1, 0
    %v1114 = vsel %vm1082, 1, 0
    %v1115 = vsel %vm1083, 1, 0
    %v1116 = vsel %vm1084, 1, 0
    %v1117 = vsel %vm1085, 1, 0
    %v1118 = vsel %vm1086, 1, 0
    %v1119 = vsel %vm1087, 1, 0
    %v1120 = vsel %vm1088, 1, 0
    %v1121 = vsel %vm1089, 1, 0
    %v1122 = vsel %vm1090, 1, 0
    %v1123 = vsel %vm1091, 1, 0
    %v1124 = vsel %vm1092, 1, 0
    %v1125 = vsel %vm1093, 1, 0
    %v1126 = vsel %vm1094, 1, 0
    %v1127 = vsel %vm1095, 1, 0
    %v1128 = vsel %vm1096, 1, 0
    %v1129 = vsel %vm1097, 1, 0
    %v1130 = vsel %vm1098, 1, 0
    %v1131 = vsel %vm1099, 1, 0
    %v1132 = vsel %vm1100, 1, 0
    %v1133 = vsel %vm1101, 1, 0
    %v1134 = vsel %vm1102, 1, 0
    %v1135 = vsel %vm1103, 1, 0
    %v1136 = vsel %vm1104, 1, 0
    %v1137 = vsel %vm1105, 1, 0
    %v1138 = vsel %vm1106, 1, 0
    %v1139 = vsel %vm1107, 1, 0
    %vm1140 = vcmp.eq.s32.totalorder %v1108, 1
    %vm1141 = vcmp.eq.s32.totalorder %v1109, 1
    %vm1142 = vcmp.eq.s32.totalorder %v1110, 1
    %vm1143 = vcmp.eq.s32.totalorder %v1111, 1
    %vm1144 = vcmp.eq.s32.totalorder %v1112, 1
    %vm1145 = vcmp.eq.s32.totalorder %v1113, 1
    %vm1146 = vcmp.eq.s32.totalorder %v1114, 1
    %vm1147 = vcmp.eq.s32.totalorder %v1115, 1
    %vm1148 = vcmp.eq.s32.totalorder %v1116, 1
    %vm1149 = vcmp.eq.s32.totalorder %v1117, 1
    %vm1150 = vcmp.eq.s32.totalorder %v1118, 1
    %vm1151 = vcmp.eq.s32.totalorder %v1119, 1
    %vm1152 = vcmp.eq.s32.totalorder %v1120, 1
    %vm1153 = vcmp.eq.s32.totalorder %v1121, 1
    %vm1154 = vcmp.eq.s32.totalorder %v1122, 1
    %vm1155 = vcmp.eq.s32.totalorder %v1123, 1
    %vm1156 = vcmp.eq.s32.totalorder %v1124, 1
    %vm1157 = vcmp.eq.s32.totalorder %v1125, 1
    %vm1158 = vcmp.eq.s32.totalorder %v1126, 1
    %vm1159 = vcmp.eq.s32.totalorder %v1127, 1
    %vm1160 = vcmp.eq.s32.totalorder %v1128, 1
    %vm1161 = vcmp.eq.s32.totalorder %v1129, 1
    %vm1162 = vcmp.eq.s32.totalorder %v1130, 1
    %vm1163 = vcmp.eq.s32.totalorder %v1131, 1
    %vm1164 = vcmp.eq.s32.totalorder %v1132, 1
    %vm1165 = vcmp.eq.s32.totalorder %v1133, 1
    %vm1166 = vcmp.eq.s32.totalorder %v1134, 1
    %vm1167 = vcmp.eq.s32.totalorder %v1135, 1
    %vm1168 = vcmp.eq.s32.totalorder %v1136, 1
    %vm1169 = vcmp.eq.s32.totalorder %v1137, 1
    %vm1170 = vcmp.eq.s32.totalorder %v1138, 1
    %vm1171 = vcmp.eq.s32.totalorder %v1139, 1
    %v1172 = vsel %vm1140, %v979, 0.0
    %v1173 = vsel %vm1141, %v886, 0.0
    %v1174 = vsel %vm1142, %v888, 0.0
    %v1175 = vsel %vm1143, %v890, 0.0
    %v1176 = vsel %vm1144, %v892, 0.0
    %v1177 = vsel %vm1145, %v894, 0.0
    %v1178 = vsel %vm1146, %v896, 0.0
    %v1179 = vsel %vm1147, %v898, 0.0
    %v1180 = vsel %vm1148, %v900, 0.0
    %v1181 = vsel %vm1149, %v902, 0.0
    %v1182 = vsel %vm1150, %v904, 0.0
    %v1183 = vsel %vm1151, %v906, 0.0
    %v1184 = vsel %vm1152, %v908, 0.0
    %v1185 = vsel %vm1153, %v910, 0.0
    %v1186 = vsel %vm1154, %v912, 0.0
    %v1187 = vsel %vm1155, %v914, 0.0
    %v1188 = vsel %vm1156, %v916, 0.0
    %v1189 = vsel %vm1157, %v918, 0.0
    %v1190 = vsel %vm1158, %v920, 0.0
    %v1191 = vsel %vm1159, %v922, 0.0
    %v1192 = vsel %vm1160, %v924, 0.0
    %v1193 = vsel %vm1161, %v926, 0.0
    %v1194 = vsel %vm1162, %v928, 0.0
    %v1195 = vsel %vm1163, %v930, 0.0
    %v1196 = vsel %vm1164, %v932, 0.0
    %v1197 = vsel %vm1165, %v934, 0.0
    %v1198 = vsel %vm1166, %v936, 0.0
    %v1199 = vsel %vm1167, %v938, 0.0
    %v1200 = vsel %vm1168, %v940, 0.0
    %v1201 = vsel %vm1169, %v942, 0.0
    %v1202 = vsel %vm1170, %v944, 0.0
    %v1203 = vsel %vm1171, %v946, 0.0
    %v1204 = vpack.c.bf16 %v1173, %v1172
    %v1205 = vpack.c.bf16 %v1175, %v1174
    %v1206 = vpack.c.bf16 %v1177, %v1176
    %v1207 = vpack.c.bf16 %v1179, %v1178
    %v1208 = vpack.c.bf16 %v1181, %v1180
    %v1209 = vpack.c.bf16 %v1183, %v1182
    %v1210 = vpack.c.bf16 %v1185, %v1184
    %v1211 = vpack.c.bf16 %v1187, %v1186
    %v1212 = vpack.c.bf16 %v1189, %v1188
    %v1213 = vpack.c.bf16 %v1191, %v1190
    %v1214 = vpack.c.bf16 %v1193, %v1192
    %v1215 = vpack.c.bf16 %v1195, %v1194
    %v1216 = vpack.c.bf16 %v1197, %v1196
    %v1217 = vpack.c.bf16 %v1199, %v1198
    %v1218 = vpack.c.bf16 %v1201, %v1200
    %v1219 = vpack.c.bf16 %v1203, %v1202
    %vm1220 = vcmask 1040384
    %v1221 = vrot.slane %v819, 7
    %v1222 = vrot.slane %v820, 7
    %v1223 = vsel %vm1220, %v1221, %v1222
    %v1224 = vrot.slane %v821, 7
    %v1225 = vsel %vm1220, %v1222, %v1224
    %v1226 = vrot.slane %v822, 7
    %v1227 = vsel %vm1220, %v1224, %v1226
    %v1228 = vrot.slane %v823, 7
    %v1229 = vsel %vm1220, %v1226, %v1228
    %v1230 = vrot.slane %v824, 7
    %v1231 = vsel %vm1220, %v1228, %v1230
    %v1232 = vrot.slane %v825, 7
    %v1233 = vsel %vm1220, %v1230, %v1232
    %v1234 = vrot.slane %v826, 7
    %v1235 = vsel %vm1220, %v1232, %v1234
    %v1236 = vrot.slane %v827, 7
    %v1237 = vsel %vm1220, %v1234, %v1236
    %v1238 = vrot.slane %v828, 7
    %v1239 = vsel %vm1220, %v1236, %v1238
    %v1240 = vrot.slane %v829, 7
    %v1241 = vsel %vm1220, %v1238, %v1240
    %v1242 = vrot.slane %v830, 7
    %v1243 = vsel %vm1220, %v1240, %v1242
    %v1244 = vrot.slane %v831, 7
    %v1245 = vsel %vm1220, %v1242, %v1244
    %v1246 = vrot.slane %v832, 7
    %v1247 = vsel %vm1220, %v1244, %v1246
    %v1248 = vrot.slane %v833, 7
    %v1249 = vsel %vm1220, %v1246, %v1248
    %v1250 = vrot.slane %v834, 7
    %v1251 = vsel %vm1220, %v1248, %v1250
    %v1252 = vrot.slane %v835, 7
    %v1253 = vsel %vm1220, %v1250, %v1252
    %v1254 = vrot.slane %v836, 7
    %v1255 = vsel %vm1220, %v1252, %v1254
    %v1256 = vrot.slane %v837, 7
    %v1257 = vsel %vm1220, %v1254, %v1256
    %v1258 = vrot.slane %v838, 7
    %v1259 = vsel %vm1220, %v1256, %v1258
    %v1260 = vrot.slane %v839, 7
    %v1261 = vsel %vm1220, %v1258, %v1260
    %v1262 = vrot.slane %v840, 7
    %v1263 = vsel %vm1220, %v1260, %v1262
    %v1264 = vrot.slane %v841, 7
    %v1265 = vsel %vm1220, %v1262, %v1264
    %v1266 = vrot.slane %v842, 7
    %v1267 = vsel %vm1220, %v1264, %v1266
    %v1268 = vrot.slane %v843, 7
    %v1269 = vsel %vm1220, %v1266, %v1268
    %v1270 = vrot.slane %v844, 7
    %v1271 = vsel %vm1220, %v1268, %v1270
    %v1272 = vrot.slane %v845, 7
    %v1273 = vsel %vm1220, %v1270, %v1272
    %v1274 = vrot.slane %v846, 7
    %v1275 = vsel %vm1220, %v1272, %v1274
    %v1276 = vrot.slane %v847, 7
    %v1277 = vsel %vm1220, %v1274, %v1276
    %v1278 = vrot.slane %v848, 7
    %v1279 = vsel %vm1220, %v1276, %v1278
    %v1280 = vrot.slane %v849, 7
    %v1281 = vsel %vm1220, %v1278, %v1280
    %v1282 = vrot.slane %v850, 7
    %v1283 = vsel %vm1220, %v1280, %v1282
    %v1316 = vsel %vm1220, 0.0, %v1221
    %v1317 = vadd.s32 %v450, 4294967295
    %v1318 = vadd.s32 %v451, 4294967295
    %v1319 = vadd.s32 %v452, 4294967295
    %v1320 = vadd.s32 %v453, 4294967295
    %v1321 = vadd.s32 %v454, 4294967295
    %v1322 = vadd.s32 %v455, 4294967295
    %v1323 = vadd.s32 %v456, 4294967295
    %v1324 = vadd.s32 %v457, 4294967295
    %v1325 = vadd.s32 %v458, 4294967295
    %v1326 = vadd.s32 %v459, 4294967295
    %v1327 = vadd.s32 %v460, 4294967295
    %v1328 = vadd.s32 %v461, 4294967295
    %v1329 = vadd.s32 %v462, 4294967295
    %v1330 = vadd.s32 %v463, 4294967295
    %v1331 = vadd.s32 %v464, 4294967295
    %v1332 = vadd.s32 %v465, 4294967295
    %v1333 = vadd.s32 %v466, 4294967295
    %v1334 = vadd.s32 %v467, 4294967295
    %v1335 = vadd.s32 %v468, 4294967295
    %v1336 = vadd.s32 %v469, 4294967295
    %v1337 = vadd.s32 %v470, 4294967295
    %v1338 = vadd.s32 %v471, 4294967295
    %v1339 = vadd.s32 %v472, 4294967295
    %v1340 = vadd.s32 %v473, 4294967295
    %v1341 = vadd.s32 %v474, 4294967295
    %v1342 = vadd.s32 %v475, 4294967295
    %v1343 = vadd.s32 %v476, 4294967295
    %v1344 = vadd.s32 %v477, 4294967295
    %v1345 = vadd.s32 %v478, 4294967295
    %v1346 = vadd.s32 %v479, 4294967295
    %v1347 = vadd.s32 %v480, 4294967295
    %v1348 = vadd.s32 %v481, 4294967295
    %vm1349 = vcmp.ge.s32.totalorder %v1317, 0
    %vm1350 = vcmp.ge.s32.totalorder %v1318, 0
    %vm1351 = vcmp.ge.s32.totalorder %v1319, 0
    %vm1352 = vcmp.ge.s32.totalorder %v1320, 0
    %vm1353 = vcmp.ge.s32.totalorder %v1321, 0
    %vm1354 = vcmp.ge.s32.totalorder %v1322, 0
    %vm1355 = vcmp.ge.s32.totalorder %v1323, 0
    %vm1356 = vcmp.ge.s32.totalorder %v1324, 0
    %vm1357 = vcmp.ge.s32.totalorder %v1325, 0
    %vm1358 = vcmp.ge.s32.totalorder %v1326, 0
    %vm1359 = vcmp.ge.s32.totalorder %v1327, 0
    %vm1360 = vcmp.ge.s32.totalorder %v1328, 0
    %vm1361 = vcmp.ge.s32.totalorder %v1329, 0
    %vm1362 = vcmp.ge.s32.totalorder %v1330, 0
    %vm1363 = vcmp.ge.s32.totalorder %v1331, 0
    %vm1364 = vcmp.ge.s32.totalorder %v1332, 0
    %vm1365 = vcmp.ge.s32.totalorder %v1333, 0
    %vm1366 = vcmp.ge.s32.totalorder %v1334, 0
    %vm1367 = vcmp.ge.s32.totalorder %v1335, 0
    %vm1368 = vcmp.ge.s32.totalorder %v1336, 0
    %vm1369 = vcmp.ge.s32.totalorder %v1337, 0
    %vm1370 = vcmp.ge.s32.totalorder %v1338, 0
    %vm1371 = vcmp.ge.s32.totalorder %v1339, 0
    %vm1372 = vcmp.ge.s32.totalorder %v1340, 0
    %vm1373 = vcmp.ge.s32.totalorder %v1341, 0
    %vm1374 = vcmp.ge.s32.totalorder %v1342, 0
    %vm1375 = vcmp.ge.s32.totalorder %v1343, 0
    %vm1376 = vcmp.ge.s32.totalorder %v1344, 0
    %vm1377 = vcmp.ge.s32.totalorder %v1345, 0
    %vm1378 = vcmp.ge.s32.totalorder %v1346, 0
    %vm1379 = vcmp.ge.s32.totalorder %v1347, 0
    %vm1380 = vcmp.ge.s32.totalorder %v1348, 0
    %vm1381 = vcmp.lt.s32.totalorder %v1317, 16
    %vm1382 = vcmp.lt.s32.totalorder %v1318, 16
    %vm1383 = vcmp.lt.s32.totalorder %v1319, 16
    %vm1384 = vcmp.lt.s32.totalorder %v1320, 16
    %vm1385 = vcmp.lt.s32.totalorder %v1321, 16
    %vm1386 = vcmp.lt.s32.totalorder %v1322, 16
    %vm1387 = vcmp.lt.s32.totalorder %v1323, 16
    %vm1388 = vcmp.lt.s32.totalorder %v1324, 16
    %vm1389 = vcmp.lt.s32.totalorder %v1325, 16
    %vm1390 = vcmp.lt.s32.totalorder %v1326, 16
    %vm1391 = vcmp.lt.s32.totalorder %v1327, 16
    %vm1392 = vcmp.lt.s32.totalorder %v1328, 16
    %vm1393 = vcmp.lt.s32.totalorder %v1329, 16
    %vm1394 = vcmp.lt.s32.totalorder %v1330, 16
    %vm1395 = vcmp.lt.s32.totalorder %v1331, 16
    %vm1396 = vcmp.lt.s32.totalorder %v1332, 16
    %vm1397 = vcmp.lt.s32.totalorder %v1333, 16
    %vm1398 = vcmp.lt.s32.totalorder %v1334, 16
    %vm1399 = vcmp.lt.s32.totalorder %v1335, 16
    %vm1400 = vcmp.lt.s32.totalorder %v1336, 16
    %vm1401 = vcmp.lt.s32.totalorder %v1337, 16
    %vm1402 = vcmp.lt.s32.totalorder %v1338, 16
    %vm1403 = vcmp.lt.s32.totalorder %v1339, 16
    %vm1404 = vcmp.lt.s32.totalorder %v1340, 16
    %vm1405 = vcmp.lt.s32.totalorder %v1341, 16
    %vm1406 = vcmp.lt.s32.totalorder %v1342, 16
    %vm1407 = vcmp.lt.s32.totalorder %v1343, 16
    %vm1408 = vcmp.lt.s32.totalorder %v1344, 16
    %vm1409 = vcmp.lt.s32.totalorder %v1345, 16
    %vm1410 = vcmp.lt.s32.totalorder %v1346, 16
    %vm1411 = vcmp.lt.s32.totalorder %v1347, 16
    %vm1412 = vcmp.lt.s32.totalorder %v1348, 16
    %vm1413 = vmand %vm1349, %vm1381
    %vm1414 = vmand %vm1350, %vm1382
    %vm1415 = vmand %vm1351, %vm1383
    %vm1416 = vmand %vm1352, %vm1384
    %vm1417 = vmand %vm1353, %vm1385
    %vm1418 = vmand %vm1354, %vm1386
    %vm1419 = vmand %vm1355, %vm1387
    %vm1420 = vmand %vm1356, %vm1388
    %vm1421 = vmand %vm1357, %vm1389
    %vm1422 = vmand %vm1358, %vm1390
    %vm1423 = vmand %vm1359, %vm1391
    %vm1424 = vmand %vm1360, %vm1392
    %vm1425 = vmand %vm1361, %vm1393
    %vm1426 = vmand %vm1362, %vm1394
    %vm1427 = vmand %vm1363, %vm1395
    %vm1428 = vmand %vm1364, %vm1396
    %vm1429 = vmand %vm1365, %vm1397
    %vm1430 = vmand %vm1366, %vm1398
    %vm1431 = vmand %vm1367, %vm1399
    %vm1432 = vmand %vm1368, %vm1400
    %vm1433 = vmand %vm1369, %vm1401
    %vm1434 = vmand %vm1370, %vm1402
    %vm1435 = vmand %vm1371, %vm1403
    %vm1436 = vmand %vm1372, %vm1404
    %vm1437 = vmand %vm1373, %vm1405
    %vm1438 = vmand %vm1374, %vm1406
    %vm1439 = vmand %vm1375, %vm1407
    %vm1440 = vmand %vm1376, %vm1408
    %vm1441 = vmand %vm1377, %vm1409
    %vm1442 = vmand %vm1378, %vm1410
    %vm1443 = vmand %vm1379, %vm1411
    %vm1444 = vmand %vm1380, %vm1412
    %v1445 = vsel %vm1413, 1, 0
    %v1446 = vsel %vm1414, 1, 0
    %v1447 = vsel %vm1415, 1, 0
    %v1448 = vsel %vm1416, 1, 0
    %v1449 = vsel %vm1417, 1, 0
    %v1450 = vsel %vm1418, 1, 0
    %v1451 = vsel %vm1419, 1, 0
    %v1452 = vsel %vm1420, 1, 0
    %v1453 = vsel %vm1421, 1, 0
    %v1454 = vsel %vm1422, 1, 0
    %v1455 = vsel %vm1423, 1, 0
    %v1456 = vsel %vm1424, 1, 0
    %v1457 = vsel %vm1425, 1, 0
    %v1458 = vsel %vm1426, 1, 0
    %v1459 = vsel %vm1427, 1, 0
    %v1460 = vsel %vm1428, 1, 0
    %v1461 = vsel %vm1429, 1, 0
    %v1462 = vsel %vm1430, 1, 0
    %v1463 = vsel %vm1431, 1, 0
    %v1464 = vsel %vm1432, 1, 0
    %v1465 = vsel %vm1433, 1, 0
    %v1466 = vsel %vm1434, 1, 0
    %v1467 = vsel %vm1435, 1, 0
    %v1468 = vsel %vm1436, 1, 0
    %v1469 = vsel %vm1437, 1, 0
    %v1470 = vsel %vm1438, 1, 0
    %v1471 = vsel %vm1439, 1, 0
    %v1472 = vsel %vm1440, 1, 0
    %v1473 = vsel %vm1441, 1, 0
    %v1474 = vsel %vm1442, 1, 0
    %v1475 = vsel %vm1443, 1, 0
    %v1476 = vsel %vm1444, 1, 0
    %vm1477 = vcmp.eq.s32.totalorder %v1445, 1
    %vm1478 = vcmp.eq.s32.totalorder %v1446, 1
    %vm1479 = vcmp.eq.s32.totalorder %v1447, 1
    %vm1480 = vcmp.eq.s32.totalorder %v1448, 1
    %vm1481 = vcmp.eq.s32.totalorder %v1449, 1
    %vm1482 = vcmp.eq.s32.totalorder %v1450, 1
    %vm1483 = vcmp.eq.s32.totalorder %v1451, 1
    %vm1484 = vcmp.eq.s32.totalorder %v1452, 1
    %vm1485 = vcmp.eq.s32.totalorder %v1453, 1
    %vm1486 = vcmp.eq.s32.totalorder %v1454, 1
    %vm1487 = vcmp.eq.s32.totalorder %v1455, 1
    %vm1488 = vcmp.eq.s32.totalorder %v1456, 1
    %vm1489 = vcmp.eq.s32.totalorder %v1457, 1
    %vm1490 = vcmp.eq.s32.totalorder %v1458, 1
    %vm1491 = vcmp.eq.s32.totalorder %v1459, 1
    %vm1492 = vcmp.eq.s32.totalorder %v1460, 1
    %vm1493 = vcmp.eq.s32.totalorder %v1461, 1
    %vm1494 = vcmp.eq.s32.totalorder %v1462, 1
    %vm1495 = vcmp.eq.s32.totalorder %v1463, 1
    %vm1496 = vcmp.eq.s32.totalorder %v1464, 1
    %vm1497 = vcmp.eq.s32.totalorder %v1465, 1
    %vm1498 = vcmp.eq.s32.totalorder %v1466, 1
    %vm1499 = vcmp.eq.s32.totalorder %v1467, 1
    %vm1500 = vcmp.eq.s32.totalorder %v1468, 1
    %vm1501 = vcmp.eq.s32.totalorder %v1469, 1
    %vm1502 = vcmp.eq.s32.totalorder %v1470, 1
    %vm1503 = vcmp.eq.s32.totalorder %v1471, 1
    %vm1504 = vcmp.eq.s32.totalorder %v1472, 1
    %vm1505 = vcmp.eq.s32.totalorder %v1473, 1
    %vm1506 = vcmp.eq.s32.totalorder %v1474, 1
    %vm1507 = vcmp.eq.s32.totalorder %v1475, 1
    %vm1508 = vcmp.eq.s32.totalorder %v1476, 1
    %v1509 = vsel %vm1477, %v1316, 0.0
    %v1510 = vsel %vm1478, %v1223, 0.0
    %v1511 = vsel %vm1479, %v1225, 0.0
    %v1512 = vsel %vm1480, %v1227, 0.0
    %v1513 = vsel %vm1481, %v1229, 0.0
    %v1514 = vsel %vm1482, %v1231, 0.0
    %v1515 = vsel %vm1483, %v1233, 0.0
    %v1516 = vsel %vm1484, %v1235, 0.0
    %v1517 = vsel %vm1485, %v1237, 0.0
    %v1518 = vsel %vm1486, %v1239, 0.0
    %v1519 = vsel %vm1487, %v1241, 0.0
    %v1520 = vsel %vm1488, %v1243, 0.0
    %v1521 = vsel %vm1489, %v1245, 0.0
    %v1522 = vsel %vm1490, %v1247, 0.0
    %v1523 = vsel %vm1491, %v1249, 0.0
    %v1524 = vsel %vm1492, %v1251, 0.0
    %v1525 = vsel %vm1493, %v1253, 0.0
    %v1526 = vsel %vm1494, %v1255, 0.0
    %v1527 = vsel %vm1495, %v1257, 0.0
    %v1528 = vsel %vm1496, %v1259, 0.0
    %v1529 = vsel %vm1497, %v1261, 0.0
    %v1530 = vsel %vm1498, %v1263, 0.0
    %v1531 = vsel %vm1499, %v1265, 0.0
    %v1532 = vsel %vm1500, %v1267, 0.0
    %v1533 = vsel %vm1501, %v1269, 0.0
    %v1534 = vsel %vm1502, %v1271, 0.0
    %v1535 = vsel %vm1503, %v1273, 0.0
    %v1536 = vsel %vm1504, %v1275, 0.0
    %v1537 = vsel %vm1505, %v1277, 0.0
    %v1538 = vsel %vm1506, %v1279, 0.0
    %v1539 = vsel %vm1507, %v1281, 0.0
    %v1540 = vsel %vm1508, %v1283, 0.0
    %v1541 = vpack.c.bf16 %v1510, %v1509
    %v1542 = vpack.c.bf16 %v1512, %v1511
    %v1543 = vpack.c.bf16 %v1514, %v1513
    %v1544 = vpack.c.bf16 %v1516, %v1515
    %v1545 = vpack.c.bf16 %v1518, %v1517
    %v1546 = vpack.c.bf16 %v1520, %v1519
    %v1547 = vpack.c.bf16 %v1522, %v1521
    %v1548 = vpack.c.bf16 %v1524, %v1523
    %v1549 = vpack.c.bf16 %v1526, %v1525
    %v1550 = vpack.c.bf16 %v1528, %v1527
    %v1551 = vpack.c.bf16 %v1530, %v1529
    %v1552 = vpack.c.bf16 %v1532, %v1531
    %v1553 = vpack.c.bf16 %v1534, %v1533
    %v1554 = vpack.c.bf16 %v1536, %v1535
    %v1555 = vpack.c.bf16 %v1538, %v1537
    %v1556 = vpack.c.bf16 %v1540, %v1539
    %v1557 = vpack.c.bf16 %v820, %v819
    %v1558 = vpack.c.bf16 %v822, %v821
    %v1559 = vpack.c.bf16 %v824, %v823
    %v1560 = vpack.c.bf16 %v826, %v825
    %v1561 = vpack.c.bf16 %v828, %v827
    %v1562 = vpack.c.bf16 %v830, %v829
    %v1563 = vpack.c.bf16 %v832, %v831
    %v1564 = vpack.c.bf16 %v834, %v833
    %v1565 = vpack.c.bf16 %v836, %v835
    %v1566 = vpack.c.bf16 %v838, %v837
    %v1567 = vpack.c.bf16 %v840, %v839
    %v1568 = vpack.c.bf16 %v842, %v841
    %v1569 = vpack.c.bf16 %v844, %v843
    %v1570 = vpack.c.bf16 %v846, %v845
    %v1571 = vpack.c.bf16 %v848, %v847
    %v1572 = vpack.c.bf16 %v850, %v849
    %vm1573 = vcmask 1046528
    %v1574 = vrot.slane %v819, 1
    %v1575 = vrot.slane %v820, 1
    %v1576 = vsel %vm1573, %v1574, %v1575
    %v1577 = vrot.slane %v821, 1
    %v1578 = vsel %vm1573, %v1575, %v1577
    %v1579 = vrot.slane %v822, 1
    %v1580 = vsel %vm1573, %v1577, %v1579
    %v1581 = vrot.slane %v823, 1
    %v1582 = vsel %vm1573, %v1579, %v1581
    %v1583 = vrot.slane %v824, 1
    %v1584 = vsel %vm1573, %v1581, %v1583
    %v1585 = vrot.slane %v825, 1
    %v1586 = vsel %vm1573, %v1583, %v1585
    %v1587 = vrot.slane %v826, 1
    %v1588 = vsel %vm1573, %v1585, %v1587
    %v1589 = vrot.slane %v827, 1
    %v1590 = vsel %vm1573, %v1587, %v1589
    %v1591 = vrot.slane %v828, 1
    %v1592 = vsel %vm1573, %v1589, %v1591
    %v1593 = vrot.slane %v829, 1
    %v1594 = vsel %vm1573, %v1591, %v1593
    %v1595 = vrot.slane %v830, 1
    %v1596 = vsel %vm1573, %v1593, %v1595
    %v1597 = vrot.slane %v831, 1
    %v1598 = vsel %vm1573, %v1595, %v1597
    %v1599 = vrot.slane %v832, 1
    %v1600 = vsel %vm1573, %v1597, %v1599
    %v1601 = vrot.slane %v833, 1
    %v1602 = vsel %vm1573, %v1599, %v1601
    %v1603 = vrot.slane %v834, 1
    %v1604 = vsel %vm1573, %v1601, %v1603
    %v1605 = vrot.slane %v835, 1
    %v1606 = vsel %vm1573, %v1603, %v1605
    %v1607 = vrot.slane %v836, 1
    %v1608 = vsel %vm1573, %v1605, %v1607
    %v1609 = vrot.slane %v837, 1
    %v1610 = vsel %vm1573, %v1607, %v1609
    %v1611 = vrot.slane %v838, 1
    %v1612 = vsel %vm1573, %v1609, %v1611
    %v1613 = vrot.slane %v839, 1
    %v1614 = vsel %vm1573, %v1611, %v1613
    %v1615 = vrot.slane %v840, 1
    %v1616 = vsel %vm1573, %v1613, %v1615
    %v1617 = vrot.slane %v841, 1
    %v1618 = vsel %vm1573, %v1615, %v1617
    %v1619 = vrot.slane %v842, 1
    %v1620 = vsel %vm1573, %v1617, %v1619
    %v1621 = vrot.slane %v843, 1
    %v1622 = vsel %vm1573, %v1619, %v1621
    %v1623 = vrot.slane %v844, 1
    %v1624 = vsel %vm1573, %v1621, %v1623
    %v1625 = vrot.slane %v845, 1
    %v1626 = vsel %vm1573, %v1623, %v1625
    %v1627 = vrot.slane %v846, 1
    %v1628 = vsel %vm1573, %v1625, %v1627
    %v1629 = vrot.slane %v847, 1
    %v1630 = vsel %vm1573, %v1627, %v1629
    %v1631 = vrot.slane %v848, 1
    %v1632 = vsel %vm1573, %v1629, %v1631
    %v1633 = vrot.slane %v849, 1
    %v1634 = vsel %vm1573, %v1631, %v1633
    %v1635 = vrot.slane %v850, 1
    %v1636 = vsel %vm1573, %v1633, %v1635
    %v1669 = vsel %vm1573, %v1635, 0.0
    %v1670 = vadd.s32 %v450, 1
    %v1671 = vadd.s32 %v451, 1
    %v1672 = vadd.s32 %v452, 1
    %v1673 = vadd.s32 %v453, 1
    %v1674 = vadd.s32 %v454, 1
    %v1675 = vadd.s32 %v455, 1
    %v1676 = vadd.s32 %v456, 1
    %v1677 = vadd.s32 %v457, 1
    %v1678 = vadd.s32 %v458, 1
    %v1679 = vadd.s32 %v459, 1
    %v1680 = vadd.s32 %v460, 1
    %v1681 = vadd.s32 %v461, 1
    %v1682 = vadd.s32 %v462, 1
    %v1683 = vadd.s32 %v463, 1
    %v1684 = vadd.s32 %v464, 1
    %v1685 = vadd.s32 %v465, 1
    %v1686 = vadd.s32 %v466, 1
    %v1687 = vadd.s32 %v467, 1
    %v1688 = vadd.s32 %v468, 1
    %v1689 = vadd.s32 %v469, 1
    %v1690 = vadd.s32 %v470, 1
    %v1691 = vadd.s32 %v471, 1
    %v1692 = vadd.s32 %v472, 1
    %v1693 = vadd.s32 %v473, 1
    %v1694 = vadd.s32 %v474, 1
    %v1695 = vadd.s32 %v475, 1
    %v1696 = vadd.s32 %v476, 1
    %v1697 = vadd.s32 %v477, 1
    %v1698 = vadd.s32 %v478, 1
    %v1699 = vadd.s32 %v479, 1
    %v1700 = vadd.s32 %v480, 1
    %v1701 = vadd.s32 %v481, 1
    %vm1702 = vcmp.ge.s32.totalorder %v1670, 0
    %vm1703 = vcmp.ge.s32.totalorder %v1671, 0
    %vm1704 = vcmp.ge.s32.totalorder %v1672, 0
    %vm1705 = vcmp.ge.s32.totalorder %v1673, 0
    %vm1706 = vcmp.ge.s32.totalorder %v1674, 0
    %vm1707 = vcmp.ge.s32.totalorder %v1675, 0
    %vm1708 = vcmp.ge.s32.totalorder %v1676, 0
    %vm1709 = vcmp.ge.s32.totalorder %v1677, 0
    %vm1710 = vcmp.ge.s32.totalorder %v1678, 0
    %vm1711 = vcmp.ge.s32.totalorder %v1679, 0
    %vm1712 = vcmp.ge.s32.totalorder %v1680, 0
    %vm1713 = vcmp.ge.s32.totalorder %v1681, 0
    %vm1714 = vcmp.ge.s32.totalorder %v1682, 0
    %vm1715 = vcmp.ge.s32.totalorder %v1683, 0
    %vm1716 = vcmp.ge.s32.totalorder %v1684, 0
    %vm1717 = vcmp.ge.s32.totalorder %v1685, 0
    %vm1718 = vcmp.ge.s32.totalorder %v1686, 0
    %vm1719 = vcmp.ge.s32.totalorder %v1687, 0
    %vm1720 = vcmp.ge.s32.totalorder %v1688, 0
    %vm1721 = vcmp.ge.s32.totalorder %v1689, 0
    %vm1722 = vcmp.ge.s32.totalorder %v1690, 0
    %vm1723 = vcmp.ge.s32.totalorder %v1691, 0
    %vm1724 = vcmp.ge.s32.totalorder %v1692, 0
    %vm1725 = vcmp.ge.s32.totalorder %v1693, 0
    %vm1726 = vcmp.ge.s32.totalorder %v1694, 0
    %vm1727 = vcmp.ge.s32.totalorder %v1695, 0
    %vm1728 = vcmp.ge.s32.totalorder %v1696, 0
    %vm1729 = vcmp.ge.s32.totalorder %v1697, 0
    %vm1730 = vcmp.ge.s32.totalorder %v1698, 0
    %vm1731 = vcmp.ge.s32.totalorder %v1699, 0
    %vm1732 = vcmp.ge.s32.totalorder %v1700, 0
    %vm1733 = vcmp.ge.s32.totalorder %v1701, 0
    %vm1734 = vcmp.lt.s32.totalorder %v1670, 16
    %vm1735 = vcmp.lt.s32.totalorder %v1671, 16
    %vm1736 = vcmp.lt.s32.totalorder %v1672, 16
    %vm1737 = vcmp.lt.s32.totalorder %v1673, 16
    %vm1738 = vcmp.lt.s32.totalorder %v1674, 16
    %vm1739 = vcmp.lt.s32.totalorder %v1675, 16
    %vm1740 = vcmp.lt.s32.totalorder %v1676, 16
    %vm1741 = vcmp.lt.s32.totalorder %v1677, 16
    %vm1742 = vcmp.lt.s32.totalorder %v1678, 16
    %vm1743 = vcmp.lt.s32.totalorder %v1679, 16
    %vm1744 = vcmp.lt.s32.totalorder %v1680, 16
    %vm1745 = vcmp.lt.s32.totalorder %v1681, 16
    %vm1746 = vcmp.lt.s32.totalorder %v1682, 16
    %vm1747 = vcmp.lt.s32.totalorder %v1683, 16
    %vm1748 = vcmp.lt.s32.totalorder %v1684, 16
    %vm1749 = vcmp.lt.s32.totalorder %v1685, 16
    %vm1750 = vcmp.lt.s32.totalorder %v1686, 16
    %vm1751 = vcmp.lt.s32.totalorder %v1687, 16
    %vm1752 = vcmp.lt.s32.totalorder %v1688, 16
    %vm1753 = vcmp.lt.s32.totalorder %v1689, 16
    %vm1754 = vcmp.lt.s32.totalorder %v1690, 16
    %vm1755 = vcmp.lt.s32.totalorder %v1691, 16
    %vm1756 = vcmp.lt.s32.totalorder %v1692, 16
    %vm1757 = vcmp.lt.s32.totalorder %v1693, 16
    %vm1758 = vcmp.lt.s32.totalorder %v1694, 16
    %vm1759 = vcmp.lt.s32.totalorder %v1695, 16
    %vm1760 = vcmp.lt.s32.totalorder %v1696, 16
    %vm1761 = vcmp.lt.s32.totalorder %v1697, 16
    %vm1762 = vcmp.lt.s32.totalorder %v1698, 16
    %vm1763 = vcmp.lt.s32.totalorder %v1699, 16
    %vm1764 = vcmp.lt.s32.totalorder %v1700, 16
    %vm1765 = vcmp.lt.s32.totalorder %v1701, 16
    %vm1766 = vmand %vm1702, %vm1734
    %vm1767 = vmand %vm1703, %vm1735
    %vm1768 = vmand %vm1704, %vm1736
    %vm1769 = vmand %vm1705, %vm1737
    %vm1770 = vmand %vm1706, %vm1738
    %vm1771 = vmand %vm1707, %vm1739
    %vm1772 = vmand %vm1708, %vm1740
    %vm1773 = vmand %vm1709, %vm1741
    %vm1774 = vmand %vm1710, %vm1742
    %vm1775 = vmand %vm1711, %vm1743
    %vm1776 = vmand %vm1712, %vm1744
    %vm1777 = vmand %vm1713, %vm1745
    %vm1778 = vmand %vm1714, %vm1746
    %vm1779 = vmand %vm1715, %vm1747
    %vm1780 = vmand %vm1716, %vm1748
    %vm1781 = vmand %vm1717, %vm1749
    %vm1782 = vmand %vm1718, %vm1750
    %vm1783 = vmand %vm1719, %vm1751
    %vm1784 = vmand %vm1720, %vm1752
    %vm1785 = vmand %vm1721, %vm1753
    %vm1786 = vmand %vm1722, %vm1754
    %vm1787 = vmand %vm1723, %vm1755
    %vm1788 = vmand %vm1724, %vm1756
    %vm1789 = vmand %vm1725, %vm1757
    %vm1790 = vmand %vm1726, %vm1758
    %vm1791 = vmand %vm1727, %vm1759
    %vm1792 = vmand %vm1728, %vm1760
    %vm1793 = vmand %vm1729, %vm1761
    %vm1794 = vmand %vm1730, %vm1762
    %vm1795 = vmand %vm1731, %vm1763
    %vm1796 = vmand %vm1732, %vm1764
    %vm1797 = vmand %vm1733, %vm1765
    %v1798 = vsel %vm1766, 1, 0
    %v1799 = vsel %vm1767, 1, 0
    %v1800 = vsel %vm1768, 1, 0
    %v1801 = vsel %vm1769, 1, 0
    %v1802 = vsel %vm1770, 1, 0
    %v1803 = vsel %vm1771, 1, 0
    %v1804 = vsel %vm1772, 1, 0
    %v1805 = vsel %vm1773, 1, 0
    %v1806 = vsel %vm1774, 1, 0
    %v1807 = vsel %vm1775, 1, 0
    %v1808 = vsel %vm1776, 1, 0
    %v1809 = vsel %vm1777, 1, 0
    %v1810 = vsel %vm1778, 1, 0
    %v1811 = vsel %vm1779, 1, 0
    %v1812 = vsel %vm1780, 1, 0
    %v1813 = vsel %vm1781, 1, 0
    %v1814 = vsel %vm1782, 1, 0
    %v1815 = vsel %vm1783, 1, 0
    %v1816 = vsel %vm1784, 1, 0
    %v1817 = vsel %vm1785, 1, 0
    %v1818 = vsel %vm1786, 1, 0
    %v1819 = vsel %vm1787, 1, 0
    %v1820 = vsel %vm1788, 1, 0
    %v1821 = vsel %vm1789, 1, 0
    %v1822 = vsel %vm1790, 1, 0
    %v1823 = vsel %vm1791, 1, 0
    %v1824 = vsel %vm1792, 1, 0
    %v1825 = vsel %vm1793, 1, 0
    %v1826 = vsel %vm1794, 1, 0
    %v1827 = vsel %vm1795, 1, 0
    %v1828 = vsel %vm1796, 1, 0
    %v1829 = vsel %vm1797, 1, 0
    %vm1830 = vcmp.eq.s32.totalorder %v1798, 1
    %vm1831 = vcmp.eq.s32.totalorder %v1799, 1
    %vm1832 = vcmp.eq.s32.totalorder %v1800, 1
    %vm1833 = vcmp.eq.s32.totalorder %v1801, 1
    %vm1834 = vcmp.eq.s32.totalorder %v1802, 1
    %vm1835 = vcmp.eq.s32.totalorder %v1803, 1
    %vm1836 = vcmp.eq.s32.totalorder %v1804, 1
    %vm1837 = vcmp.eq.s32.totalorder %v1805, 1
    %vm1838 = vcmp.eq.s32.totalorder %v1806, 1
    %vm1839 = vcmp.eq.s32.totalorder %v1807, 1
    %vm1840 = vcmp.eq.s32.totalorder %v1808, 1
    %vm1841 = vcmp.eq.s32.totalorder %v1809, 1
    %vm1842 = vcmp.eq.s32.totalorder %v1810, 1
    %vm1843 = vcmp.eq.s32.totalorder %v1811, 1
    %vm1844 = vcmp.eq.s32.totalorder %v1812, 1
    %vm1845 = vcmp.eq.s32.totalorder %v1813, 1
    %vm1846 = vcmp.eq.s32.totalorder %v1814, 1
    %vm1847 = vcmp.eq.s32.totalorder %v1815, 1
    %vm1848 = vcmp.eq.s32.totalorder %v1816, 1
    %vm1849 = vcmp.eq.s32.totalorder %v1817, 1
    %vm1850 = vcmp.eq.s32.totalorder %v1818, 1
    %vm1851 = vcmp.eq.s32.totalorder %v1819, 1
    %vm1852 = vcmp.eq.s32.totalorder %v1820, 1
    %vm1853 = vcmp.eq.s32.totalorder %v1821, 1
    %vm1854 = vcmp.eq.s32.totalorder %v1822, 1
    %vm1855 = vcmp.eq.s32.totalorder %v1823, 1
    %vm1856 = vcmp.eq.s32.totalorder %v1824, 1
    %vm1857 = vcmp.eq.s32.totalorder %v1825, 1
    %vm1858 = vcmp.eq.s32.totalorder %v1826, 1
    %vm1859 = vcmp.eq.s32.totalorder %v1827, 1
    %vm1860 = vcmp.eq.s32.totalorder %v1828, 1
    %vm1861 = vcmp.eq.s32.totalorder %v1829, 1
    %v1862 = vsel %vm1830, %v1576, 0.0
    %v1863 = vsel %vm1831, %v1578, 0.0
    %v1864 = vsel %vm1832, %v1580, 0.0
    %v1865 = vsel %vm1833, %v1582, 0.0
    %v1866 = vsel %vm1834, %v1584, 0.0
    %v1867 = vsel %vm1835, %v1586, 0.0
    %v1868 = vsel %vm1836, %v1588, 0.0
    %v1869 = vsel %vm1837, %v1590, 0.0
    %v1870 = vsel %vm1838, %v1592, 0.0
    %v1871 = vsel %vm1839, %v1594, 0.0
    %v1872 = vsel %vm1840, %v1596, 0.0
    %v1873 = vsel %vm1841, %v1598, 0.0
    %v1874 = vsel %vm1842, %v1600, 0.0
    %v1875 = vsel %vm1843, %v1602, 0.0
    %v1876 = vsel %vm1844, %v1604, 0.0
    %v1877 = vsel %vm1845, %v1606, 0.0
    %v1878 = vsel %vm1846, %v1608, 0.0
    %v1879 = vsel %vm1847, %v1610, 0.0
    %v1880 = vsel %vm1848, %v1612, 0.0
    %v1881 = vsel %vm1849, %v1614, 0.0
    %v1882 = vsel %vm1850, %v1616, 0.0
    %v1883 = vsel %vm1851, %v1618, 0.0
    %v1884 = vsel %vm1852, %v1620, 0.0
    %v1885 = vsel %vm1853, %v1622, 0.0
    %v1886 = vsel %vm1854, %v1624, 0.0
    %v1887 = vsel %vm1855, %v1626, 0.0
    %v1888 = vsel %vm1856, %v1628, 0.0
    %v1889 = vsel %vm1857, %v1630, 0.0
    %v1890 = vsel %vm1858, %v1632, 0.0
    %v1891 = vsel %vm1859, %v1634, 0.0
    %v1892 = vsel %vm1860, %v1636, 0.0
    %v1893 = vsel %vm1861, %v1669, 0.0
    %v1894 = vpack.c.bf16 %v1863, %v1862
    %v1895 = vpack.c.bf16 %v1865, %v1864
    %v1896 = vpack.c.bf16 %v1867, %v1866
    %v1897 = vpack.c.bf16 %v1869, %v1868
    %v1898 = vpack.c.bf16 %v1871, %v1870
    %v1899 = vpack.c.bf16 %v1873, %v1872
    %v1900 = vpack.c.bf16 %v1875, %v1874
    %v1901 = vpack.c.bf16 %v1877, %v1876
    %v1902 = vpack.c.bf16 %v1879, %v1878
    %v1903 = vpack.c.bf16 %v1881, %v1880
    %v1904 = vpack.c.bf16 %v1883, %v1882
    %v1905 = vpack.c.bf16 %v1885, %v1884
    %v1906 = vpack.c.bf16 %v1887, %v1886
    %v1907 = vpack.c.bf16 %v1889, %v1888
    %v1908 = vpack.c.bf16 %v1891, %v1890
    %v1909 = vpack.c.bf16 %v1893, %v1892
    %vm1910 = vcmask 1045504
    %v1911 = vrot.slane %v819, 2
    %v1912 = vrot.slane %v820, 2
    %v1913 = vsel %vm1910, %v1911, %v1912
    %v1914 = vrot.slane %v821, 2
    %v1915 = vsel %vm1910, %v1912, %v1914
    %v1916 = vrot.slane %v822, 2
    %v1917 = vsel %vm1910, %v1914, %v1916
    %v1918 = vrot.slane %v823, 2
    %v1919 = vsel %vm1910, %v1916, %v1918
    %v1920 = vrot.slane %v824, 2
    %v1921 = vsel %vm1910, %v1918, %v1920
    %v1922 = vrot.slane %v825, 2
    %v1923 = vsel %vm1910, %v1920, %v1922
    %v1924 = vrot.slane %v826, 2
    %v1925 = vsel %vm1910, %v1922, %v1924
    %v1926 = vrot.slane %v827, 2
    %v1927 = vsel %vm1910, %v1924, %v1926
    %v1928 = vrot.slane %v828, 2
    %v1929 = vsel %vm1910, %v1926, %v1928
    %v1930 = vrot.slane %v829, 2
    %v1931 = vsel %vm1910, %v1928, %v1930
    %v1932 = vrot.slane %v830, 2
    %v1933 = vsel %vm1910, %v1930, %v1932
    %v1934 = vrot.slane %v831, 2
    %v1935 = vsel %vm1910, %v1932, %v1934
    %v1936 = vrot.slane %v832, 2
    %v1937 = vsel %vm1910, %v1934, %v1936
    %v1938 = vrot.slane %v833, 2
    %v1939 = vsel %vm1910, %v1936, %v1938
    %v1940 = vrot.slane %v834, 2
    %v1941 = vsel %vm1910, %v1938, %v1940
    %v1942 = vrot.slane %v835, 2
    %v1943 = vsel %vm1910, %v1940, %v1942
    %v1944 = vrot.slane %v836, 2
    %v1945 = vsel %vm1910, %v1942, %v1944
    %v1946 = vrot.slane %v837, 2
    %v1947 = vsel %vm1910, %v1944, %v1946
    %v1948 = vrot.slane %v838, 2
    %v1949 = vsel %vm1910, %v1946, %v1948
    %v1950 = vrot.slane %v839, 2
    %v1951 = vsel %vm1910, %v1948, %v1950
    %v1952 = vrot.slane %v840, 2
    %v1953 = vsel %vm1910, %v1950, %v1952
    %v1954 = vrot.slane %v841, 2
    %v1955 = vsel %vm1910, %v1952, %v1954
    %v1956 = vrot.slane %v842, 2
    %v1957 = vsel %vm1910, %v1954, %v1956
    %v1958 = vrot.slane %v843, 2
    %v1959 = vsel %vm1910, %v1956, %v1958
    %v1960 = vrot.slane %v844, 2
    %v1961 = vsel %vm1910, %v1958, %v1960
    %v1962 = vrot.slane %v845, 2
    %v1963 = vsel %vm1910, %v1960, %v1962
    %v1964 = vrot.slane %v846, 2
    %v1965 = vsel %vm1910, %v1962, %v1964
    %v1966 = vrot.slane %v847, 2
    %v1967 = vsel %vm1910, %v1964, %v1966
    %v1968 = vrot.slane %v848, 2
    %v1969 = vsel %vm1910, %v1966, %v1968
    %v1970 = vrot.slane %v849, 2
    %v1971 = vsel %vm1910, %v1968, %v1970
    %v1972 = vrot.slane %v850, 2
    %v1973 = vsel %vm1910, %v1970, %v1972
    %v2006 = vsel %vm1910, %v1972, 0.0
    %v2007 = vadd.s32 %v450, 2
    %v2008 = vadd.s32 %v451, 2
    %v2009 = vadd.s32 %v452, 2
    %v2010 = vadd.s32 %v453, 2
    %v2011 = vadd.s32 %v454, 2
    %v2012 = vadd.s32 %v455, 2
    %v2013 = vadd.s32 %v456, 2
    %v2014 = vadd.s32 %v457, 2
    %v2015 = vadd.s32 %v458, 2
    %v2016 = vadd.s32 %v459, 2
    %v2017 = vadd.s32 %v460, 2
    %v2018 = vadd.s32 %v461, 2
    %v2019 = vadd.s32 %v462, 2
    %v2020 = vadd.s32 %v463, 2
    %v2021 = vadd.s32 %v464, 2
    %v2022 = vadd.s32 %v465, 2
    %v2023 = vadd.s32 %v466, 2
    %v2024 = vadd.s32 %v467, 2
    %v2025 = vadd.s32 %v468, 2
    %v2026 = vadd.s32 %v469, 2
    %v2027 = vadd.s32 %v470, 2
    %v2028 = vadd.s32 %v471, 2
    %v2029 = vadd.s32 %v472, 2
    %v2030 = vadd.s32 %v473, 2
    %v2031 = vadd.s32 %v474, 2
    %v2032 = vadd.s32 %v475, 2
    %v2033 = vadd.s32 %v476, 2
    %v2034 = vadd.s32 %v477, 2
    %v2035 = vadd.s32 %v478, 2
    %v2036 = vadd.s32 %v479, 2
    %v2037 = vadd.s32 %v480, 2
    %v2038 = vadd.s32 %v481, 2
    %vm2039 = vcmp.ge.s32.totalorder %v2007, 0
    %vm2040 = vcmp.ge.s32.totalorder %v2008, 0
    %vm2041 = vcmp.ge.s32.totalorder %v2009, 0
    %vm2042 = vcmp.ge.s32.totalorder %v2010, 0
    %vm2043 = vcmp.ge.s32.totalorder %v2011, 0
    %vm2044 = vcmp.ge.s32.totalorder %v2012, 0
    %vm2045 = vcmp.ge.s32.totalorder %v2013, 0
    %vm2046 = vcmp.ge.s32.totalorder %v2014, 0
    %vm2047 = vcmp.ge.s32.totalorder %v2015, 0
    %vm2048 = vcmp.ge.s32.totalorder %v2016, 0
    %vm2049 = vcmp.ge.s32.totalorder %v2017, 0
    %vm2050 = vcmp.ge.s32.totalorder %v2018, 0
    %vm2051 = vcmp.ge.s32.totalorder %v2019, 0
    %vm2052 = vcmp.ge.s32.totalorder %v2020, 0
    %vm2053 = vcmp.ge.s32.totalorder %v2021, 0
    %vm2054 = vcmp.ge.s32.totalorder %v2022, 0
    %vm2055 = vcmp.ge.s32.totalorder %v2023, 0
    %vm2056 = vcmp.ge.s32.totalorder %v2024, 0
    %vm2057 = vcmp.ge.s32.totalorder %v2025, 0
    %vm2058 = vcmp.ge.s32.totalorder %v2026, 0
    %vm2059 = vcmp.ge.s32.totalorder %v2027, 0
    %vm2060 = vcmp.ge.s32.totalorder %v2028, 0
    %vm2061 = vcmp.ge.s32.totalorder %v2029, 0
    %vm2062 = vcmp.ge.s32.totalorder %v2030, 0
    %vm2063 = vcmp.ge.s32.totalorder %v2031, 0
    %vm2064 = vcmp.ge.s32.totalorder %v2032, 0
    %vm2065 = vcmp.ge.s32.totalorder %v2033, 0
    %vm2066 = vcmp.ge.s32.totalorder %v2034, 0
    %vm2067 = vcmp.ge.s32.totalorder %v2035, 0
    %vm2068 = vcmp.ge.s32.totalorder %v2036, 0
    %vm2069 = vcmp.ge.s32.totalorder %v2037, 0
    %vm2070 = vcmp.ge.s32.totalorder %v2038, 0
    %vm2071 = vcmp.lt.s32.totalorder %v2007, 16
    %vm2072 = vcmp.lt.s32.totalorder %v2008, 16
    %vm2073 = vcmp.lt.s32.totalorder %v2009, 16
    %vm2074 = vcmp.lt.s32.totalorder %v2010, 16
    %vm2075 = vcmp.lt.s32.totalorder %v2011, 16
    %vm2076 = vcmp.lt.s32.totalorder %v2012, 16
    %vm2077 = vcmp.lt.s32.totalorder %v2013, 16
    %vm2078 = vcmp.lt.s32.totalorder %v2014, 16
    %vm2079 = vcmp.lt.s32.totalorder %v2015, 16
    %vm2080 = vcmp.lt.s32.totalorder %v2016, 16
    %vm2081 = vcmp.lt.s32.totalorder %v2017, 16
    %vm2082 = vcmp.lt.s32.totalorder %v2018, 16
    %vm2083 = vcmp.lt.s32.totalorder %v2019, 16
    %vm2084 = vcmp.lt.s32.totalorder %v2020, 16
    %vm2085 = vcmp.lt.s32.totalorder %v2021, 16
    %vm2086 = vcmp.lt.s32.totalorder %v2022, 16
    %vm2087 = vcmp.lt.s32.totalorder %v2023, 16
    %vm2088 = vcmp.lt.s32.totalorder %v2024, 16
    %vm2089 = vcmp.lt.s32.totalorder %v2025, 16
    %vm2090 = vcmp.lt.s32.totalorder %v2026, 16
    %vm2091 = vcmp.lt.s32.totalorder %v2027, 16
    %vm2092 = vcmp.lt.s32.totalorder %v2028, 16
    %vm2093 = vcmp.lt.s32.totalorder %v2029, 16
    %vm2094 = vcmp.lt.s32.totalorder %v2030, 16
    %vm2095 = vcmp.lt.s32.totalorder %v2031, 16
    %vm2096 = vcmp.lt.s32.totalorder %v2032, 16
    %vm2097 = vcmp.lt.s32.totalorder %v2033, 16
    %vm2098 = vcmp.lt.s32.totalorder %v2034, 16
    %vm2099 = vcmp.lt.s32.totalorder %v2035, 16
    %vm2100 = vcmp.lt.s32.totalorder %v2036, 16
    %vm2101 = vcmp.lt.s32.totalorder %v2037, 16
    %vm2102 = vcmp.lt.s32.totalorder %v2038, 16
    %vm2103 = vmand %vm2039, %vm2071
    %vm2104 = vmand %vm2040, %vm2072
    %vm2105 = vmand %vm2041, %vm2073
    %vm2106 = vmand %vm2042, %vm2074
    %vm2107 = vmand %vm2043, %vm2075
    %vm2108 = vmand %vm2044, %vm2076
    %vm2109 = vmand %vm2045, %vm2077
    %vm2110 = vmand %vm2046, %vm2078
    %vm2111 = vmand %vm2047, %vm2079
    %vm2112 = vmand %vm2048, %vm2080
    %vm2113 = vmand %vm2049, %vm2081
    %vm2114 = vmand %vm2050, %vm2082
    %vm2115 = vmand %vm2051, %vm2083
    %vm2116 = vmand %vm2052, %vm2084
    %vm2117 = vmand %vm2053, %vm2085
    %vm2118 = vmand %vm2054, %vm2086
    %vm2119 = vmand %vm2055, %vm2087
    %vm2120 = vmand %vm2056, %vm2088
    %vm2121 = vmand %vm2057, %vm2089
    %vm2122 = vmand %vm2058, %vm2090
    %vm2123 = vmand %vm2059, %vm2091
    %vm2124 = vmand %vm2060, %vm2092
    %vm2125 = vmand %vm2061, %vm2093
    %vm2126 = vmand %vm2062, %vm2094
    %vm2127 = vmand %vm2063, %vm2095
    %vm2128 = vmand %vm2064, %vm2096
    %vm2129 = vmand %vm2065, %vm2097
    %vm2130 = vmand %vm2066, %vm2098
    %vm2131 = vmand %vm2067, %vm2099
    %vm2132 = vmand %vm2068, %vm2100
    %vm2133 = vmand %vm2069, %vm2101
    %vm2134 = vmand %vm2070, %vm2102
    %v2135 = vsel %vm2103, 1, 0
    %v2136 = vsel %vm2104, 1, 0
    %v2137 = vsel %vm2105, 1, 0
    %v2138 = vsel %vm2106, 1, 0
    %v2139 = vsel %vm2107, 1, 0
    %v2140 = vsel %vm2108, 1, 0
    %v2141 = vsel %vm2109, 1, 0
    %v2142 = vsel %vm2110, 1, 0
    %v2143 = vsel %vm2111, 1, 0
    %v2144 = vsel %vm2112, 1, 0
    %v2145 = vsel %vm2113, 1, 0
    %v2146 = vsel %vm2114, 1, 0
    %v2147 = vsel %vm2115, 1, 0
    %v2148 = vsel %vm2116, 1, 0
    %v2149 = vsel %vm2117, 1, 0
    %v2150 = vsel %vm2118, 1, 0
    %v2151 = vsel %vm2119, 1, 0
    %v2152 = vsel %vm2120, 1, 0
    %v2153 = vsel %vm2121, 1, 0
    %v2154 = vsel %vm2122, 1, 0
    %v2155 = vsel %vm2123, 1, 0
    %v2156 = vsel %vm2124, 1, 0
    %v2157 = vsel %vm2125, 1, 0
    %v2158 = vsel %vm2126, 1, 0
    %v2159 = vsel %vm2127, 1, 0
    %v2160 = vsel %vm2128, 1, 0
    %v2161 = vsel %vm2129, 1, 0
    %v2162 = vsel %vm2130, 1, 0
    %v2163 = vsel %vm2131, 1, 0
    %v2164 = vsel %vm2132, 1, 0
    %v2165 = vsel %vm2133, 1, 0
    %v2166 = vsel %vm2134, 1, 0
    %vm2167 = vcmp.eq.s32.totalorder %v2135, 1
    %vm2168 = vcmp.eq.s32.totalorder %v2136, 1
    %vm2169 = vcmp.eq.s32.totalorder %v2137, 1
    %vm2170 = vcmp.eq.s32.totalorder %v2138, 1
    %vm2171 = vcmp.eq.s32.totalorder %v2139, 1
    %vm2172 = vcmp.eq.s32.totalorder %v2140, 1
    %vm2173 = vcmp.eq.s32.totalorder %v2141, 1
    %vm2174 = vcmp.eq.s32.totalorder %v2142, 1
    %vm2175 = vcmp.eq.s32.totalorder %v2143, 1
    %vm2176 = vcmp.eq.s32.totalorder %v2144, 1
    %vm2177 = vcmp.eq.s32.totalorder %v2145, 1
    %vm2178 = vcmp.eq.s32.totalorder %v2146, 1
    %vm2179 = vcmp.eq.s32.totalorder %v2147, 1
    %vm2180 = vcmp.eq.s32.totalorder %v2148, 1
    %vm2181 = vcmp.eq.s32.totalorder %v2149, 1
    %vm2182 = vcmp.eq.s32.totalorder %v2150, 1
    %vm2183 = vcmp.eq.s32.totalorder %v2151, 1
    %vm2184 = vcmp.eq.s32.totalorder %v2152, 1
    %vm2185 = vcmp.eq.s32.totalorder %v2153, 1
    %vm2186 = vcmp.eq.s32.totalorder %v2154, 1
    %vm2187 = vcmp.eq.s32.totalorder %v2155, 1
    %vm2188 = vcmp.eq.s32.totalorder %v2156, 1
    %vm2189 = vcmp.eq.s32.totalorder %v2157, 1
    %vm2190 = vcmp.eq.s32.totalorder %v2158, 1
    %vm2191 = vcmp.eq.s32.totalorder %v2159, 1
    %vm2192 = vcmp.eq.s32.totalorder %v2160, 1
    %vm2193 = vcmp.eq.s32.totalorder %v2161, 1
    %vm2194 = vcmp.eq.s32.totalorder %v2162, 1
    %vm2195 = vcmp.eq.s32.totalorder %v2163, 1
    %vm2196 = vcmp.eq.s32.totalorder %v2164, 1
    %vm2197 = vcmp.eq.s32.totalorder %v2165, 1
    %vm2198 = vcmp.eq.s32.totalorder %v2166, 1
    %v2199 = vsel %vm2167, %v1913, 0.0
    %v2200 = vsel %vm2168, %v1915, 0.0
    %v2201 = vsel %vm2169, %v1917, 0.0
    %v2202 = vsel %vm2170, %v1919, 0.0
    %v2203 = vsel %vm2171, %v1921, 0.0
    %v2204 = vsel %vm2172, %v1923, 0.0
    %v2205 = vsel %vm2173, %v1925, 0.0
    %v2206 = vsel %vm2174, %v1927, 0.0
    %v2207 = vsel %vm2175, %v1929, 0.0
    %v2208 = vsel %vm2176, %v1931, 0.0
    %v2209 = vsel %vm2177, %v1933, 0.0
    %v2210 = vsel %vm2178, %v1935, 0.0
    %v2211 = vsel %vm2179, %v1937, 0.0
    %v2212 = vsel %vm2180, %v1939, 0.0
    %v2213 = vsel %vm2181, %v1941, 0.0
    %v2214 = vsel %vm2182, %v1943, 0.0
    %v2215 = vsel %vm2183, %v1945, 0.0
    %v2216 = vsel %vm2184, %v1947, 0.0
    %v2217 = vsel %vm2185, %v1949, 0.0
    %v2218 = vsel %vm2186, %v1951, 0.0
    %v2219 = vsel %vm2187, %v1953, 0.0
    %v2220 = vsel %vm2188, %v1955, 0.0
    %v2221 = vsel %vm2189, %v1957, 0.0
    %v2222 = vsel %vm2190, %v1959, 0.0
    %v2223 = vsel %vm2191, %v1961, 0.0
    %v2224 = vsel %vm2192, %v1963, 0.0
    %v2225 = vsel %vm2193, %v1965, 0.0
    %v2226 = vsel %vm2194, %v1967, 0.0
    %v2227 = vsel %vm2195, %v1969, 0.0
    %v2228 = vsel %vm2196, %v1971, 0.0
    %v2229 = vsel %vm2197, %v1973, 0.0
    %v2230 = vsel %vm2198, %v2006, 0.0
    %v2231 = vpack.c.bf16 %v2200, %v2199
    %v2232 = vpack.c.bf16 %v2202, %v2201
    %v2233 = vpack.c.bf16 %v2204, %v2203
    %v2234 = vpack.c.bf16 %v2206, %v2205
    %v2235 = vpack.c.bf16 %v2208, %v2207
    %v2236 = vpack.c.bf16 %v2210, %v2209
    %v2237 = vpack.c.bf16 %v2212, %v2211
    %v2238 = vpack.c.bf16 %v2214, %v2213
    %v2239 = vpack.c.bf16 %v2216, %v2215
    %v2240 = vpack.c.bf16 %v2218, %v2217
    %v2241 = vpack.c.bf16 %v2220, %v2219
    %v2242 = vpack.c.bf16 %v2222, %v2221
    %v2243 = vpack.c.bf16 %v2224, %v2223
    %v2244 = vpack.c.bf16 %v2226, %v2225
    %v2245 = vpack.c.bf16 %v2228, %v2227
    %v2246 = vpack.c.bf16 %v2230, %v2229
    %v2247 = vld [vmem:[#allocation2] sm:$0xff]
    %v2248 = vld [vmem:[#allocation2 + $0x8] sm:$0xff]
    %v2249 = vld [vmem:[#allocation2 + $0x10] sm:$0xff]
    %v2250 = vld [vmem:[#allocation2 + $0x18] sm:$0xff]
    %v2251 = vld [vmem:[#allocation2 + $0x20] sm:$0xff]
    %v2252 = vld [vmem:[#allocation2 + $0x28] sm:$0xff]
    %v2253 = vld [vmem:[#allocation2 + $0x30] sm:$0xff]
    %v2254 = vld [vmem:[#allocation2 + $0x38] sm:$0xff]
    %v2255 = vld [vmem:[#allocation2 + $0x40] sm:$0xff]
    %v2256 = vld [vmem:[#allocation2 + $0x48] sm:$0xff]
    %v2257 = vld [vmem:[#allocation2 + $0x50] sm:$0xff]
    %v2258 = vld [vmem:[#allocation2 + $0x58] sm:$0xff]
    %v2259 = vld [vmem:[#allocation2 + $0x60] sm:$0xff]
    %v2260 = vld [vmem:[#allocation2 + $0x68] sm:$0xff]
    %v2261 = vld [vmem:[#allocation2 + $0x70] sm:$0xff]
    %v2262 = vld [vmem:[#allocation2 + $0x78] sm:$0xff]
    %v2263 = vld [vmem:[#allocation2 + $0x80] sm:$0xff]
    %v2264 = vld [vmem:[#allocation2 + $0x88] sm:$0xff]
    %v2265 = vld [vmem:[#allocation2 + $0x90] sm:$0xff]
    %v2266 = vld [vmem:[#allocation2 + $0x98] sm:$0xff]
    %v2267 = vld [vmem:[#allocation2 + $0xa0] sm:$0xff]
    %v2268 = vld [vmem:[#allocation2 + $0xa8] sm:$0xff]
    %v2269 = vld [vmem:[#allocation2 + $0xb0] sm:$0xff]
    %v2270 = vld [vmem:[#allocation2 + $0xb8] sm:$0xff]
    %v2271 = vld [vmem:[#allocation2 + $0xc0] sm:$0xff]
    %v2272 = vld [vmem:[#allocation2 + $0xc8] sm:$0xff]
    %v2273 = vld [vmem:[#allocation2 + $0xd0] sm:$0xff]
    %v2274 = vld [vmem:[#allocation2 + $0xd8] sm:$0xff]
    %v2275 = vld [vmem:[#allocation2 + $0xe0] sm:$0xff]
    %v2276 = vld [vmem:[#allocation2 + $0xe8] sm:$0xff]
    %v2277 = vld [vmem:[#allocation2 + $0xf0] sm:$0xff]
    %v2278 = vld [vmem:[#allocation2 + $0xf8] sm:$0xff]
    %v2279 = vld [vmem:[#allocation2 + $0x100] sm:$0xff]
    %v2280 = vld [vmem:[#allocation2 + $0x108] sm:$0xff]
    %v2281 = vld [vmem:[#allocation2 + $0x110] sm:$0xff]
    %v2282 = vld [vmem:[#allocation2 + $0x118] sm:$0xff]
    %v2283 = vld [vmem:[#allocation2 + $0x120] sm:$0xff]
    %v2284 = vld [vmem:[#allocation2 + $0x128] sm:$0xff]
    %v2285 = vld [vmem:[#allocation2 + $0x130] sm:$0xff]
    %v2286 = vld [vmem:[#allocation2 + $0x138] sm:$0xff]
    %v2287 = vld [vmem:[#allocation2 + $0x140] sm:$0xff]
    %v2288 = vld [vmem:[#allocation2 + $0x148] sm:$0xff]
    %v2289 = vld [vmem:[#allocation2 + $0x150] sm:$0xff]
    %v2290 = vld [vmem:[#allocation2 + $0x158] sm:$0xff]
    %v2291 = vld [vmem:[#allocation2 + $0x160] sm:$0xff]
    %v2292 = vld [vmem:[#allocation2 + $0x168] sm:$0xff]
    %v2293 = vld [vmem:[#allocation2 + $0x170] sm:$0xff]
    %v2294 = vld [vmem:[#allocation2 + $0x178] sm:$0xff]
    %v2295 = vld [vmem:[#allocation2 + $0x180] sm:$0xff]
    %v2296 = vld [vmem:[#allocation2 + $0x188] sm:$0xff]
    %v2297 = vld [vmem:[#allocation2 + $0x190] sm:$0xff]
    %v2298 = vld [vmem:[#allocation2 + $0x198] sm:$0xff]
    %v2299 = vld [vmem:[#allocation2 + $0x1a0] sm:$0xff]
    %v2300 = vld [vmem:[#allocation2 + $0x1a8] sm:$0xff]
    %v2301 = vld [vmem:[#allocation2 + $0x1b0] sm:$0xff]
    %v2302 = vld [vmem:[#allocation2 + $0x1b8] sm:$0xff]
    %v2303 = vld [vmem:[#allocation2 + $0x1c0] sm:$0xff]
    %v2304 = vld [vmem:[#allocation2 + $0x1c8] sm:$0xff]
    %v2305 = vld [vmem:[#allocation2 + $0x1d0] sm:$0xff]
    %v2306 = vld [vmem:[#allocation2 + $0x1d8] sm:$0xff]
    %v2307 = vld [vmem:[#allocation2 + $0x1e0] sm:$0xff]
    %v2308 = vld [vmem:[#allocation2 + $0x1e8] sm:$0xff]
    %v2309 = vld [vmem:[#allocation2 + $0x1f0] sm:$0xff]
    %v2310 = vld [vmem:[#allocation2 + $0x1f8] sm:$0xff]
    %v2311 = vld [vmem:[#allocation2 + $0x200] sm:$0xff]
    %v2312 = vld [vmem:[#allocation2 + $0x208] sm:$0xff]
    %v2313 = vld [vmem:[#allocation2 + $0x210] sm:$0xff]
    %v2314 = vld [vmem:[#allocation2 + $0x218] sm:$0xff]
    %v2315 = vld [vmem:[#allocation2 + $0x220] sm:$0xff]
    %v2316 = vld [vmem:[#allocation2 + $0x228] sm:$0xff]
    %v2317 = vld [vmem:[#allocation2 + $0x230] sm:$0xff]
    %v2318 = vld [vmem:[#allocation2 + $0x238] sm:$0xff]
    %v2319 = vld [vmem:[#allocation2 + $0x240] sm:$0xff]
    %v2320 = vld [vmem:[#allocation2 + $0x248] sm:$0xff]
    %v2321 = vld [vmem:[#allocation2 + $0x250] sm:$0xff]
    %v2322 = vld [vmem:[#allocation2 + $0x258] sm:$0xff]
    %v2323 = vld [vmem:[#allocation2 + $0x260] sm:$0xff]
    %v2324 = vld [vmem:[#allocation2 + $0x268] sm:$0xff]
    %v2325 = vld [vmem:[#allocation2 + $0x270] sm:$0xff]
    %v2326 = vld [vmem:[#allocation2 + $0x278] sm:$0xff]
    %v2327 = vld [vmem:[%s5] sm:$0x3]
    %v2329 = vlaneseq
    %v2330 = vshrl.u32 %v2329, 7
    %v2331 = vsub.s32 0, %v2330
    %v2332 = vrot.slane %v2327, %v2331
    %v2333 = vlaneseq
    %v2334 = vshrl.u32 %v2333, 7
    %v2335 = vsub.s32 1, %v2334
    %v2336 = vrot.slane %v2327, %v2335
    %v2419 = vunpack.c.l.b16 %v2247
    %v2420 = vunpack.c.h.b16 %v2247
    %v2421 = vunpack.c.l.b16 %v2248
    %v2422 = vunpack.c.h.b16 %v2248
    %v2423 = vunpack.c.l.b16 %v2249
    %v2424 = vunpack.c.h.b16 %v2249
    %v2425 = vunpack.c.l.b16 %v2250
    %v2426 = vunpack.c.h.b16 %v2250
    %v2427 = vunpack.c.l.b16 %v2251
    %v2428 = vunpack.c.h.b16 %v2251
    %v2429 = vunpack.c.l.b16 %v2252
    %v2430 = vunpack.c.h.b16 %v2252
    %v2431 = vunpack.c.l.b16 %v2253
    %v2432 = vunpack.c.h.b16 %v2253
    %v2433 = vunpack.c.l.b16 %v2254
    %v2434 = vunpack.c.h.b16 %v2254
    %v2435 = vunpack.c.l.b16 %v2255
    %v2436 = vunpack.c.h.b16 %v2255
    %v2437 = vunpack.c.l.b16 %v2256
    %v2438 = vunpack.c.h.b16 %v2256
    %v2439 = vunpack.c.l.b16 %v2257
    %v2440 = vunpack.c.h.b16 %v2257
    %v2441 = vunpack.c.l.b16 %v2258
    %v2442 = vunpack.c.h.b16 %v2258
    %v2443 = vunpack.c.l.b16 %v2259
    %v2444 = vunpack.c.h.b16 %v2259
    %v2445 = vunpack.c.l.b16 %v2260
    %v2446 = vunpack.c.h.b16 %v2260
    %v2447 = vunpack.c.l.b16 %v2261
    %v2448 = vunpack.c.h.b16 %v2261
    %v2449 = vunpack.c.l.b16 %v2262
    %v2450 = vunpack.c.h.b16 %v2262
    %v2451 = vunpack.c.l.b16 %v2263
    %v2452 = vunpack.c.h.b16 %v2263
    %v2453 = vunpack.c.l.b16 %v2264
    %v2454 = vunpack.c.h.b16 %v2264
    %v2455 = vunpack.c.l.b16 %v2265
    %v2456 = vunpack.c.h.b16 %v2265
    %v2457 = vunpack.c.l.b16 %v2266
    %v2458 = vunpack.c.h.b16 %v2266
    %v2459 = vunpack.c.l.b16 %v2267
    %v2460 = vunpack.c.h.b16 %v2267
    %v2461 = vunpack.c.l.b16 %v2268
    %v2462 = vunpack.c.h.b16 %v2268
    %v2463 = vunpack.c.l.b16 %v2269
    %v2464 = vunpack.c.h.b16 %v2269
    %v2465 = vunpack.c.l.b16 %v2270
    %v2466 = vunpack.c.h.b16 %v2270
    %v2467 = vunpack.c.l.b16 %v2271
    %v2468 = vunpack.c.h.b16 %v2271
    %v2469 = vunpack.c.l.b16 %v2272
    %v2470 = vunpack.c.h.b16 %v2272
    %v2471 = vunpack.c.l.b16 %v2273
    %v2472 = vunpack.c.h.b16 %v2273
    %v2473 = vunpack.c.l.b16 %v2274
    %v2474 = vunpack.c.h.b16 %v2274
    %v2475 = vunpack.c.l.b16 %v2275
    %v2476 = vunpack.c.h.b16 %v2275
    %v2477 = vunpack.c.l.b16 %v2276
    %v2478 = vunpack.c.h.b16 %v2276
    %v2479 = vunpack.c.l.b16 %v2277
    %v2480 = vunpack.c.h.b16 %v2277
    %v2481 = vunpack.c.l.b16 %v2278
    %v2482 = vunpack.c.h.b16 %v2278
    %v2483 = vunpack.c.l.b16 %v2279
    %v2484 = vunpack.c.h.b16 %v2279
    %v2485 = vunpack.c.l.b16 %v2280
    %v2486 = vunpack.c.h.b16 %v2280
    %v2487 = vunpack.c.l.b16 %v2281
    %v2488 = vunpack.c.h.b16 %v2281
    %v2489 = vunpack.c.l.b16 %v2282
    %v2490 = vunpack.c.h.b16 %v2282
    %v2491 = vunpack.c.l.b16 %v2283
    %v2492 = vunpack.c.h.b16 %v2283
    %v2493 = vunpack.c.l.b16 %v2284
    %v2494 = vunpack.c.h.b16 %v2284
    %v2495 = vunpack.c.l.b16 %v2285
    %v2496 = vunpack.c.h.b16 %v2285
    %v2497 = vunpack.c.l.b16 %v2286
    %v2498 = vunpack.c.h.b16 %v2286
    %v2499 = vunpack.c.l.b16 %v2287
    %v2500 = vunpack.c.h.b16 %v2287
    %v2501 = vunpack.c.l.b16 %v2288
    %v2502 = vunpack.c.h.b16 %v2288
    %v2503 = vunpack.c.l.b16 %v2289
    %v2504 = vunpack.c.h.b16 %v2289
    %v2505 = vunpack.c.l.b16 %v2290
    %v2506 = vunpack.c.h.b16 %v2290
    %v2507 = vunpack.c.l.b16 %v2291
    %v2508 = vunpack.c.h.b16 %v2291
    %v2509 = vunpack.c.l.b16 %v2292
    %v2510 = vunpack.c.h.b16 %v2292
    %v2511 = vunpack.c.l.b16 %v2293
    %v2512 = vunpack.c.h.b16 %v2293
    %v2513 = vunpack.c.l.b16 %v2294
    %v2514 = vunpack.c.h.b16 %v2294
    %v2515 = vunpack.c.l.b16 %v2295
    %v2516 = vunpack.c.h.b16 %v2295
    %v2517 = vunpack.c.l.b16 %v2296
    %v2518 = vunpack.c.h.b16 %v2296
    %v2519 = vunpack.c.l.b16 %v2297
    %v2520 = vunpack.c.h.b16 %v2297
    %v2521 = vunpack.c.l.b16 %v2298
    %v2522 = vunpack.c.h.b16 %v2298
    %v2523 = vunpack.c.l.b16 %v2299
    %v2524 = vunpack.c.h.b16 %v2299
    %v2525 = vunpack.c.l.b16 %v2300
    %v2526 = vunpack.c.h.b16 %v2300
    %v2527 = vunpack.c.l.b16 %v2301
    %v2528 = vunpack.c.h.b16 %v2301
    %v2529 = vunpack.c.l.b16 %v2302
    %v2530 = vunpack.c.h.b16 %v2302
    %v2531 = vunpack.c.l.b16 %v2303
    %v2532 = vunpack.c.h.b16 %v2303
    %v2533 = vunpack.c.l.b16 %v2304
    %v2534 = vunpack.c.h.b16 %v2304
    %v2535 = vunpack.c.l.b16 %v2305
    %v2536 = vunpack.c.h.b16 %v2305
    %v2537 = vunpack.c.l.b16 %v2306
    %v2538 = vunpack.c.h.b16 %v2306
    %v2539 = vunpack.c.l.b16 %v2307
    %v2540 = vunpack.c.h.b16 %v2307
    %v2541 = vunpack.c.l.b16 %v2308
    %v2542 = vunpack.c.h.b16 %v2308
    %v2543 = vunpack.c.l.b16 %v2309
    %v2544 = vunpack.c.h.b16 %v2309
    %v2545 = vunpack.c.l.b16 %v2310
    %v2546 = vunpack.c.h.b16 %v2310
    %v2547 = vunpack.c.l.b16 %v2311
    %v2548 = vunpack.c.h.b16 %v2311
    %v2549 = vunpack.c.l.b16 %v2312
    %v2550 = vunpack.c.h.b16 %v2312
    %v2551 = vunpack.c.l.b16 %v2313
    %v2552 = vunpack.c.h.b16 %v2313
    %v2553 = vunpack.c.l.b16 %v2314
    %v2554 = vunpack.c.h.b16 %v2314
    %v2555 = vunpack.c.l.b16 %v2315
    %v2556 = vunpack.c.h.b16 %v2315
    %v2557 = vunpack.c.l.b16 %v2316
    %v2558 = vunpack.c.h.b16 %v2316
    %v2559 = vunpack.c.l.b16 %v2317
    %v2560 = vunpack.c.h.b16 %v2317
    %v2561 = vunpack.c.l.b16 %v2318
    %v2562 = vunpack.c.h.b16 %v2318
    %v2563 = vunpack.c.l.b16 %v2319
    %v2564 = vunpack.c.h.b16 %v2319
    %v2565 = vunpack.c.l.b16 %v2320
    %v2566 = vunpack.c.h.b16 %v2320
    %v2567 = vunpack.c.l.b16 %v2321
    %v2568 = vunpack.c.h.b16 %v2321
    %v2569 = vunpack.c.l.b16 %v2322
    %v2570 = vunpack.c.h.b16 %v2322
    %v2571 = vunpack.c.l.b16 %v2323
    %v2572 = vunpack.c.h.b16 %v2323
    %v2573 = vunpack.c.l.b16 %v2324
    %v2574 = vunpack.c.h.b16 %v2324
    %v2575 = vunpack.c.l.b16 %v2325
    %v2576 = vunpack.c.h.b16 %v2325
    %v2577 = vunpack.c.l.b16 %v2326
    %v2578 = vunpack.c.h.b16 %v2326
    %v2579 = vpack.c.b16 %v2421, %v2419
    %v2580 = vpack.c.b16 %v2422, %v2420
    %v2581 = vpack.c.b16 %v2425, %v2423
    %v2582 = vpack.c.b16 %v2426, %v2424
    %v2583 = vpack.c.b16 %v2429, %v2427
    %v2584 = vpack.c.b16 %v2430, %v2428
    %v2585 = vpack.c.b16 %v2433, %v2431
    %v2586 = vpack.c.b16 %v2434, %v2432
    %v2587 = vpack.c.b16 %v2437, %v2435
    %v2588 = vpack.c.b16 %v2438, %v2436
    %v2589 = vpack.c.b16 %v2441, %v2439
    %v2590 = vpack.c.b16 %v2442, %v2440
    %v2591 = vpack.c.b16 %v2445, %v2443
    %v2592 = vpack.c.b16 %v2446, %v2444
    %v2593 = vpack.c.b16 %v2449, %v2447
    %v2594 = vpack.c.b16 %v2450, %v2448
    %v2595 = vpack.c.b16 %v2453, %v2451
    %v2596 = vpack.c.b16 %v2454, %v2452
    %v2597 = vpack.c.b16 %v2457, %v2455
    %v2598 = vpack.c.b16 %v2458, %v2456
    %v2599 = vpack.c.b16 %v2461, %v2459
    %v2600 = vpack.c.b16 %v2462, %v2460
    %v2601 = vpack.c.b16 %v2465, %v2463
    %v2602 = vpack.c.b16 %v2466, %v2464
    %v2603 = vpack.c.b16 %v2469, %v2467
    %v2604 = vpack.c.b16 %v2470, %v2468
    %v2605 = vpack.c.b16 %v2473, %v2471
    %v2606 = vpack.c.b16 %v2474, %v2472
    %v2607 = vpack.c.b16 %v2477, %v2475
    %v2608 = vpack.c.b16 %v2478, %v2476
    %v2609 = vpack.c.b16 %v2481, %v2479
    %v2610 = vpack.c.b16 %v2482, %v2480
    %v2611 = vpack.c.b16 %v2485, %v2483
    %v2612 = vpack.c.b16 %v2486, %v2484
    %v2613 = vpack.c.b16 %v2489, %v2487
    %v2614 = vpack.c.b16 %v2490, %v2488
    %v2615 = vpack.c.b16 %v2493, %v2491
    %v2616 = vpack.c.b16 %v2494, %v2492
    %v2617 = vpack.c.b16 %v2497, %v2495
    %v2618 = vpack.c.b16 %v2498, %v2496
    %v2619 = vpack.c.b16 %v2501, %v2499
    %v2620 = vpack.c.b16 %v2502, %v2500
    %v2621 = vpack.c.b16 %v2505, %v2503
    %v2622 = vpack.c.b16 %v2506, %v2504
    %v2623 = vpack.c.b16 %v2509, %v2507
    %v2624 = vpack.c.b16 %v2510, %v2508
    %v2625 = vpack.c.b16 %v2513, %v2511
    %v2626 = vpack.c.b16 %v2514, %v2512
    %v2627 = vpack.c.b16 %v2517, %v2515
    %v2628 = vpack.c.b16 %v2518, %v2516
    %v2629 = vpack.c.b16 %v2521, %v2519
    %v2630 = vpack.c.b16 %v2522, %v2520
    %v2631 = vpack.c.b16 %v2525, %v2523
    %v2632 = vpack.c.b16 %v2526, %v2524
    %v2633 = vpack.c.b16 %v2529, %v2527
    %v2634 = vpack.c.b16 %v2530, %v2528
    %v2635 = vpack.c.b16 %v2533, %v2531
    %v2636 = vpack.c.b16 %v2534, %v2532
    %v2637 = vpack.c.b16 %v2537, %v2535
    %v2638 = vpack.c.b16 %v2538, %v2536
    %v2639 = vpack.c.b16 %v2541, %v2539
    %v2640 = vpack.c.b16 %v2542, %v2540
    %v2641 = vpack.c.b16 %v2545, %v2543
    %v2642 = vpack.c.b16 %v2546, %v2544
    %v2643 = vpack.c.b16 %v2549, %v2547
    %v2644 = vpack.c.b16 %v2550, %v2548
    %v2645 = vpack.c.b16 %v2553, %v2551
    %v2646 = vpack.c.b16 %v2554, %v2552
    %v2647 = vpack.c.b16 %v2557, %v2555
    %v2648 = vpack.c.b16 %v2558, %v2556
    %v2649 = vpack.c.b16 %v2561, %v2559
    %v2650 = vpack.c.b16 %v2562, %v2560
    %v2651 = vpack.c.b16 %v2565, %v2563
    %v2652 = vpack.c.b16 %v2566, %v2564
    %v2653 = vpack.c.b16 %v2569, %v2567
    %v2654 = vpack.c.b16 %v2570, %v2568
    %v2655 = vpack.c.b16 %v2573, %v2571
    %v2656 = vpack.c.b16 %v2574, %v2572
    %v2657 = vpack.c.b16 %v2577, %v2575
    %v2658 = vpack.c.b16 %v2578, %v2576
    %2739 = vmatprep.subr.bf16.mxu0 %v2580
    %2740 = vmatpush1.bf16.msra.mxu0 %v2579
    %2741 = vmatprep.subr.bf16.mxu0 %v2582
    %2742 = vmatpush1.bf16.msra.mxu0 %v2581
    %2743 = vmatprep.subr.bf16.mxu0 %v2584
    %2744 = vmatpush1.bf16.msra.mxu0 %v2583
    %2745 = vmatprep.subr.bf16.mxu0 %v2586
    %2746 = vmatpush1.bf16.msra.mxu0 %v2585
    %2747 = vmatprep.subr.bf16.mxu0 %v2588
    %2748 = vmatpush1.bf16.msra.mxu0 %v2587
    %2749 = vmatprep.subr.bf16.mxu0 %v2590
    %2750 = vmatpush1.bf16.msra.mxu0 %v2589
    %2751 = vmatprep.subr.bf16.mxu0 %v2592
    %2752 = vmatpush1.bf16.msra.mxu0 %v2591
    %2753 = vmatprep.subr.bf16.mxu0 %v2594
    %2754 = vmatpush1.bf16.msra.mxu0 %v2593
    %2755 = vmatprep.subr.bf16.mxu0 %v2596
    %2756 = vmatpush1.bf16.msra.mxu0 %v2595
    %2757 = vmatprep.subr.bf16.mxu0 %v2598
    %2758 = vmatpush1.bf16.msra.mxu0 %v2597
    %2759 = vmatprep.subr.bf16.mxu0 %v2600
    %2760 = vmatpush1.bf16.msra.mxu0 %v2599
    %2761 = vmatprep.subr.bf16.mxu0 %v2602
    %2762 = vmatpush1.bf16.msra.mxu0 %v2601
    %2763 = vmatprep.subr.bf16.mxu0 %v2604
    %2764 = vmatpush1.bf16.msra.mxu0 %v2603
    %2765 = vmatprep.subr.bf16.mxu0 %v2606
    %2766 = vmatpush1.bf16.msra.mxu0 %v2605
    %2767 = vmatprep.subr.bf16.mxu0 %v2608
    %2768 = vmatpush1.bf16.msra.mxu0 %v2607
    %2769 = vmatprep.subr.bf16.mxu0 %v2610
    %2770 = vmatpush1.bf16.msra.mxu0 %v2609
    %2771 = vmatprep.mubr.bf16.mxu0 %v1541
    %2772 = vmatmul.mubr.bf16.gmra.mrb[0].mxu0 %v1204
    %v2773 = vpop.f32.mrb[0].mxu0
    %v2774 = vadd.f32 %v2332, %v2773
    %v2775 = vpop.f32.mrb[0].mxu0
    %v2776 = vadd.f32 %v2336, %v2775
    %v2777 = vpop.f32.mrb[0].mxu0
    %v2778 = vadd.f32 %v2332, %v2777
    %v2779 = vpop.f32.mrb[0].mxu0
    %v2780 = vadd.f32 %v2336, %v2779
    %2781 = vmatprep.mubr.bf16.mxu0 %v1542
    %2782 = vmatmul.mubr.bf16.gmra.mrb[0].mxu0 %v1205
    %v2783 = vpop.f32.mrb[0].mxu0
    %v2784 = vadd.f32 %v2332, %v2783
    %v2785 = vpop.f32.mrb[0].mxu0
    %v2786 = vadd.f32 %v2336, %v2785
    %v2787 = vpop.f32.mrb[0].mxu0
    %v2788 = vadd.f32 %v2332, %v2787
    %v2789 = vpop.f32.mrb[0].mxu0
    %v2790 = vadd.f32 %v2336, %v2789
    %2791 = vmatprep.mubr.bf16.mxu0 %v1543
    %2792 = vmatmul.mubr.bf16.gmra.mrb[0].mxu0 %v1206
    %v2793 = vpop.f32.mrb[0].mxu0
    %v2794 = vadd.f32 %v2332, %v2793
    %v2795 = vpop.f32.mrb[0].mxu0
    %v2796 = vadd.f32 %v2336, %v2795
    %v2797 = vpop.f32.mrb[0].mxu0
    %v2798 = vadd.f32 %v2332, %v2797
    %v2799 = vpop.f32.mrb[0].mxu0
    %v2800 = vadd.f32 %v2336, %v2799
    %2801 = vmatprep.mubr.bf16.mxu0 %v1544
    %2802 = vmatmul.mubr.bf16.gmra.mrb[0].mxu0 %v1207
    %v2803 = vpop.f32.mrb[0].mxu0
    %v2804 = vadd.f32 %v2332, %v2803
    %v2805 = vpop.f32.mrb[0].mxu0
    %v2806 = vadd.f32 %v2336, %v2805
    %v2807 = vpop.f32.mrb[0].mxu0
    %v2808 = vadd.f32 %v2332, %v2807
    %v2809 = vpop.f32.mrb[0].mxu0
    %v2810 = vadd.f32 %v2336, %v2809
    %2811 = vmatprep.mubr.bf16.mxu0 %v1545
    %2812 = vmatmul.mubr.bf16.gmra.mrb[0].mxu0 %v1208
    %v2813 = vpop.f32.mrb[0].mxu0
    %v2814 = vadd.f32 %v2332, %v2813
    %v2815 = vpop.f32.mrb[0].mxu0
    %v2816 = vadd.f32 %v2336, %v2815
    %v2817 = vpop.f32.mrb[0].mxu0
    %v2818 = vadd.f32 %v2332, %v2817
    %v2819 = vpop.f32.mrb[0].mxu0
    %v2820 = vadd.f32 %v2336, %v2819
    %2821 = vmatprep.mubr.bf16.mxu0 %v1546
    %2822 = vmatmul.mubr.bf16.gmra.mrb[0].mxu0 %v1209
    %v2823 = vpop.f32.mrb[0].mxu0
    %v2824 = vadd.f32 %v2332, %v2823
    %v2825 = vpop.f32.mrb[0].mxu0
    %v2826 = vadd.f32 %v2336, %v2825
    %v2827 = vpop.f32.mrb[0].mxu0
    %v2828 = vadd.f32 %v2332, %v2827
    %v2829 = vpop.f32.mrb[0].mxu0
    %v2830 = vadd.f32 %v2336, %v2829
    %2831 = vmatprep.mubr.bf16.mxu0 %v1547
    %2832 = vmatmul.mubr.bf16.gmra.mrb[0].mxu0 %v1210
    %v2833 = vpop.f32.mrb[0].mxu0
    %v2834 = vadd.f32 %v2332, %v2833
    %v2835 = vpop.f32.mrb[0].mxu0
    %v2836 = vadd.f32 %v2336, %v2835
    %v2837 = vpop.f32.mrb[0].mxu0
    %v2838 = vadd.f32 %v2332, %v2837
    %v2839 = vpop.f32.mrb[0].mxu0
    %v2840 = vadd.f32 %v2336, %v2839
    %2841 = vmatprep.mubr.bf16.mxu0 %v1548
    %2842 = vmatmul.mubr.bf16.gmra.mrb[0].mxu0 %v1211
    %v2843 = vpop.f32.mrb[0].mxu0
    %v2844 = vadd.f32 %v2332, %v2843
    %v2845 = vpop.f32.mrb[0].mxu0
    %v2846 = vadd.f32 %v2336, %v2845
    %v2847 = vpop.f32.mrb[0].mxu0
    %v2848 = vadd.f32 %v2332, %v2847
    %v2849 = vpop.f32.mrb[0].mxu0
    %v2850 = vadd.f32 %v2336, %v2849
    %2851 = vmatprep.mubr.bf16.mxu0 %v1549
    %2852 = vmatmul.mubr.bf16.gmra.mrb[0].mxu0 %v1212
    %v2853 = vpop.f32.mrb[0].mxu0
    %v2854 = vadd.f32 %v2332, %v2853
    %v2855 = vpop.f32.mrb[0].mxu0
    %v2856 = vadd.f32 %v2336, %v2855
    %v2857 = vpop.f32.mrb[0].mxu0
    %v2858 = vadd.f32 %v2332, %v2857
    %v2859 = vpop.f32.mrb[0].mxu0
    %v2860 = vadd.f32 %v2336, %v2859
    %2861 = vmatprep.mubr.bf16.mxu0 %v1550
    %2862 = vmatmul.mubr.bf16.gmra.mrb[0].mxu0 %v1213
    %v2863 = vpop.f32.mrb[0].mxu0
    %v2864 = vadd.f32 %v2332, %v2863
    %v2865 = vpop.f32.mrb[0].mxu0
    %v2866 = vadd.f32 %v2336, %v2865
    %v2867 = vpop.f32.mrb[0].mxu0
    %v2868 = vadd.f32 %v2332, %v2867
    %v2869 = vpop.f32.mrb[0].mxu0
    %v2870 = vadd.f32 %v2336, %v2869
    %2871 = vmatprep.mubr.bf16.mxu0 %v1551
    %2872 = vmatmul.mubr.bf16.gmra.mrb[0].mxu0 %v1214
    %v2873 = vpop.f32.mrb[0].mxu0
    %v2874 = vadd.f32 %v2332, %v2873
    %v2875 = vpop.f32.mrb[0].mxu0
    %v2876 = vadd.f32 %v2336, %v2875
    %v2877 = vpop.f32.mrb[0].mxu0
    %v2878 = vadd.f32 %v2332, %v2877
    %v2879 = vpop.f32.mrb[0].mxu0
    %v2880 = vadd.f32 %v2336, %v2879
    %2881 = vmatprep.mubr.bf16.mxu0 %v1552
    %2882 = vmatmul.mubr.bf16.gmra.mrb[0].mxu0 %v1215
    %v2883 = vpop.f32.mrb[0].mxu0
    %v2884 = vadd.f32 %v2332, %v2883
    %v2885 = vpop.f32.mrb[0].mxu0
    %v2886 = vadd.f32 %v2336, %v2885
    %v2887 = vpop.f32.mrb[0].mxu0
    %v2888 = vadd.f32 %v2332, %v2887
    %v2889 = vpop.f32.mrb[0].mxu0
    %v2890 = vadd.f32 %v2336, %v2889
    %2891 = vmatprep.mubr.bf16.mxu0 %v1553
    %2892 = vmatmul.mubr.bf16.gmra.mrb[0].mxu0 %v1216
    %v2893 = vpop.f32.mrb[0].mxu0
    %v2894 = vadd.f32 %v2332, %v2893
    %v2895 = vpop.f32.mrb[0].mxu0
    %v2896 = vadd.f32 %v2336, %v2895
    %v2897 = vpop.f32.mrb[0].mxu0
    %v2898 = vadd.f32 %v2332, %v2897
    %v2899 = vpop.f32.mrb[0].mxu0
    %v2900 = vadd.f32 %v2336, %v2899
    %2901 = vmatprep.mubr.bf16.mxu0 %v1554
    %2902 = vmatmul.mubr.bf16.gmra.mrb[0].mxu0 %v1217
    %v2903 = vpop.f32.mrb[0].mxu0
    %v2904 = vadd.f32 %v2332, %v2903
    %v2905 = vpop.f32.mrb[0].mxu0
    %v2906 = vadd.f32 %v2336, %v2905
    %v2907 = vpop.f32.mrb[0].mxu0
    %v2908 = vadd.f32 %v2332, %v2907
    %v2909 = vpop.f32.mrb[0].mxu0
    %v2910 = vadd.f32 %v2336, %v2909
    %2911 = vmatprep.mubr.bf16.mxu0 %v1555
    %2912 = vmatmul.mubr.bf16.gmra.mrb[0].mxu0 %v1218
    %v2913 = vpop.f32.mrb[0].mxu0
    %v2914 = vadd.f32 %v2332, %v2913
    %v2915 = vpop.f32.mrb[0].mxu0
    %v2916 = vadd.f32 %v2336, %v2915
    %v2917 = vpop.f32.mrb[0].mxu0
    %v2918 = vadd.f32 %v2332, %v2917
    %v2919 = vpop.f32.mrb[0].mxu0
    %v2920 = vadd.f32 %v2336, %v2919
    %2921 = vmatprep.mubr.bf16.mxu0 %v1556
    %2922 = vmatmul.mubr.bf16.gmra.mrb[0].mxu0 %v1219
    %v2923 = vpop.f32.mrb[0].mxu0
    %v2924 = vadd.f32 %v2332, %v2923
    %v2925 = vpop.f32.mrb[0].mxu0
    %v2926 = vadd.f32 %v2336, %v2925
    %v2927 = vpop.f32.mrb[0].mxu0
    %v2928 = vadd.f32 %v2332, %v2927
    %v2929 = vpop.f32.mrb[0].mxu0
    %v2930 = vadd.f32 %v2336, %v2929
    %2931 = vdwg.mxu0
    %2932 = vmatprep.subr.bf16.mxu0 %v2612
    %2933 = vmatpush1.bf16.msra.mxu0 %v2611
    %2934 = vmatprep.subr.bf16.mxu0 %v2614
    %2935 = vmatpush1.bf16.msra.mxu0 %v2613
    %2936 = vmatprep.subr.bf16.mxu0 %v2616
    %2937 = vmatpush1.bf16.msra.mxu0 %v2615
    %2938 = vmatprep.subr.bf16.mxu0 %v2618
    %2939 = vmatpush1.bf16.msra.mxu0 %v2617
    %2940 = vmatprep.subr.bf16.mxu0 %v2620
    %2941 = vmatpush1.bf16.msra.mxu0 %v2619
    %2942 = vmatprep.subr.bf16.mxu0 %v2622
    %2943 = vmatpush1.bf16.msra.mxu0 %v2621
    %2944 = vmatprep.subr.bf16.mxu0 %v2624
    %2945 = vmatpush1.bf16.msra.mxu0 %v2623
    %2946 = vmatprep.subr.bf16.mxu0 %v2626
    %2947 = vmatpush1.bf16.msra.mxu0 %v2625
    %2948 = vmatprep.subr.bf16.mxu0 %v2628
    %2949 = vmatpush1.bf16.msra.mxu0 %v2627
    %2950 = vmatprep.subr.bf16.mxu0 %v2630
    %2951 = vmatpush1.bf16.msra.mxu0 %v2629
    %2952 = vmatprep.subr.bf16.mxu0 %v2632
    %2953 = vmatpush1.bf16.msra.mxu0 %v2631
    %2954 = vmatprep.subr.bf16.mxu0 %v2634
    %2955 = vmatpush1.bf16.msra.mxu0 %v2633
    %2956 = vmatprep.subr.bf16.mxu0 %v2636
    %2957 = vmatpush1.bf16.msra.mxu0 %v2635
    %2958 = vmatprep.subr.bf16.mxu0 %v2638
    %2959 = vmatpush1.bf16.msra.mxu0 %v2637
    %2960 = vmatprep.subr.bf16.mxu0 %v2640
    %2961 = vmatpush1.bf16.msra.mxu0 %v2639
    %2962 = vmatprep.subr.bf16.mxu0 %v2642
    %2963 = vmatpush1.bf16.msra.mxu0 %v2641
    %2964 = vmatprep.mubr.bf16.mxu0 %v1894
    %2965 = vmatmul.mubr.bf16.gmra.mrb[0].mxu0 %v1557
    %v2966 = vpop.f32.mrb[0].mxu0
    %v2967 = vadd.f32 %v2774, %v2966
    %v2968 = vpop.f32.mrb[0].mxu0
    %v2969 = vadd.f32 %v2776, %v2968
    %v2970 = vpop.f32.mrb[0].mxu0
    %v2971 = vadd.f32 %v2778, %v2970
    %v2972 = vpop.f32.mrb[0].mxu0
    %v2973 = vadd.f32 %v2780, %v2972
    %2974 = vmatprep.mubr.bf16.mxu0 %v1895
    %2975 = vmatmul.mubr.bf16.gmra.mrb[0].mxu0 %v1558
    %v2976 = vpop.f32.mrb[0].mxu0
    %v2977 = vadd.f32 %v2784, %v2976
    %v2978 = vpop.f32.mrb[0].mxu0
    %v2979 = vadd.f32 %v2786, %v2978
    %v2980 = vpop.f32.mrb[0].mxu0
    %v2981 = vadd.f32 %v2788, %v2980
    %v2982 = vpop.f32.mrb[0].mxu0
    %v2983 = vadd.f32 %v2790, %v2982
    %2984 = vmatprep.mubr.bf16.mxu0 %v1896
    %2985 = vmatmul.mubr.bf16.gmra.mrb[0].mxu0 %v1559
    %v2986 = vpop.f32.mrb[0].mxu0
    %v2987 = vadd.f32 %v2794, %v2986
    %v2988 = vpop.f32.mrb[0].mxu0
    %v2989 = vadd.f32 %v2796, %v2988
    %v2990 = vpop.f32.mrb[0].mxu0
    %v2991 = vadd.f32 %v2798, %v2990
    %v2992 = vpop.f32.mrb[0].mxu0
    %v2993 = vadd.f32 %v2800, %v2992
    %2994 = vmatprep.mubr.bf16.mxu0 %v1897
    %2995 = vmatmul.mubr.bf16.gmra.mrb[0].mxu0 %v1560
    %v2996 = vpop.f32.mrb[0].mxu0
    %v2997 = vadd.f32 %v2804, %v2996
    %v2998 = vpop.f32.mrb[0].mxu0
    %v2999 = vadd.f32 %v2806, %v2998
    %v3000 = vpop.f32.mrb[0].mxu0
    %v3001 = vadd.f32 %v2808, %v3000
    %v3002 = vpop.f32.mrb[0].mxu0
    %v3003 = vadd.f32 %v2810, %v3002
    %3004 = vmatprep.mubr.bf16.mxu0 %v1898
    %3005 = vmatmul.mubr.bf16.gmra.mrb[0].mxu0 %v1561
    %v3006 = vpop.f32.mrb[0].mxu0
    %v3007 = vadd.f32 %v2814, %v3006
    %v3008 = vpop.f32.mrb[0].mxu0
    %v3009 = vadd.f32 %v2816, %v3008
    %v3010 = vpop.f32.mrb[0].mxu0
    %v3011 = vadd.f32 %v2818, %v3010
    %v3012 = vpop.f32.mrb[0].mxu0
    %v3013 = vadd.f32 %v2820, %v3012
    %3014 = vmatprep.mubr.bf16.mxu0 %v1899
    %3015 = vmatmul.mubr.bf16.gmra.mrb[0].mxu0 %v1562
    %v3016 = vpop.f32.mrb[0].mxu0
    %v3017 = vadd.f32 %v2824, %v3016
    %v3018 = vpop.f32.mrb[0].mxu0
    %v3019 = vadd.f32 %v2826, %v3018
    %v3020 = vpop.f32.mrb[0].mxu0
    %v3021 = vadd.f32 %v2828, %v3020
    %v3022 = vpop.f32.mrb[0].mxu0
    %v3023 = vadd.f32 %v2830, %v3022
    %3024 = vmatprep.mubr.bf16.mxu0 %v1900
    %3025 = vmatmul.mubr.bf16.gmra.mrb[0].mxu0 %v1563
    %v3026 = vpop.f32.mrb[0].mxu0
    %v3027 = vadd.f32 %v2834, %v3026
    %v3028 = vpop.f32.mrb[0].mxu0
    %v3029 = vadd.f32 %v2836, %v3028
    %v3030 = vpop.f32.mrb[0].mxu0
    %v3031 = vadd.f32 %v2838, %v3030
    %v3032 = vpop.f32.mrb[0].mxu0
    %v3033 = vadd.f32 %v2840, %v3032
    %3034 = vmatprep.mubr.bf16.mxu0 %v1901
    %3035 = vmatmul.mubr.bf16.gmra.mrb[0].mxu0 %v1564
    %v3036 = vpop.f32.mrb[0].mxu0
    %v3037 = vadd.f32 %v2844, %v3036
    %v3038 = vpop.f32.mrb[0].mxu0
    %v3039 = vadd.f32 %v2846, %v3038
    %v3040 = vpop.f32.mrb[0].mxu0
    %v3041 = vadd.f32 %v2848, %v3040
    %v3042 = vpop.f32.mrb[0].mxu0
    %v3043 = vadd.f32 %v2850, %v3042
    %3044 = vmatprep.mubr.bf16.mxu0 %v1902
    %3045 = vmatmul.mubr.bf16.gmra.mrb[0].mxu0 %v1565
    %v3046 = vpop.f32.mrb[0].mxu0
    %v3047 = vadd.f32 %v2854, %v3046
    %v3048 = vpop.f32.mrb[0].mxu0
    %v3049 = vadd.f32 %v2856, %v3048
    %v3050 = vpop.f32.mrb[0].mxu0
    %v3051 = vadd.f32 %v2858, %v3050
    %v3052 = vpop.f32.mrb[0].mxu0
    %v3053 = vadd.f32 %v2860, %v3052
    %3054 = vmatprep.mubr.bf16.mxu0 %v1903
    %3055 = vmatmul.mubr.bf16.gmra.mrb[0].mxu0 %v1566
    %v3056 = vpop.f32.mrb[0].mxu0
    %v3057 = vadd.f32 %v2864, %v3056
    %v3058 = vpop.f32.mrb[0].mxu0
    %v3059 = vadd.f32 %v2866, %v3058
    %v3060 = vpop.f32.mrb[0].mxu0
    %v3061 = vadd.f32 %v2868, %v3060
    %v3062 = vpop.f32.mrb[0].mxu0
    %v3063 = vadd.f32 %v2870, %v3062
    %3064 = vmatprep.mubr.bf16.mxu0 %v1904
    %3065 = vmatmul.mubr.bf16.gmra.mrb[0].mxu0 %v1567
    %v3066 = vpop.f32.mrb[0].mxu0
    %v3067 = vadd.f32 %v2874, %v3066
    %v3068 = vpop.f32.mrb[0].mxu0
    %v3069 = vadd.f32 %v2876, %v3068
    %v3070 = vpop.f32.mrb[0].mxu0
    %v3071 = vadd.f32 %v2878, %v3070
    %v3072 = vpop.f32.mrb[0].mxu0
    %v3073 = vadd.f32 %v2880, %v3072
    %3074 = vmatprep.mubr.bf16.mxu0 %v1905
    %3075 = vmatmul.mubr.bf16.gmra.mrb[0].mxu0 %v1568
    %v3076 = vpop.f32.mrb[0].mxu0
    %v3077 = vadd.f32 %v2884, %v3076
    %v3078 = vpop.f32.mrb[0].mxu0
    %v3079 = vadd.f32 %v2886, %v3078
    %v3080 = vpop.f32.mrb[0].mxu0
    %v3081 = vadd.f32 %v2888, %v3080
    %v3082 = vpop.f32.mrb[0].mxu0
    %v3083 = vadd.f32 %v2890, %v3082
    %3084 = vmatprep.mubr.bf16.mxu0 %v1906
    %3085 = vmatmul.mubr.bf16.gmra.mrb[0].mxu0 %v1569
    %v3086 = vpop.f32.mrb[0].mxu0
    %v3087 = vadd.f32 %v2894, %v3086
    %v3088 = vpop.f32.mrb[0].mxu0
    %v3089 = vadd.f32 %v2896, %v3088
    %v3090 = vpop.f32.mrb[0].mxu0
    %v3091 = vadd.f32 %v2898, %v3090
    %v3092 = vpop.f32.mrb[0].mxu0
    %v3093 = vadd.f32 %v2900, %v3092
    %3094 = vmatprep.mubr.bf16.mxu0 %v1907
    %3095 = vmatmul.mubr.bf16.gmra.mrb[0].mxu0 %v1570
    %v3096 = vpop.f32.mrb[0].mxu0
    %v3097 = vadd.f32 %v2904, %v3096
    %v3098 = vpop.f32.mrb[0].mxu0
    %v3099 = vadd.f32 %v2906, %v3098
    %v3100 = vpop.f32.mrb[0].mxu0
    %v3101 = vadd.f32 %v2908, %v3100
    %v3102 = vpop.f32.mrb[0].mxu0
    %v3103 = vadd.f32 %v2910, %v3102
    %3104 = vmatprep.mubr.bf16.mxu0 %v1908
    %3105 = vmatmul.mubr.bf16.gmra.mrb[0].mxu0 %v1571
    %v3106 = vpop.f32.mrb[0].mxu0
    %v3107 = vadd.f32 %v2914, %v3106
    %v3108 = vpop.f32.mrb[0].mxu0
    %v3109 = vadd.f32 %v2916, %v3108
    %v3110 = vpop.f32.mrb[0].mxu0
    %v3111 = vadd.f32 %v2918, %v3110
    %v3112 = vpop.f32.mrb[0].mxu0
    %v3113 = vadd.f32 %v2920, %v3112
    %3114 = vmatprep.mubr.bf16.mxu0 %v1909
    %3115 = vmatmul.mubr.bf16.gmra.mrb[0].mxu0 %v1572
    %v3116 = vpop.f32.mrb[0].mxu0
    %v3117 = vadd.f32 %v2924, %v3116
    %v3118 = vpop.f32.mrb[0].mxu0
    %v3119 = vadd.f32 %v2926, %v3118
    %v3120 = vpop.f32.mrb[0].mxu0
    %v3121 = vadd.f32 %v2928, %v3120
    %v3122 = vpop.f32.mrb[0].mxu0
    %v3123 = vadd.f32 %v2930, %v3122
    %3124 = vdwg.mxu0
    %3125 = vmatprep.subr.bf16.mxu0 %v2644
    %3126 = vmatpush1.bf16.msra.mxu0 %v2643
    %3127 = vmatprep.subr.bf16.mxu0 %v2646
    %3128 = vmatpush1.bf16.msra.mxu0 %v2645
    %3129 = vmatprep.subr.bf16.mxu0 %v2648
    %3130 = vmatpush1.bf16.msra.mxu0 %v2647
    %3131 = vmatprep.subr.bf16.mxu0 %v2650
    %3132 = vmatpush1.bf16.msra.mxu0 %v2649
    %3133 = vmatprep.subr.bf16.mxu0 %v2652
    %3134 = vmatpush1.bf16.msra.mxu0 %v2651
    %3135 = vmatprep.subr.bf16.mxu0 %v2654
    %3136 = vmatpush1.bf16.msra.mxu0 %v2653
    %3137 = vmatprep.subr.bf16.mxu0 %v2656
    %3138 = vmatpush1.bf16.msra.mxu0 %v2655
    %3139 = vmatprep.subr.bf16.mxu0 %v2658
    %3140 = vmatpush1.bf16.msra.mxu0 %v2657
    %3141 = vmatprep.subr.bf16.mxu0 0
    %3142 = vmatpush1.bf16.msra.mxu0 0
    %3143 = vmatprep.subr.bf16.mxu0 0
    %3144 = vmatpush1.bf16.msra.mxu0 0
    %3145 = vmatprep.subr.bf16.mxu0 0
    %3146 = vmatpush1.bf16.msra.mxu0 0
    %3147 = vmatprep.subr.bf16.mxu0 0
    %3148 = vmatpush1.bf16.msra.mxu0 0
    %3149 = vmatprep.subr.bf16.mxu0 0
    %3150 = vmatpush1.bf16.msra.mxu0 0
    %3151 = vmatprep.subr.bf16.mxu0 0
    %3152 = vmatpush1.bf16.msra.mxu0 0
    %3153 = vmatprep.subr.bf16.mxu0 0
    %3154 = vmatpush1.bf16.msra.mxu0 0
    %3155 = vmatprep.subr.bf16.mxu0 0
    %3156 = vmatpush1.bf16.msra.mxu0 0
    %3157 = vmatprep.mubr.bf16.mxu0 0
    %3158 = vmatmul.mubr.bf16.gmra.mrb[0].mxu0 %v2231
    %v3159 = vpop.f32.mrb[0].mxu0
    %v3160 = vadd.f32 %v2967, %v3159
    %v3161 = vpop.f32.mrb[0].mxu0
    %v3162 = vadd.f32 %v2969, %v3161
    %v3163 = vpop.f32.mrb[0].mxu0
    %v3164 = vadd.f32 %v2971, %v3163
    %v3165 = vpop.f32.mrb[0].mxu0
    %v3166 = vadd.f32 %v2973, %v3165
    %3167 = vmatprep.mubr.bf16.mxu0 0
    %3168 = vmatmul.mubr.bf16.gmra.mrb[0].mxu0 %v2232
    %v3169 = vpop.f32.mrb[0].mxu0
    %v3170 = vadd.f32 %v2977, %v3169
    %v3171 = vpop.f32.mrb[0].mxu0
    %v3172 = vadd.f32 %v2979, %v3171
    %v3173 = vpop.f32.mrb[0].mxu0
    %v3174 = vadd.f32 %v2981, %v3173
    %v3175 = vpop.f32.mrb[0].mxu0
    %v3176 = vadd.f32 %v2983, %v3175
    %3177 = vmatprep.mubr.bf16.mxu0 0
    %3178 = vmatmul.mubr.bf16.gmra.mrb[0].mxu0 %v2233
    %v3179 = vpop.f32.mrb[0].mxu0
    %v3180 = vadd.f32 %v2987, %v3179
    %v3181 = vpop.f32.mrb[0].mxu0
    %v3182 = vadd.f32 %v2989, %v3181
    %v3183 = vpop.f32.mrb[0].mxu0
    %v3184 = vadd.f32 %v2991, %v3183
    %v3185 = vpop.f32.mrb[0].mxu0
    %v3186 = vadd.f32 %v2993, %v3185
    %3187 = vmatprep.mubr.bf16.mxu0 0
    %3188 = vmatmul.mubr.bf16.gmra.mrb[0].mxu0 %v2234
    %v3189 = vpop.f32.mrb[0].mxu0
    %v3190 = vadd.f32 %v2997, %v3189
    %v3191 = vpop.f32.mrb[0].mxu0
    %v3192 = vadd.f32 %v2999, %v3191
    %v3193 = vpop.f32.mrb[0].mxu0
    %v3194 = vadd.f32 %v3001, %v3193
    %v3195 = vpop.f32.mrb[0].mxu0
    %v3196 = vadd.f32 %v3003, %v3195
    %3197 = vmatprep.mubr.bf16.mxu0 0
    %3198 = vmatmul.mubr.bf16.gmra.mrb[0].mxu0 %v2235
    %v3199 = vpop.f32.mrb[0].mxu0
    %v3200 = vadd.f32 %v3007, %v3199
    %v3201 = vpop.f32.mrb[0].mxu0
    %v3202 = vadd.f32 %v3009, %v3201
    %v3203 = vpop.f32.mrb[0].mxu0
    %v3204 = vadd.f32 %v3011, %v3203
    %v3205 = vpop.f32.mrb[0].mxu0
    %v3206 = vadd.f32 %v3013, %v3205
    %3207 = vmatprep.mubr.bf16.mxu0 0
    %3208 = vmatmul.mubr.bf16.gmra.mrb[0].mxu0 %v2236
    %v3209 = vpop.f32.mrb[0].mxu0
    %v3210 = vadd.f32 %v3017, %v3209
    %v3211 = vpop.f32.mrb[0].mxu0
    %v3212 = vadd.f32 %v3019, %v3211
    %v3213 = vpop.f32.mrb[0].mxu0
    %v3214 = vadd.f32 %v3021, %v3213
    %v3215 = vpop.f32.mrb[0].mxu0
    %v3216 = vadd.f32 %v3023, %v3215
    %3217 = vmatprep.mubr.bf16.mxu0 0
    %3218 = vmatmul.mubr.bf16.gmra.mrb[0].mxu0 %v2237
    %v3219 = vpop.f32.mrb[0].mxu0
    %v3220 = vadd.f32 %v3027, %v3219
    %v3221 = vpop.f32.mrb[0].mxu0
    %v3222 = vadd.f32 %v3029, %v3221
    %v3223 = vpop.f32.mrb[0].mxu0
    %v3224 = vadd.f32 %v3031, %v3223
    %v3225 = vpop.f32.mrb[0].mxu0
    %v3226 = vadd.f32 %v3033, %v3225
    %3227 = vmatprep.mubr.bf16.mxu0 0
    %3228 = vmatmul.mubr.bf16.gmra.mrb[0].mxu0 %v2238
    %v3229 = vpop.f32.mrb[0].mxu0
    %v3230 = vadd.f32 %v3037, %v3229
    %v3231 = vpop.f32.mrb[0].mxu0
    %v3232 = vadd.f32 %v3039, %v3231
    %v3233 = vpop.f32.mrb[0].mxu0
    %v3234 = vadd.f32 %v3041, %v3233
    %v3235 = vpop.f32.mrb[0].mxu0
    %v3236 = vadd.f32 %v3043, %v3235
    %3237 = vmatprep.mubr.bf16.mxu0 0
    %3238 = vmatmul.mubr.bf16.gmra.mrb[0].mxu0 %v2239
    %v3239 = vpop.f32.mrb[0].mxu0
    %v3240 = vadd.f32 %v3047, %v3239
    %v3241 = vpop.f32.mrb[0].mxu0
    %v3242 = vadd.f32 %v3049, %v3241
    %v3243 = vpop.f32.mrb[0].mxu0
    %v3244 = vadd.f32 %v3051, %v3243
    %v3245 = vpop.f32.mrb[0].mxu0
    %v3246 = vadd.f32 %v3053, %v3245
    %3247 = vmatprep.mubr.bf16.mxu0 0
    %3248 = vmatmul.mubr.bf16.gmra.mrb[0].mxu0 %v2240
    %v3249 = vpop.f32.mrb[0].mxu0
    %v3250 = vadd.f32 %v3057, %v3249
    %v3251 = vpop.f32.mrb[0].mxu0
    %v3252 = vadd.f32 %v3059, %v3251
    %v3253 = vpop.f32.mrb[0].mxu0
    %v3254 = vadd.f32 %v3061, %v3253
    %v3255 = vpop.f32.mrb[0].mxu0
    %v3256 = vadd.f32 %v3063, %v3255
    %3257 = vmatprep.mubr.bf16.mxu0 0
    %3258 = vmatmul.mubr.bf16.gmra.mrb[0].mxu0 %v2241
    %v3259 = vpop.f32.mrb[0].mxu0
    %v3260 = vadd.f32 %v3067, %v3259
    %v3261 = vpop.f32.mrb[0].mxu0
    %v3262 = vadd.f32 %v3069, %v3261
    %v3263 = vpop.f32.mrb[0].mxu0
    %v3264 = vadd.f32 %v3071, %v3263
    %v3265 = vpop.f32.mrb[0].mxu0
    %v3266 = vadd.f32 %v3073, %v3265
    %3267 = vmatprep.mubr.bf16.mxu0 0
    %3268 = vmatmul.mubr.bf16.gmra.mrb[0].mxu0 %v2242
    %v3269 = vpop.f32.mrb[0].mxu0
    %v3270 = vadd.f32 %v3077, %v3269
    %v3271 = vpop.f32.mrb[0].mxu0
    %v3272 = vadd.f32 %v3079, %v3271
    %v3273 = vpop.f32.mrb[0].mxu0
    %v3274 = vadd.f32 %v3081, %v3273
    %v3275 = vpop.f32.mrb[0].mxu0
    %v3276 = vadd.f32 %v3083, %v3275
    %3277 = vmatprep.mubr.bf16.mxu0 0
    %3278 = vmatmul.mubr.bf16.gmra.mrb[0].mxu0 %v2243
    %v3279 = vpop.f32.mrb[0].mxu0
    %v3280 = vadd.f32 %v3087, %v3279
    %v3281 = vpop.f32.mrb[0].mxu0
    %v3282 = vadd.f32 %v3089, %v3281
    %v3283 = vpop.f32.mrb[0].mxu0
    %v3284 = vadd.f32 %v3091, %v3283
    %v3285 = vpop.f32.mrb[0].mxu0
    %v3286 = vadd.f32 %v3093, %v3285
    %3287 = vmatprep.mubr.bf16.mxu0 0
    %3288 = vmatmul.mubr.bf16.gmra.mrb[0].mxu0 %v2244
    %v3289 = vpop.f32.mrb[0].mxu0
    %v3290 = vadd.f32 %v3097, %v3289
    %v3291 = vpop.f32.mrb[0].mxu0
    %v3292 = vadd.f32 %v3099, %v3291
    %v3293 = vpop.f32.mrb[0].mxu0
    %v3294 = vadd.f32 %v3101, %v3293
    %v3295 = vpop.f32.mrb[0].mxu0
    %v3296 = vadd.f32 %v3103, %v3295
    %3297 = vmatprep.mubr.bf16.mxu0 0
    %3298 = vmatmul.mubr.bf16.gmra.mrb[0].mxu0 %v2245
    %v3299 = vpop.f32.mrb[0].mxu0
    %v3300 = vadd.f32 %v3107, %v3299
    %v3301 = vpop.f32.mrb[0].mxu0
    %v3302 = vadd.f32 %v3109, %v3301
    %v3303 = vpop.f32.mrb[0].mxu0
    %v3304 = vadd.f32 %v3111, %v3303
    %v3305 = vpop.f32.mrb[0].mxu0
    %v3306 = vadd.f32 %v3113, %v3305
    %3307 = vmatprep.mubr.bf16.mxu0 0
    %3308 = vmatmul.mubr.bf16.gmra.mrb[0].mxu0 %v2246
    %v3309 = vpop.f32.mrb[0].mxu0
    %v3310 = vadd.f32 %v3117, %v3309
    %v3311 = vpop.f32.mrb[0].mxu0
    %v3312 = vadd.f32 %v3119, %v3311
    %v3313 = vpop.f32.mrb[0].mxu0
    %v3314 = vadd.f32 %v3121, %v3313
    %v3315 = vpop.f32.mrb[0].mxu0
    %v3316 = vadd.f32 %v3123, %v3315
    %3317 = vdwg.mxu0
    %v3318 = vmax.f32 %v3160, 0.0
    %v3319 = vmax.f32 %v3162, 0.0
    %v3320 = vmax.f32 %v3164, 0.0
    %v3321 = vmax.f32 %v3166, 0.0
    %v3322 = vmax.f32 %v3170, 0.0
    %v3323 = vmax.f32 %v3172, 0.0
    %v3324 = vmax.f32 %v3174, 0.0
    %v3325 = vmax.f32 %v3176, 0.0
    %v3326 = vmax.f32 %v3180, 0.0
    %v3327 = vmax.f32 %v3182, 0.0
    %v3328 = vmax.f32 %v3184, 0.0
    %v3329 = vmax.f32 %v3186, 0.0
    %v3330 = vmax.f32 %v3190, 0.0
    %v3331 = vmax.f32 %v3192, 0.0
    %v3332 = vmax.f32 %v3194, 0.0
    %v3333 = vmax.f32 %v3196, 0.0
    %v3334 = vmax.f32 %v3200, 0.0
    %v3335 = vmax.f32 %v3202, 0.0
    %v3336 = vmax.f32 %v3204, 0.0
    %v3337 = vmax.f32 %v3206, 0.0
    %v3338 = vmax.f32 %v3210, 0.0
    %v3339 = vmax.f32 %v3212, 0.0
    %v3340 = vmax.f32 %v3214, 0.0
    %v3341 = vmax.f32 %v3216, 0.0
    %v3342 = vmax.f32 %v3220, 0.0
    %v3343 = vmax.f32 %v3222, 0.0
    %v3344 = vmax.f32 %v3224, 0.0
    %v3345 = vmax.f32 %v3226, 0.0
    %v3346 = vmax.f32 %v3230, 0.0
    %v3347 = vmax.f32 %v3232, 0.0
    %v3348 = vmax.f32 %v3234, 0.0
    %v3349 = vmax.f32 %v3236, 0.0
    %v3350 = vmax.f32 %v3240, 0.0
    %v3351 = vmax.f32 %v3242, 0.0
    %v3352 = vmax.f32 %v3244, 0.0
    %v3353 = vmax.f32 %v3246, 0.0
    %v3354 = vmax.f32 %v3250, 0.0
    %v3355 = vmax.f32 %v3252, 0.0
    %v3356 = vmax.f32 %v3254, 0.0
    %v3357 = vmax.f32 %v3256, 0.0
    %v3358 = vmax.f32 %v3260, 0.0
    %v3359 = vmax.f32 %v3262, 0.0
    %v3360 = vmax.f32 %v3264, 0.0
    %v3361 = vmax.f32 %v3266, 0.0
    %v3362 = vmax.f32 %v3270, 0.0
    %v3363 = vmax.f32 %v3272, 0.0
    %v3364 = vmax.f32 %v3274, 0.0
    %v3365 = vmax.f32 %v3276, 0.0
    %v3366 = vmax.f32 %v3280, 0.0
    %v3367 = vmax.f32 %v3282, 0.0
    %v3368 = vmax.f32 %v3284, 0.0
    %v3369 = vmax.f32 %v3286, 0.0
    %v3370 = vmax.f32 %v3290, 0.0
    %v3371 = vmax.f32 %v3292, 0.0
    %v3372 = vmax.f32 %v3294, 0.0
    %v3373 = vmax.f32 %v3296, 0.0
    %v3374 = vmax.f32 %v3300, 0.0
    %v3375 = vmax.f32 %v3302, 0.0
    %v3376 = vmax.f32 %v3304, 0.0
    %v3377 = vmax.f32 %v3306, 0.0
    %v3378 = vmax.f32 %v3310, 0.0
    %v3379 = vmax.f32 %v3312, 0.0
    %v3380 = vmax.f32 %v3314, 0.0
    %v3381 = vmax.f32 %v3316, 0.0
    %v3446 = vrot.slane %v3318, 7
    %v3447 = vrot.slane %v3319, 7
    %v3448 = vrot.slane %v3320, 7
    %v3449 = vsel %vm1220, %v3446, %v3448
    %v3450 = vrot.slane %v3321, 7
    %v3451 = vsel %vm1220, %v3447, %v3450
    %v3452 = vrot.slane %v3322, 7
    %v3453 = vsel %vm1220, %v3448, %v3452
    %v3454 = vrot.slane %v3323, 7
    %v3455 = vsel %vm1220, %v3450, %v3454
    %v3456 = vrot.slane %v3324, 7
    %v3457 = vsel %vm1220, %v3452, %v3456
    %v3458 = vrot.slane %v3325, 7
    %v3459 = vsel %vm1220, %v3454, %v3458
    %v3460 = vrot.slane %v3326, 7
    %v3461 = vsel %vm1220, %v3456, %v3460
    %v3462 = vrot.slane %v3327, 7
    %v3463 = vsel %vm1220, %v3458, %v3462
    %v3464 = vrot.slane %v3328, 7
    %v3465 = vsel %vm1220, %v3460, %v3464
    %v3466 = vrot.slane %v3329, 7
    %v3467 = vsel %vm1220, %v3462, %v3466
    %v3468 = vrot.slane %v3330, 7
    %v3469 = vsel %vm1220, %v3464, %v3468
    %v3470 = vrot.slane %v3331, 7
    %v3471 = vsel %vm1220, %v3466, %v3470
    %v3472 = vrot.slane %v3332, 7
    %v3473 = vsel %vm1220, %v3468, %v3472
    %v3474 = vrot.slane %v3333, 7
    %v3475 = vsel %vm1220, %v3470, %v3474
    %v3476 = vrot.slane %v3334, 7
    %v3477 = vsel %vm1220, %v3472, %v3476
    %v3478 = vrot.slane %v3335, 7
    %v3479 = vsel %vm1220, %v3474, %v3478
    %v3480 = vrot.slane %v3336, 7
    %v3481 = vsel %vm1220, %v3476, %v3480
    %v3482 = vrot.slane %v3337, 7
    %v3483 = vsel %vm1220, %v3478, %v3482
    %v3484 = vrot.slane %v3338, 7
    %v3485 = vsel %vm1220, %v3480, %v3484
    %v3486 = vrot.slane %v3339, 7
    %v3487 = vsel %vm1220, %v3482, %v3486
    %v3488 = vrot.slane %v3340, 7
    %v3489 = vsel %vm1220, %v3484, %v3488
    %v3490 = vrot.slane %v3341, 7
    %v3491 = vsel %vm1220, %v3486, %v3490
    %v3492 = vrot.slane %v3342, 7
    %v3493 = vsel %vm1220, %v3488, %v3492
    %v3494 = vrot.slane %v3343, 7
    %v3495 = vsel %vm1220, %v3490, %v3494
    %v3496 = vrot.slane %v3344, 7
    %v3497 = vsel %vm1220, %v3492, %v3496
    %v3498 = vrot.slane %v3345, 7
    %v3499 = vsel %vm1220, %v3494, %v3498
    %v3500 = vrot.slane %v3346, 7
    %v3501 = vsel %vm1220, %v3496, %v3500
    %v3502 = vrot.slane %v3347, 7
    %v3503 = vsel %vm1220, %v3498, %v3502
    %v3504 = vrot.slane %v3348, 7
    %v3505 = vsel %vm1220, %v3500, %v3504
    %v3506 = vrot.slane %v3349, 7
    %v3507 = vsel %vm1220, %v3502, %v3506
    %v3508 = vrot.slane %v3350, 7
    %v3509 = vsel %vm1220, %v3504, %v3508
    %v3510 = vrot.slane %v3351, 7
    %v3511 = vsel %vm1220, %v3506, %v3510
    %v3512 = vrot.slane %v3352, 7
    %v3513 = vsel %vm1220, %v3508, %v3512
    %v3514 = vrot.slane %v3353, 7
    %v3515 = vsel %vm1220, %v3510, %v3514
    %v3516 = vrot.slane %v3354, 7
    %v3517 = vsel %vm1220, %v3512, %v3516
    %v3518 = vrot.slane %v3355, 7
    %v3519 = vsel %vm1220, %v3514, %v3518
    %v3520 = vrot.slane %v3356, 7
    %v3521 = vsel %vm1220, %v3516, %v3520
    %v3522 = vrot.slane %v3357, 7
    %v3523 = vsel %vm1220, %v3518, %v3522
    %v3524 = vrot.slane %v3358, 7
    %v3525 = vsel %vm1220, %v3520, %v3524
    %v3526 = vrot.slane %v3359, 7
    %v3527 = vsel %vm1220, %v3522, %v3526
    %v3528 = vrot.slane %v3360, 7
    %v3529 = vsel %vm1220, %v3524, %v3528
    %v3530 = vrot.slane %v3361, 7
    %v3531 = vsel %vm1220, %v3526, %v3530
    %v3532 = vrot.slane %v3362, 7
    %v3533 = vsel %vm1220, %v3528, %v3532
    %v3534 = vrot.slane %v3363, 7
    %v3535 = vsel %vm1220, %v3530, %v3534
    %v3536 = vrot.slane %v3364, 7
    %v3537 = vsel %vm1220, %v3532, %v3536
    %v3538 = vrot.slane %v3365, 7
    %v3539 = vsel %vm1220, %v3534, %v3538
    %v3540 = vrot.slane %v3366, 7
    %v3541 = vsel %vm1220, %v3536, %v3540
    %v3542 = vrot.slane %v3367, 7
    %v3543 = vsel %vm1220, %v3538, %v3542
    %v3544 = vrot.slane %v3368, 7
    %v3545 = vsel %vm1220, %v3540, %v3544
    %v3546 = vrot.slane %v3369, 7
    %v3547 = vsel %vm1220, %v3542, %v3546
    %v3548 = vrot.slane %v3370, 7
    %v3549 = vsel %vm1220, %v3544, %v3548
    %v3550 = vrot.slane %v3371, 7
    %v3551 = vsel %vm1220, %v3546, %v3550
    %v3552 = vrot.slane %v3372, 7
    %v3553 = vsel %vm1220, %v3548, %v3552
    %v3554 = vrot.slane %v3373, 7
    %v3555 = vsel %vm1220, %v3550, %v3554
    %v3556 = vrot.slane %v3374, 7
    %v3557 = vsel %vm1220, %v3552, %v3556
    %v3558 = vrot.slane %v3375, 7
    %v3559 = vsel %vm1220, %v3554, %v3558
    %v3560 = vrot.slane %v3376, 7
    %v3561 = vsel %vm1220, %v3556, %v3560
    %v3562 = vrot.slane %v3377, 7
    %v3563 = vsel %vm1220, %v3558, %v3562
    %v3564 = vrot.slane %v3378, 7
    %v3565 = vsel %vm1220, %v3560, %v3564
    %v3566 = vrot.slane %v3379, 7
    %v3567 = vsel %vm1220, %v3562, %v3566
    %v3568 = vrot.slane %v3380, 7
    %v3569 = vsel %vm1220, %v3564, %v3568
    %v3570 = vrot.slane %v3381, 7
    %v3571 = vsel %vm1220, %v3566, %v3570
    %v3636 = vsel %vm1220, 0.0, %v3446
    %v3637 = vsel %vm1220, 0.0, %v3447
    %v3638 = vsel %vm1477, %v3636, 0.0
    %v3639 = vsel %vm1477, %v3637, 0.0
    %v3640 = vsel %vm1478, %v3449, 0.0
    %v3641 = vsel %vm1478, %v3451, 0.0
    %v3642 = vsel %vm1479, %v3453, 0.0
    %v3643 = vsel %vm1479, %v3455, 0.0
    %v3644 = vsel %vm1480, %v3457, 0.0
    %v3645 = vsel %vm1480, %v3459, 0.0
    %v3646 = vsel %vm1481, %v3461, 0.0
    %v3647 = vsel %vm1481, %v3463, 0.0
    %v3648 = vsel %vm1482, %v3465, 0.0
    %v3649 = vsel %vm1482, %v3467, 0.0
    %v3650 = vsel %vm1483, %v3469, 0.0
    %v3651 = vsel %vm1483, %v3471, 0.0
    %v3652 = vsel %vm1484, %v3473, 0.0
    %v3653 = vsel %vm1484, %v3475, 0.0
    %v3654 = vsel %vm1485, %v3477, 0.0
    %v3655 = vsel %vm1485, %v3479, 0.0
    %v3656 = vsel %vm1486, %v3481, 0.0
    %v3657 = vsel %vm1486, %v3483, 0.0
    %v3658 = vsel %vm1487, %v3485, 0.0
    %v3659 = vsel %vm1487, %v3487, 0.0
    %v3660 = vsel %vm1488, %v3489, 0.0
    %v3661 = vsel %vm1488, %v3491, 0.0
    %v3662 = vsel %vm1489, %v3493, 0.0
    %v3663 = vsel %vm1489, %v3495, 0.0
    %v3664 = vsel %vm1490, %v3497, 0.0
    %v3665 = vsel %vm1490, %v3499, 0.0
    %v3666 = vsel %vm1491, %v3501, 0.0
    %v3667 = vsel %vm1491, %v3503, 0.0
    %v3668 = vsel %vm1492, %v3505, 0.0
    %v3669 = vsel %vm1492, %v3507, 0.0
    %v3670 = vsel %vm1493, %v3509, 0.0
    %v3671 = vsel %vm1493, %v3511, 0.0
    %v3672 = vsel %vm1494, %v3513, 0.0
    %v3673 = vsel %vm1494, %v3515, 0.0
    %v3674 = vsel %vm1495, %v3517, 0.0
    %v3675 = vsel %vm1495, %v3519, 0.0
    %v3676 = vsel %vm1496, %v3521, 0.0
    %v3677 = vsel %vm1496, %v3523, 0.0
    %v3678 = vsel %vm1497, %v3525, 0.0
    %v3679 = vsel %vm1497, %v3527, 0.0
    %v3680 = vsel %vm1498, %v3529, 0.0
    %v3681 = vsel %vm1498, %v3531, 0.0
    %v3682 = vsel %vm1499, %v3533, 0.0
    %v3683 = vsel %vm1499, %v3535, 0.0
    %v3684 = vsel %vm1500, %v3537, 0.0
    %v3685 = vsel %vm1500, %v3539, 0.0
    %v3686 = vsel %vm1501, %v3541, 0.0
    %v3687 = vsel %vm1501, %v3543, 0.0
    %v3688 = vsel %vm1502, %v3545, 0.0
    %v3689 = vsel %vm1502, %v3547, 0.0
    %v3690 = vsel %vm1503, %v3549, 0.0
    %v3691 = vsel %vm1503, %v3551, 0.0
    %v3692 = vsel %vm1504, %v3553, 0.0
    %v3693 = vsel %vm1504, %v3555, 0.0
    %v3694 = vsel %vm1505, %v3557, 0.0
    %v3695 = vsel %vm1505, %v3559, 0.0
    %v3696 = vsel %vm1506, %v3561, 0.0
    %v3697 = vsel %vm1506, %v3563, 0.0
    %v3698 = vsel %vm1507, %v3565, 0.0
    %v3699 = vsel %vm1507, %v3567, 0.0
    %v3700 = vsel %vm1508, %v3569, 0.0
    %v3701 = vsel %vm1508, %v3571, 0.0
    %v3702 = vpack.c.bf16 %v3640, %v3638
    %v3703 = vpack.c.bf16 %v3641, %v3639
    %v3704 = vpack.c.bf16 %v3644, %v3642
    %v3705 = vpack.c.bf16 %v3645, %v3643
    %v3706 = vpack.c.bf16 %v3648, %v3646
    %v3707 = vpack.c.bf16 %v3649, %v3647
    %v3708 = vpack.c.bf16 %v3652, %v3650
    %v3709 = vpack.c.bf16 %v3653, %v3651
    %v3710 = vpack.c.bf16 %v3656, %v3654
    %v3711 = vpack.c.bf16 %v3657, %v3655
    %v3712 = vpack.c.bf16 %v3660, %v3658
    %v3713 = vpack.c.bf16 %v3661, %v3659
    %v3714 = vpack.c.bf16 %v3664, %v3662
    %v3715 = vpack.c.bf16 %v3665, %v3663
    %v3716 = vpack.c.bf16 %v3668, %v3666
    %v3717 = vpack.c.bf16 %v3669, %v3667
    %v3718 = vpack.c.bf16 %v3672, %v3670
    %v3719 = vpack.c.bf16 %v3673, %v3671
    %v3720 = vpack.c.bf16 %v3676, %v3674
    %v3721 = vpack.c.bf16 %v3677, %v3675
    %v3722 = vpack.c.bf16 %v3680, %v3678
    %v3723 = vpack.c.bf16 %v3681, %v3679
    %v3724 = vpack.c.bf16 %v3684, %v3682
    %v3725 = vpack.c.bf16 %v3685, %v3683
    %v3726 = vpack.c.bf16 %v3688, %v3686
    %v3727 = vpack.c.bf16 %v3689, %v3687
    %v3728 = vpack.c.bf16 %v3692, %v3690
    %v3729 = vpack.c.bf16 %v3693, %v3691
    %v3730 = vpack.c.bf16 %v3696, %v3694
    %v3731 = vpack.c.bf16 %v3697, %v3695
    %v3732 = vpack.c.bf16 %v3700, %v3698
    %v3733 = vpack.c.bf16 %v3701, %v3699
    %v3734 = vpack.c.bf16 %v3320, %v3318
    %v3735 = vpack.c.bf16 %v3321, %v3319
    %v3736 = vpack.c.bf16 %v3324, %v3322
    %v3737 = vpack.c.bf16 %v3325, %v3323
    %v3738 = vpack.c.bf16 %v3328, %v3326
    %v3739 = vpack.c.bf16 %v3329, %v3327
    %v3740 = vpack.c.bf16 %v3332, %v3330
    %v3741 = vpack.c.bf16 %v3333, %v3331
    %v3742 = vpack.c.bf16 %v3336, %v3334
    %v3743 = vpack.c.bf16 %v3337, %v3335
    %v3744 = vpack.c.bf16 %v3340, %v3338
    %v3745 = vpack.c.bf16 %v3341, %v3339
    %v3746 = vpack.c.bf16 %v3344, %v3342
    %v3747 = vpack.c.bf16 %v3345, %v3343
    %v3748 = vpack.c.bf16 %v3348, %v3346
    %v3749 = vpack.c.bf16 %v3349, %v3347
    %v3750 = vpack.c.bf16 %v3352, %v3350
    %v3751 = vpack.c.bf16 %v3353, %v3351
    %v3752 = vpack.c.bf16 %v3356, %v3354
    %v3753 = vpack.c.bf16 %v3357, %v3355
    %v3754 = vpack.c.bf16 %v3360, %v3358
    %v3755 = vpack.c.bf16 %v3361, %v3359
    %v3756 = vpack.c.bf16 %v3364, %v3362
    %v3757 = vpack.c.bf16 %v3365, %v3363
    %v3758 = vpack.c.bf16 %v3368, %v3366
    %v3759 = vpack.c.bf16 %v3369, %v3367
    %v3760 = vpack.c.bf16 %v3372, %v3370
    %v3761 = vpack.c.bf16 %v3373, %v3371
    %v3762 = vpack.c.bf16 %v3376, %v3374
    %v3763 = vpack.c.bf16 %v3377, %v3375
    %v3764 = vpack.c.bf16 %v3380, %v3378
    %v3765 = vpack.c.bf16 %v3381, %v3379
    %v3766 = vrot.slane %v3318, 1
    %v3767 = vrot.slane %v3320, 1
    %v3768 = vsel %vm1573, %v3766, %v3767
    %v3769 = vrot.slane %v3319, 1
    %v3770 = vrot.slane %v3321, 1
    %v3771 = vsel %vm1573, %v3769, %v3770
    %v3772 = vrot.slane %v3322, 1
    %v3773 = vsel %vm1573, %v3767, %v3772
    %v3774 = vrot.slane %v3323, 1
    %v3775 = vsel %vm1573, %v3770, %v3774
    %v3776 = vrot.slane %v3324, 1
    %v3777 = vsel %vm1573, %v3772, %v3776
    %v3778 = vrot.slane %v3325, 1
    %v3779 = vsel %vm1573, %v3774, %v3778
    %v3780 = vrot.slane %v3326, 1
    %v3781 = vsel %vm1573, %v3776, %v3780
    %v3782 = vrot.slane %v3327, 1
    %v3783 = vsel %vm1573, %v3778, %v3782
    %v3784 = vrot.slane %v3328, 1
    %v3785 = vsel %vm1573, %v3780, %v3784
    %v3786 = vrot.slane %v3329, 1
    %v3787 = vsel %vm1573, %v3782, %v3786
    %v3788 = vrot.slane %v3330, 1
    %v3789 = vsel %vm1573, %v3784, %v3788
    %v3790 = vrot.slane %v3331, 1
    %v3791 = vsel %vm1573, %v3786, %v3790
    %v3792 = vrot.slane %v3332, 1
    %v3793 = vsel %vm1573, %v3788, %v3792
    %v3794 = vrot.slane %v3333, 1
    %v3795 = vsel %vm1573, %v3790, %v3794
    %v3796 = vrot.slane %v3334, 1
    %v3797 = vsel %vm1573, %v3792, %v3796
    %v3798 = vrot.slane %v3335, 1
    %v3799 = vsel %vm1573, %v3794, %v3798
    %v3800 = vrot.slane %v3336, 1
    %v3801 = vsel %vm1573, %v3796, %v3800
    %v3802 = vrot.slane %v3337, 1
    %v3803 = vsel %vm1573, %v3798, %v3802
    %v3804 = vrot.slane %v3338, 1
    %v3805 = vsel %vm1573, %v3800, %v3804
    %v3806 = vrot.slane %v3339, 1
    %v3807 = vsel %vm1573, %v3802, %v3806
    %v3808 = vrot.slane %v3340, 1
    %v3809 = vsel %vm1573, %v3804, %v3808
    %v3810 = vrot.slane %v3341, 1
    %v3811 = vsel %vm1573, %v3806, %v3810
    %v3812 = vrot.slane %v3342, 1
    %v3813 = vsel %vm1573, %v3808, %v3812
    %v3814 = vrot.slane %v3343, 1
    %v3815 = vsel %vm1573, %v3810, %v3814
    %v3816 = vrot.slane %v3344, 1
    %v3817 = vsel %vm1573, %v3812, %v3816
    %v3818 = vrot.slane %v3345, 1
    %v3819 = vsel %vm1573, %v3814, %v3818
    %v3820 = vrot.slane %v3346, 1
    %v3821 = vsel %vm1573, %v3816, %v3820
    %v3822 = vrot.slane %v3347, 1
    %v3823 = vsel %vm1573, %v3818, %v3822
    %v3824 = vrot.slane %v3348, 1
    %v3825 = vsel %vm1573, %v3820, %v3824
    %v3826 = vrot.slane %v3349, 1
    %v3827 = vsel %vm1573, %v3822, %v3826
    %v3828 = vrot.slane %v3350, 1
    %v3829 = vsel %vm1573, %v3824, %v3828
    %v3830 = vrot.slane %v3351, 1
    %v3831 = vsel %vm1573, %v3826, %v3830
    %v3832 = vrot.slane %v3352, 1
    %v3833 = vsel %vm1573, %v3828, %v3832
    %v3834 = vrot.slane %v3353, 1
    %v3835 = vsel %vm1573, %v3830, %v3834
    %v3836 = vrot.slane %v3354, 1
    %v3837 = vsel %vm1573, %v3832, %v3836
    %v3838 = vrot.slane %v3355, 1
    %v3839 = vsel %vm1573, %v3834, %v3838
    %v3840 = vrot.slane %v3356, 1
    %v3841 = vsel %vm1573, %v3836, %v3840
    %v3842 = vrot.slane %v3357, 1
    %v3843 = vsel %vm1573, %v3838, %v3842
    %v3844 = vrot.slane %v3358, 1
    %v3845 = vsel %vm1573, %v3840, %v3844
    %v3846 = vrot.slane %v3359, 1
    %v3847 = vsel %vm1573, %v3842, %v3846
    %v3848 = vrot.slane %v3360, 1
    %v3849 = vsel %vm1573, %v3844, %v3848
    %v3850 = vrot.slane %v3361, 1
    %v3851 = vsel %vm1573, %v3846, %v3850
    %v3852 = vrot.slane %v3362, 1
    %v3853 = vsel %vm1573, %v3848, %v3852
    %v3854 = vrot.slane %v3363, 1
    %v3855 = vsel %vm1573, %v3850, %v3854
    %v3856 = vrot.slane %v3364, 1
    %v3857 = vsel %vm1573, %v3852, %v3856
    %v3858 = vrot.slane %v3365, 1
    %v3859 = vsel %vm1573, %v3854, %v3858
    %v3860 = vrot.slane %v3366, 1
    %v3861 = vsel %vm1573, %v3856, %v3860
    %v3862 = vrot.slane %v3367, 1
    %v3863 = vsel %vm1573, %v3858, %v3862
    %v3864 = vrot.slane %v3368, 1
    %v3865 = vsel %vm1573, %v3860, %v3864
    %v3866 = vrot.slane %v3369, 1
    %v3867 = vsel %vm1573, %v3862, %v3866
    %v3868 = vrot.slane %v3370, 1
    %v3869 = vsel %vm1573, %v3864, %v3868
    %v3870 = vrot.slane %v3371, 1
    %v3871 = vsel %vm1573, %v3866, %v3870
    %v3872 = vrot.slane %v3372, 1
    %v3873 = vsel %vm1573, %v3868, %v3872
    %v3874 = vrot.slane %v3373, 1
    %v3875 = vsel %vm1573, %v3870, %v3874
    %v3876 = vrot.slane %v3374, 1
    %v3877 = vsel %vm1573, %v3872, %v3876
    %v3878 = vrot.slane %v3375, 1
    %v3879 = vsel %vm1573, %v3874, %v3878
    %v3880 = vrot.slane %v3376, 1
    %v3881 = vsel %vm1573, %v3876, %v3880
    %v3882 = vrot.slane %v3377, 1
    %v3883 = vsel %vm1573, %v3878, %v3882
    %v3884 = vrot.slane %v3378, 1
    %v3885 = vsel %vm1573, %v3880, %v3884
    %v3886 = vrot.slane %v3379, 1
    %v3887 = vsel %vm1573, %v3882, %v3886
    %v3888 = vrot.slane %v3380, 1
    %v3889 = vsel %vm1573, %v3884, %v3888
    %v3890 = vrot.slane %v3381, 1
    %v3891 = vsel %vm1573, %v3886, %v3890
    %v3956 = vsel %vm1573, %v3888, 0.0
    %v3957 = vsel %vm1573, %v3890, 0.0
    %v3958 = vsel %vm1830, %v3768, 0.0
    %v3959 = vsel %vm1830, %v3771, 0.0
    %v3960 = vsel %vm1831, %v3773, 0.0
    %v3961 = vsel %vm1831, %v3775, 0.0
    %v3962 = vsel %vm1832, %v3777, 0.0
    %v3963 = vsel %vm1832, %v3779, 0.0
    %v3964 = vsel %vm1833, %v3781, 0.0
    %v3965 = vsel %vm1833, %v3783, 0.0
    %v3966 = vsel %vm1834, %v3785, 0.0
    %v3967 = vsel %vm1834, %v3787, 0.0
    %v3968 = vsel %vm1835, %v3789, 0.0
    %v3969 = vsel %vm1835, %v3791, 0.0
    %v3970 = vsel %vm1836, %v3793, 0.0
    %v3971 = vsel %vm1836, %v3795, 0.0
    %v3972 = vsel %vm1837, %v3797, 0.0
    %v3973 = vsel %vm1837, %v3799, 0.0
    %v3974 = vsel %vm1838, %v3801, 0.0
    %v3975 = vsel %vm1838, %v3803, 0.0
    %v3976 = vsel %vm1839, %v3805, 0.0
    %v3977 = vsel %vm1839, %v3807, 0.0
    %v3978 = vsel %vm1840, %v3809, 0.0
    %v3979 = vsel %vm1840, %v3811, 0.0
    %v3980 = vsel %vm1841, %v3813, 0.0
    %v3981 = vsel %vm1841, %v3815, 0.0
    %v3982 = vsel %vm1842, %v3817, 0.0
    %v3983 = vsel %vm1842, %v3819, 0.0
    %v3984 = vsel %vm1843, %v3821, 0.0
    %v3985 = vsel %vm1843, %v3823, 0.0
    %v3986 = vsel %vm1844, %v3825, 0.0
    %v3987 = vsel %vm1844, %v3827, 0.0
    %v3988 = vsel %vm1845, %v3829, 0.0
    %v3989 = vsel %vm1845, %v3831, 0.0
    %v3990 = vsel %vm1846, %v3833, 0.0
    %v3991 = vsel %vm1846, %v3835, 0.0
    %v3992 = vsel %vm1847, %v3837, 0.0
    %v3993 = vsel %vm1847, %v3839, 0.0
    %v3994 = vsel %vm1848, %v3841, 0.0
    %v3995 = vsel %vm1848, %v3843, 0.0
    %v3996 = vsel %vm1849, %v3845, 0.0
    %v3997 = vsel %vm1849, %v3847, 0.0
    %v3998 = vsel %vm1850, %v3849, 0.0
    %v3999 = vsel %vm1850, %v3851, 0.0
    %v4000 = vsel %vm1851, %v3853, 0.0
    %v4001 = vsel %vm1851, %v3855, 0.0
    %v4002 = vsel %vm1852, %v3857, 0.0
    %v4003 = vsel %vm1852, %v3859, 0.0
    %v4004 = vsel %vm1853, %v3861, 0.0
    %v4005 = vsel %vm1853, %v3863, 0.0
    %v4006 = vsel %vm1854, %v3865, 0.0
    %v4007 = vsel %vm1854, %v3867, 0.0
    %v4008 = vsel %vm1855, %v3869, 0.0
    %v4009 = vsel %vm1855, %v3871, 0.0
    %v4010 = vsel %vm1856, %v3873, 0.0
    %v4011 = vsel %vm1856, %v3875, 0.0
    %v4012 = vsel %vm1857, %v3877, 0.0
    %v4013 = vsel %vm1857, %v3879, 0.0
    %v4014 = vsel %vm1858, %v3881, 0.0
    %v4015 = vsel %vm1858, %v3883, 0.0
    %v4016 = vsel %vm1859, %v3885, 0.0
    %v4017 = vsel %vm1859, %v3887, 0.0
    %v4018 = vsel %vm1860, %v3889, 0.0
    %v4019 = vsel %vm1860, %v3891, 0.0
    %v4020 = vsel %vm1861, %v3956, 0.0
    %v4021 = vsel %vm1861, %v3957, 0.0
    %v4022 = vpack.c.bf16 %v3960, %v3958
    %v4023 = vpack.c.bf16 %v3961, %v3959
    %v4024 = vpack.c.bf16 %v3964, %v3962
    %v4025 = vpack.c.bf16 %v3965, %v3963
    %v4026 = vpack.c.bf16 %v3968, %v3966
    %v4027 = vpack.c.bf16 %v3969, %v3967
    %v4028 = vpack.c.bf16 %v3972, %v3970
    %v4029 = vpack.c.bf16 %v3973, %v3971
    %v4030 = vpack.c.bf16 %v3976, %v3974
    %v4031 = vpack.c.bf16 %v3977, %v3975
    %v4032 = vpack.c.bf16 %v3980, %v3978
    %v4033 = vpack.c.bf16 %v3981, %v3979
    %v4034 = vpack.c.bf16 %v3984, %v3982
    %v4035 = vpack.c.bf16 %v3985, %v3983
    %v4036 = vpack.c.bf16 %v3988, %v3986
    %v4037 = vpack.c.bf16 %v3989, %v3987
    %v4038 = vpack.c.bf16 %v3992, %v3990
    %v4039 = vpack.c.bf16 %v3993, %v3991
    %v4040 = vpack.c.bf16 %v3996, %v3994
    %v4041 = vpack.c.bf16 %v3997, %v3995
    %v4042 = vpack.c.bf16 %v4000, %v3998
    %v4043 = vpack.c.bf16 %v4001, %v3999
    %v4044 = vpack.c.bf16 %v4004, %v4002
    %v4045 = vpack.c.bf16 %v4005, %v4003
    %v4046 = vpack.c.bf16 %v4008, %v4006
    %v4047 = vpack.c.bf16 %v4009, %v4007
    %v4048 = vpack.c.bf16 %v4012, %v4010
    %v4049 = vpack.c.bf16 %v4013, %v4011
    %v4050 = vpack.c.bf16 %v4016, %v4014
    %v4051 = vpack.c.bf16 %v4017, %v4015
    %v4052 = vpack.c.bf16 %v4020, %v4018
    %v4053 = vpack.c.bf16 %v4021, %v4019
    %v4054 = vld [vmem:[#allocation5] sm:$0xf]
    %v4055 = vld [vmem:[#allocation5 + $0x4] sm:$0xf]
    %v4056 = vld [vmem:[#allocation5 + $0x8] sm:$0xf]
    %v4057 = vld [vmem:[#allocation5 + $0xc] sm:$0xf]
    %v4058 = vld [vmem:[#allocation5 + $0x10] sm:$0xf]
    %v4059 = vld [vmem:[#allocation5 + $0x14] sm:$0xf]
    %v4060 = vld [vmem:[#allocation5 + $0x18] sm:$0xf]
    %v4061 = vld [vmem:[#allocation5 + $0x1c] sm:$0xf]
    %v4062 = vld [vmem:[#allocation5 + $0x20] sm:$0xf]
    %v4063 = vld [vmem:[#allocation5 + $0x24] sm:$0xf]
    %v4064 = vld [vmem:[#allocation5 + $0x28] sm:$0xf]
    %v4065 = vld [vmem:[#allocation5 + $0x2c] sm:$0xf]
    %v4066 = vld [vmem:[#allocation5 + $0x30] sm:$0xf]
    %v4067 = vld [vmem:[#allocation5 + $0x34] sm:$0xf]
    %v4068 = vld [vmem:[#allocation5 + $0x38] sm:$0xf]
    %v4069 = vld [vmem:[#allocation5 + $0x3c] sm:$0xf]
    %v4070 = vld [vmem:[#allocation5 + $0x40] sm:$0xf]
    %v4071 = vld [vmem:[#allocation5 + $0x44] sm:$0xf]
    %v4072 = vld [vmem:[#allocation5 + $0x48] sm:$0xf]
    %v4073 = vld [vmem:[#allocation5 + $0x4c] sm:$0xf]
    %v4074 = vld [vmem:[#allocation5 + $0x50] sm:$0xf]
    %v4075 = vld [vmem:[#allocation5 + $0x54] sm:$0xf]
    %v4076 = vld [vmem:[#allocation5 + $0x58] sm:$0xf]
    %v4077 = vld [vmem:[#allocation5 + $0x5c] sm:$0xf]
    %v4078 = vld [vmem:[#allocation5 + $0x60] sm:$0xf]
    %v4079 = vld [vmem:[#allocation5 + $0x64] sm:$0xf]
    %v4080 = vld [vmem:[#allocation5 + $0x68] sm:$0xf]
    %v4081 = vld [vmem:[#allocation5 + $0x6c] sm:$0xf]
    %v4082 = vld [vmem:[#allocation5 + $0x70] sm:$0xf]
    %v4083 = vld [vmem:[#allocation5 + $0x74] sm:$0xf]
    %v4084 = vld [vmem:[#allocation5 + $0x78] sm:$0xf]
    %v4085 = vld [vmem:[#allocation5 + $0x7c] sm:$0xf]
    %v4086 = vld [vmem:[#allocation5 + $0x80] sm:$0xf]
    %v4087 = vld [vmem:[#allocation5 + $0x84] sm:$0xf]
    %v4088 = vld [vmem:[#allocation5 + $0x88] sm:$0xf]
    %v4089 = vld [vmem:[#allocation5 + $0x8c] sm:$0xf]
    %v4090 = vld [vmem:[#allocation5 + $0x90] sm:$0xf]
    %v4091 = vld [vmem:[#allocation5 + $0x94] sm:$0xf]
    %v4092 = vld [vmem:[#allocation5 + $0x98] sm:$0xf]
    %v4093 = vld [vmem:[#allocation5 + $0x9c] sm:$0xf]
    %v4094 = vld [vmem:[#allocation5 + $0xa0] sm:$0xf]
    %v4095 = vld [vmem:[#allocation5 + $0xa4] sm:$0xf]
    %v4096 = vld [vmem:[#allocation5 + $0xa8] sm:$0xf]
    %v4097 = vld [vmem:[#allocation5 + $0xac] sm:$0xf]
    %v4098 = vld [vmem:[#allocation5 + $0xb0] sm:$0xf]
    %v4099 = vld [vmem:[#allocation5 + $0xb4] sm:$0xf]
    %v4100 = vld [vmem:[#allocation5 + $0xb8] sm:$0xf]
    %v4101 = vld [vmem:[#allocation5 + $0xbc] sm:$0xf]
    %v4102 = vld [vmem:[#allocation5 + $0xc0] sm:$0xf]
    %v4103 = vld [vmem:[#allocation5 + $0xc4] sm:$0xf]
    %v4104 = vld [vmem:[#allocation5 + $0xc8] sm:$0xf]
    %v4105 = vld [vmem:[#allocation5 + $0xcc] sm:$0xf]
    %v4106 = vld [vmem:[#allocation5 + $0xd0] sm:$0xf]
    %v4107 = vld [vmem:[#allocation5 + $0xd4] sm:$0xf]
    %v4108 = vld [vmem:[#allocation5 + $0xd8] sm:$0xf]
    %v4109 = vld [vmem:[#allocation5 + $0xdc] sm:$0xf]
    %v4110 = vld [vmem:[#allocation5 + $0xe0] sm:$0xf]
    %v4111 = vld [vmem:[#allocation5 + $0xe4] sm:$0xf]
    %v4112 = vld [vmem:[#allocation5 + $0xe8] sm:$0xf]
    %v4113 = vld [vmem:[#allocation5 + $0xec] sm:$0xf]
    %v4114 = vld [vmem:[#allocation5 + $0xf0] sm:$0xf]
    %v4115 = vld [vmem:[#allocation5 + $0xf4] sm:$0xf]
    %v4116 = vld [vmem:[#allocation5 + $0xf8] sm:$0xf]
    %v4117 = vld [vmem:[#allocation5 + $0xfc] sm:$0xf]
    %v4118 = vld [vmem:[#allocation5 + $0x100] sm:$0xf]
    %v4119 = vld [vmem:[#allocation5 + $0x104] sm:$0xf]
    %v4120 = vld [vmem:[#allocation5 + $0x108] sm:$0xf]
    %v4121 = vld [vmem:[#allocation5 + $0x10c] sm:$0xf]
    %v4122 = vld [vmem:[#allocation5 + $0x110] sm:$0xf]
    %v4123 = vld [vmem:[#allocation5 + $0x114] sm:$0xf]
    %v4124 = vld [vmem:[#allocation5 + $0x118] sm:$0xf]
    %v4125 = vld [vmem:[#allocation5 + $0x11c] sm:$0xf]
    %v4126 = vld [vmem:[#allocation5 + $0x120] sm:$0xf]
    %v4127 = vld [vmem:[#allocation5 + $0x124] sm:$0xf]
    %v4128 = vld [vmem:[#allocation5 + $0x128] sm:$0xf]
    %v4129 = vld [vmem:[#allocation5 + $0x12c] sm:$0xf]
    %v4130 = vld [vmem:[#allocation5 + $0x130] sm:$0xf]
    %v4131 = vld [vmem:[#allocation5 + $0x134] sm:$0xf]
    %v4132 = vld [vmem:[#allocation5 + $0x138] sm:$0xf]
    %v4133 = vld [vmem:[#allocation5 + $0x13c] sm:$0xf]
    %v4134 = vld [vmem:[#allocation5 + $0x140] sm:$0xf]
    %v4135 = vld [vmem:[#allocation5 + $0x144] sm:$0xf]
    %v4136 = vld [vmem:[#allocation5 + $0x148] sm:$0xf]
    %v4137 = vld [vmem:[#allocation5 + $0x14c] sm:$0xf]
    %v4138 = vld [vmem:[#allocation5 + $0x150] sm:$0xf]
    %v4139 = vld [vmem:[#allocation5 + $0x154] sm:$0xf]
    %v4140 = vld [vmem:[#allocation5 + $0x158] sm:$0xf]
    %v4141 = vld [vmem:[#allocation5 + $0x15c] sm:$0xf]
    %v4142 = vld [vmem:[#allocation5 + $0x160] sm:$0xf]
    %v4143 = vld [vmem:[#allocation5 + $0x164] sm:$0xf]
    %v4144 = vld [vmem:[#allocation5 + $0x168] sm:$0xf]
    %v4145 = vld [vmem:[#allocation5 + $0x16c] sm:$0xf]
    %v4146 = vld [vmem:[#allocation5 + $0x170] sm:$0xf]
    %v4147 = vld [vmem:[#allocation5 + $0x174] sm:$0xf]
    %v4148 = vld [vmem:[#allocation5 + $0x178] sm:$0xf]
    %v4149 = vld [vmem:[#allocation5 + $0x17c] sm:$0xf]
    %v4150 = vld [vmem:[%s7] sm:$0x1]
    %v4152 = vlaneseq
    %v4153 = vshrl.u32 %v4152, 7
    %v4154 = vsub.s32 0, %v4153
    %v4155 = vrot.slane %v4150, %v4154
    %v4253 = vunpack.c.l.b16 %v4054
    %v4254 = vunpack.c.l.b16 %v4055
    %v4255 = vunpack.c.l.b16 %v4056
    %v4256 = vunpack.c.l.b16 %v4057
    %v4257 = vunpack.c.l.b16 %v4058
    %v4258 = vunpack.c.l.b16 %v4059
    %v4259 = vunpack.c.l.b16 %v4060
    %v4260 = vunpack.c.l.b16 %v4061
    %v4261 = vunpack.c.l.b16 %v4062
    %v4262 = vunpack.c.l.b16 %v4063
    %v4263 = vunpack.c.l.b16 %v4064
    %v4264 = vunpack.c.l.b16 %v4065
    %v4265 = vunpack.c.l.b16 %v4066
    %v4266 = vunpack.c.l.b16 %v4067
    %v4267 = vunpack.c.l.b16 %v4068
    %v4268 = vunpack.c.l.b16 %v4069
    %v4269 = vunpack.c.l.b16 %v4070
    %v4270 = vunpack.c.l.b16 %v4071
    %v4271 = vunpack.c.l.b16 %v4072
    %v4272 = vunpack.c.l.b16 %v4073
    %v4273 = vunpack.c.l.b16 %v4074
    %v4274 = vunpack.c.l.b16 %v4075
    %v4275 = vunpack.c.l.b16 %v4076
    %v4276 = vunpack.c.l.b16 %v4077
    %v4277 = vunpack.c.l.b16 %v4078
    %v4278 = vunpack.c.l.b16 %v4079
    %v4279 = vunpack.c.l.b16 %v4080
    %v4280 = vunpack.c.l.b16 %v4081
    %v4281 = vunpack.c.l.b16 %v4082
    %v4282 = vunpack.c.l.b16 %v4083
    %v4283 = vunpack.c.l.b16 %v4084
    %v4284 = vunpack.c.l.b16 %v4085
    %v4285 = vunpack.c.l.b16 %v4086
    %v4286 = vunpack.c.l.b16 %v4087
    %v4287 = vunpack.c.l.b16 %v4088
    %v4288 = vunpack.c.l.b16 %v4089
    %v4289 = vunpack.c.l.b16 %v4090
    %v4290 = vunpack.c.l.b16 %v4091
    %v4291 = vunpack.c.l.b16 %v4092
    %v4292 = vunpack.c.l.b16 %v4093
    %v4293 = vunpack.c.l.b16 %v4094
    %v4294 = vunpack.c.l.b16 %v4095
    %v4295 = vunpack.c.l.b16 %v4096
    %v4296 = vunpack.c.l.b16 %v4097
    %v4297 = vunpack.c.l.b16 %v4098
    %v4298 = vunpack.c.l.b16 %v4099
    %v4299 = vunpack.c.l.b16 %v4100
    %v4300 = vunpack.c.l.b16 %v4101
    %v4301 = vunpack.c.l.b16 %v4102
    %v4302 = vunpack.c.l.b16 %v4103
    %v4303 = vunpack.c.l.b16 %v4104
    %v4304 = vunpack.c.l.b16 %v4105
    %v4305 = vunpack.c.l.b16 %v4106
    %v4306 = vunpack.c.l.b16 %v4107
    %v4307 = vunpack.c.l.b16 %v4108
    %v4308 = vunpack.c.l.b16 %v4109
    %v4309 = vunpack.c.l.b16 %v4110
    %v4310 = vunpack.c.l.b16 %v4111
    %v4311 = vunpack.c.l.b16 %v4112
    %v4312 = vunpack.c.l.b16 %v4113
    %v4313 = vunpack.c.l.b16 %v4114
    %v4314 = vunpack.c.l.b16 %v4115
    %v4315 = vunpack.c.l.b16 %v4116
    %v4316 = vunpack.c.l.b16 %v4117
    %v4317 = vunpack.c.l.b16 %v4118
    %v4318 = vunpack.c.l.b16 %v4119
    %v4319 = vunpack.c.l.b16 %v4120
    %v4320 = vunpack.c.l.b16 %v4121
    %v4321 = vunpack.c.l.b16 %v4122
    %v4322 = vunpack.c.l.b16 %v4123
    %v4323 = vunpack.c.l.b16 %v4124
    %v4324 = vunpack.c.l.b16 %v4125
    %v4325 = vunpack.c.l.b16 %v4126
    %v4326 = vunpack.c.l.b16 %v4127
    %v4327 = vunpack.c.l.b16 %v4128
    %v4328 = vunpack.c.l.b16 %v4129
    %v4329 = vunpack.c.l.b16 %v4130
    %v4330 = vunpack.c.l.b16 %v4131
    %v4331 = vunpack.c.l.b16 %v4132
    %v4332 = vunpack.c.l.b16 %v4133
    %v4333 = vunpack.c.l.b16 %v4134
    %v4334 = vunpack.c.l.b16 %v4135
    %v4335 = vunpack.c.l.b16 %v4136
    %v4336 = vunpack.c.l.b16 %v4137
    %v4337 = vunpack.c.l.b16 %v4138
    %v4338 = vunpack.c.l.b16 %v4139
    %v4339 = vunpack.c.l.b16 %v4140
    %v4340 = vunpack.c.l.b16 %v4141
    %v4341 = vunpack.c.l.b16 %v4142
    %v4342 = vunpack.c.l.b16 %v4143
    %v4343 = vunpack.c.l.b16 %v4144
    %v4344 = vunpack.c.l.b16 %v4145
    %v4345 = vunpack.c.l.b16 %v4146
    %v4346 = vunpack.c.l.b16 %v4147
    %v4347 = vunpack.c.l.b16 %v4148
    %v4348 = vunpack.c.l.b16 %v4149
    %v4349 = vpack.c.b16 %v4254, %v4253
    %v4350 = vpack.c.b16 %v4256, %v4255
    %v4351 = vpack.c.b16 %v4258, %v4257
    %v4352 = vpack.c.b16 %v4260, %v4259
    %v4353 = vpack.c.b16 %v4262, %v4261
    %v4354 = vpack.c.b16 %v4264, %v4263
    %v4355 = vpack.c.b16 %v4266, %v4265
    %v4356 = vpack.c.b16 %v4268, %v4267
    %v4357 = vpack.c.b16 %v4270, %v4269
    %v4358 = vpack.c.b16 %v4272, %v4271
    %v4359 = vpack.c.b16 %v4274, %v4273
    %v4360 = vpack.c.b16 %v4276, %v4275
    %v4361 = vpack.c.b16 %v4278, %v4277
    %v4362 = vpack.c.b16 %v4280, %v4279
    %v4363 = vpack.c.b16 %v4282, %v4281
    %v4364 = vpack.c.b16 %v4284, %v4283
    %v4365 = vpack.c.b16 %v4286, %v4285
    %v4366 = vpack.c.b16 %v4288, %v4287
    %v4367 = vpack.c.b16 %v4290, %v4289
    %v4368 = vpack.c.b16 %v4292, %v4291
    %v4369 = vpack.c.b16 %v4294, %v4293
    %v4370 = vpack.c.b16 %v4296, %v4295
    %v4371 = vpack.c.b16 %v4298, %v4297
    %v4372 = vpack.c.b16 %v4300, %v4299
    %v4373 = vpack.c.b16 %v4302, %v4301
    %v4374 = vpack.c.b16 %v4304, %v4303
    %v4375 = vpack.c.b16 %v4306, %v4305
    %v4376 = vpack.c.b16 %v4308, %v4307
    %v4377 = vpack.c.b16 %v4310, %v4309
    %v4378 = vpack.c.b16 %v4312, %v4311
    %v4379 = vpack.c.b16 %v4314, %v4313
    %v4380 = vpack.c.b16 %v4316, %v4315
    %v4381 = vpack.c.b16 %v4318, %v4317
    %v4382 = vpack.c.b16 %v4320, %v4319
    %v4383 = vpack.c.b16 %v4322, %v4321
    %v4384 = vpack.c.b16 %v4324, %v4323
    %v4385 = vpack.c.b16 %v4326, %v4325
    %v4386 = vpack.c.b16 %v4328, %v4327
    %v4387 = vpack.c.b16 %v4330, %v4329
    %v4388 = vpack.c.b16 %v4332, %v4331
    %v4389 = vpack.c.b16 %v4334, %v4333
    %v4390 = vpack.c.b16 %v4336, %v4335
    %v4391 = vpack.c.b16 %v4338, %v4337
    %v4392 = vpack.c.b16 %v4340, %v4339
    %v4393 = vpack.c.b16 %v4342, %v4341
    %v4394 = vpack.c.b16 %v4344, %v4343
    %v4395 = vpack.c.b16 %v4346, %v4345
    %v4396 = vpack.c.b16 %v4348, %v4347
    %4445 = vmatprep.subr.bf16.mxu0 0
    %4446 = vmatpush1.bf16.msra.mxu0 %v4349
    %4447 = vmatprep.subr.bf16.mxu0 0
    %4448 = vmatpush1.bf16.msra.mxu0 %v4350
    %4449 = vmatprep.subr.bf16.mxu0 0
    %4450 = vmatpush1.bf16.msra.mxu0 %v4351
    %4451 = vmatprep.subr.bf16.mxu0 0
    %4452 = vmatpush1.bf16.msra.mxu0 %v4352
    %4453 = vmatprep.subr.bf16.mxu0 0
    %4454 = vmatpush1.bf16.msra.mxu0 %v4353
    %4455 = vmatprep.subr.bf16.mxu0 0
    %4456 = vmatpush1.bf16.msra.mxu0 %v4354
    %4457 = vmatprep.subr.bf16.mxu0 0
    %4458 = vmatpush1.bf16.msra.mxu0 %v4355
    %4459 = vmatprep.subr.bf16.mxu0 0
    %4460 = vmatpush1.bf16.msra.mxu0 %v4356
    %4461 = vmatprep.subr.bf16.mxu0 0
    %4462 = vmatpush1.bf16.msra.mxu0 %v4357
    %4463 = vmatprep.subr.bf16.mxu0 0
    %4464 = vmatpush1.bf16.msra.mxu0 %v4358
    %4465 = vmatprep.subr.bf16.mxu0 0
    %4466 = vmatpush1.bf16.msra.mxu0 %v4359
    %4467 = vmatprep.subr.bf16.mxu0 0
    %4468 = vmatpush1.bf16.msra.mxu0 %v4360
    %4469 = vmatprep.subr.bf16.mxu0 0
    %4470 = vmatpush1.bf16.msra.mxu0 %v4361
    %4471 = vmatprep.subr.bf16.mxu0 0
    %4472 = vmatpush1.bf16.msra.mxu0 %v4362
    %4473 = vmatprep.subr.bf16.mxu0 0
    %4474 = vmatpush1.bf16.msra.mxu0 %v4363
    %4475 = vmatprep.subr.bf16.mxu0 0
    %4476 = vmatpush1.bf16.msra.mxu0 %v4364
    %4477 = vmatprep.mubr.bf16.mxu0 %v3703
    %4478 = vmatmul.mubr.bf16.gmra.mrb[0].mxu0 %v3702
    %v4479 = vpop.f32.mrb[0].mxu0
    %v4480 = vadd.f32 %v4155, %v4479
    %v4481 = vpop.f32.mrb[0].mxu0
    %v4482 = vpop.f32.mrb[0].mxu0
    %v4483 = vadd.f32 %v4155, %v4482
    %v4484 = vpop.f32.mrb[0].mxu0
    %4485 = vmatprep.mubr.bf16.mxu0 %v3705
    %4486 = vmatmul.mubr.bf16.gmra.mrb[0].mxu0 %v3704
    %v4487 = vpop.f32.mrb[0].mxu0
    %v4488 = vadd.f32 %v4155, %v4487
    %v4489 = vpop.f32.mrb[0].mxu0
    %v4490 = vpop.f32.mrb[0].mxu0
    %v4491 = vadd.f32 %v4155, %v4490
    %v4492 = vpop.f32.mrb[0].mxu0
    %4493 = vmatprep.mubr.bf16.mxu0 %v3707
    %4494 = vmatmul.mubr.bf16.gmra.mrb[0].mxu0 %v3706
    %v4495 = vpop.f32.mrb[0].mxu0
    %v4496 = vadd.f32 %v4155, %v4495
    %v4497 = vpop.f32.mrb[0].mxu0
    %v4498 = vpop.f32.mrb[0].mxu0
    %v4499 = vadd.f32 %v4155, %v4498
    %v4500 = vpop.f32.mrb[0].mxu0
    %4501 = vmatprep.mubr.bf16.mxu0 %v3709
    %4502 = vmatmul.mubr.bf16.gmra.mrb[0].mxu0 %v3708
    %v4503 = vpop.f32.mrb[0].mxu0
    %v4504 = vadd.f32 %v4155, %v4503
    %v4505 = vpop.f32.mrb[0].mxu0
    %v4506 = vpop.f32.mrb[0].mxu0
    %v4507 = vadd.f32 %v4155, %v4506
    %v4508 = vpop.f32.mrb[0].mxu0
    %4509 = vmatprep.mubr.bf16.mxu0 %v3711
    %4510 = vmatmul.mubr.bf16.gmra.mrb[0].mxu0 %v3710
    %v4511 = vpop.f32.mrb[0].mxu0
    %v4512 = vadd.f32 %v4155, %v4511
    %v4513 = vpop.f32.mrb[0].mxu0
    %v4514 = vpop.f32.mrb[0].mxu0
    %v4515 = vadd.f32 %v4155, %v4514
    %v4516 = vpop.f32.mrb[0].mxu0
    %4517 = vmatprep.mubr.bf16.mxu0 %v3713
    %4518 = vmatmul.mubr.bf16.gmra.mrb[0].mxu0 %v3712
    %v4519 = vpop.f32.mrb[0].mxu0
    %v4520 = vadd.f32 %v4155, %v4519
    %v4521 = vpop.f32.mrb[0].mxu0
    %v4522 = vpop.f32.mrb[0].mxu0
    %v4523 = vadd.f32 %v4155, %v4522
    %v4524 = vpop.f32.mrb[0].mxu0
    %4525 = vmatprep.mubr.bf16.mxu0 %v3715
    %4526 = vmatmul.mubr.bf16.gmra.mrb[0].mxu0 %v3714
    %v4527 = vpop.f32.mrb[0].mxu0
    %v4528 = vadd.f32 %v4155, %v4527
    %v4529 = vpop.f32.mrb[0].mxu0
    %v4530 = vpop.f32.mrb[0].mxu0
    %v4531 = vadd.f32 %v4155, %v4530
    %v4532 = vpop.f32.mrb[0].mxu0
    %4533 = vmatprep.mubr.bf16.mxu0 %v3717
    %4534 = vmatmul.mubr.bf16.gmra.mrb[0].mxu0 %v3716
    %v4535 = vpop.f32.mrb[0].mxu0
    %v4536 = vadd.f32 %v4155, %v4535
    %v4537 = vpop.f32.mrb[0].mxu0
    %v4538 = vpop.f32.mrb[0].mxu0
    %v4539 = vadd.f32 %v4155, %v4538
    %v4540 = vpop.f32.mrb[0].mxu0
    %4541 = vmatprep.mubr.bf16.mxu0 %v3719
    %4542 = vmatmul.mubr.bf16.gmra.mrb[0].mxu0 %v3718
    %v4543 = vpop.f32.mrb[0].mxu0
    %v4544 = vadd.f32 %v4155, %v4543
    %v4545 = vpop.f32.mrb[0].mxu0
    %v4546 = vpop.f32.mrb[0].mxu0
    %v4547 = vadd.f32 %v4155, %v4546
    %v4548 = vpop.f32.mrb[0].mxu0
    %4549 = vmatprep.mubr.bf16.mxu0 %v3721
    %4550 = vmatmul.mubr.bf16.gmra.mrb[0].mxu0 %v3720
    %v4551 = vpop.f32.mrb[0].mxu0
    %v4552 = vadd.f32 %v4155, %v4551
    %v4553 = vpop.f32.mrb[0].mxu0
    %v4554 = vpop.f32.mrb[0].mxu0
    %v4555 = vadd.f32 %v4155, %v4554
    %v4556 = vpop.f32.mrb[0].mxu0
    %4557 = vmatprep.mubr.bf16.mxu0 %v3723
    %4558 = vmatmul.mubr.bf16.gmra.mrb[0].mxu0 %v3722
    %v4559 = vpop.f32.mrb[0].mxu0
    %v4560 = vadd.f32 %v4155, %v4559
    %v4561 = vpop.f32.mrb[0].mxu0
    %v4562 = vpop.f32.mrb[0].mxu0
    %v4563 = vadd.f32 %v4155, %v4562
    %v4564 = vpop.f32.mrb[0].mxu0
    %4565 = vmatprep.mubr.bf16.mxu0 %v3725
    %4566 = vmatmul.mubr.bf16.gmra.mrb[0].mxu0 %v3724
    %v4567 = vpop.f32.mrb[0].mxu0
    %v4568 = vadd.f32 %v4155, %v4567
    %v4569 = vpop.f32.mrb[0].mxu0
    %v4570 = vpop.f32.mrb[0].mxu0
    %v4571 = vadd.f32 %v4155, %v4570
    %v4572 = vpop.f32.mrb[0].mxu0
    %4573 = vmatprep.mubr.bf16.mxu0 %v3727
    %4574 = vmatmul.mubr.bf16.gmra.mrb[0].mxu0 %v3726
    %v4575 = vpop.f32.mrb[0].mxu0
    %v4576 = vadd.f32 %v4155, %v4575
    %v4577 = vpop.f32.mrb[0].mxu0
    %v4578 = vpop.f32.mrb[0].mxu0
    %v4579 = vadd.f32 %v4155, %v4578
    %v4580 = vpop.f32.mrb[0].mxu0
    %4581 = vmatprep.mubr.bf16.mxu0 %v3729
    %4582 = vmatmul.mubr.bf16.gmra.mrb[0].mxu0 %v3728
    %v4583 = vpop.f32.mrb[0].mxu0
    %v4584 = vadd.f32 %v4155, %v4583
    %v4585 = vpop.f32.mrb[0].mxu0
    %v4586 = vpop.f32.mrb[0].mxu0
    %v4587 = vadd.f32 %v4155, %v4586
    %v4588 = vpop.f32.mrb[0].mxu0
    %4589 = vmatprep.mubr.bf16.mxu0 %v3731
    %4590 = vmatmul.mubr.bf16.gmra.mrb[0].mxu0 %v3730
    %v4591 = vpop.f32.mrb[0].mxu0
    %v4592 = vadd.f32 %v4155, %v4591
    %v4593 = vpop.f32.mrb[0].mxu0
    %v4594 = vpop.f32.mrb[0].mxu0
    %v4595 = vadd.f32 %v4155, %v4594
    %v4596 = vpop.f32.mrb[0].mxu0
    %4597 = vmatprep.mubr.bf16.mxu0 %v3733
    %4598 = vmatmul.mubr.bf16.gmra.mrb[0].mxu0 %v3732
    %v4599 = vpop.f32.mrb[0].mxu0
    %v4600 = vadd.f32 %v4155, %v4599
    %v4601 = vpop.f32.mrb[0].mxu0
    %v4602 = vpop.f32.mrb[0].mxu0
    %v4603 = vadd.f32 %v4155, %v4602
    %v4604 = vpop.f32.mrb[0].mxu0
    %4605 = vdwg.mxu0
    %4606 = vmatprep.subr.bf16.mxu0 0
    %4607 = vmatpush1.bf16.msra.mxu0 %v4365
    %4608 = vmatprep.subr.bf16.mxu0 0
    %4609 = vmatpush1.bf16.msra.mxu0 %v4366
    %4610 = vmatprep.subr.bf16.mxu0 0
    %4611 = vmatpush1.bf16.msra.mxu0 %v4367
    %4612 = vmatprep.subr.bf16.mxu0 0
    %4613 = vmatpush1.bf16.msra.mxu0 %v4368
    %4614 = vmatprep.subr.bf16.mxu0 0
    %4615 = vmatpush1.bf16.msra.mxu0 %v4369
    %4616 = vmatprep.subr.bf16.mxu0 0
    %4617 = vmatpush1.bf16.msra.mxu0 %v4370
    %4618 = vmatprep.subr.bf16.mxu0 0
    %4619 = vmatpush1.bf16.msra.mxu0 %v4371
    %4620 = vmatprep.subr.bf16.mxu0 0
    %4621 = vmatpush1.bf16.msra.mxu0 %v4372
    %4622 = vmatprep.subr.bf16.mxu0 0
    %4623 = vmatpush1.bf16.msra.mxu0 %v4373
    %4624 = vmatprep.subr.bf16.mxu0 0
    %4625 = vmatpush1.bf16.msra.mxu0 %v4374
    %4626 = vmatprep.subr.bf16.mxu0 0
    %4627 = vmatpush1.bf16.msra.mxu0 %v4375
    %4628 = vmatprep.subr.bf16.mxu0 0
    %4629 = vmatpush1.bf16.msra.mxu0 %v4376
    %4630 = vmatprep.subr.bf16.mxu0 0
    %4631 = vmatpush1.bf16.msra.mxu0 %v4377
    %4632 = vmatprep.subr.bf16.mxu0 0
    %4633 = vmatpush1.bf16.msra.mxu0 %v4378
    %4634 = vmatprep.subr.bf16.mxu0 0
    %4635 = vmatpush1.bf16.msra.mxu0 %v4379
    %4636 = vmatprep.subr.bf16.mxu0 0
    %4637 = vmatpush1.bf16.msra.mxu0 %v4380
    %4638 = vmatprep.mubr.bf16.mxu0 %v3735
    %4639 = vmatmul.mubr.bf16.gmra.mrb[0].mxu0 %v3734
    %v4640 = vpop.f32.mrb[0].mxu0
    %v4641 = vadd.f32 %v4480, %v4640
    %v4642 = vpop.f32.mrb[0].mxu0
    %v4643 = vpop.f32.mrb[0].mxu0
    %v4644 = vadd.f32 %v4483, %v4643
    %v4645 = vpop.f32.mrb[0].mxu0
    %4646 = vmatprep.mubr.bf16.mxu0 %v3737
    %4647 = vmatmul.mubr.bf16.gmra.mrb[0].mxu0 %v3736
    %v4648 = vpop.f32.mrb[0].mxu0
    %v4649 = vadd.f32 %v4488, %v4648
    %v4650 = vpop.f32.mrb[0].mxu0
    %v4651 = vpop.f32.mrb[0].mxu0
    %v4652 = vadd.f32 %v4491, %v4651
    %v4653 = vpop.f32.mrb[0].mxu0
    %4654 = vmatprep.mubr.bf16.mxu0 %v3739
    %4655 = vmatmul.mubr.bf16.gmra.mrb[0].mxu0 %v3738
    %v4656 = vpop.f32.mrb[0].mxu0
    %v4657 = vadd.f32 %v4496, %v4656
    %v4658 = vpop.f32.mrb[0].mxu0
    %v4659 = vpop.f32.mrb[0].mxu0
    %v4660 = vadd.f32 %v4499, %v4659
    %v4661 = vpop.f32.mrb[0].mxu0
    %4662 = vmatprep.mubr.bf16.mxu0 %v3741
    %4663 = vmatmul.mubr.bf16.gmra.mrb[0].mxu0 %v3740
    %v4664 = vpop.f32.mrb[0].mxu0
    %v4665 = vadd.f32 %v4504, %v4664
    %v4666 = vpop.f32.mrb[0].mxu0
    %v4667 = vpop.f32.mrb[0].mxu0
    %v4668 = vadd.f32 %v4507, %v4667
    %v4669 = vpop.f32.mrb[0].mxu0
    %4670 = vmatprep.mubr.bf16.mxu0 %v3743
    %4671 = vmatmul.mubr.bf16.gmra.mrb[0].mxu0 %v3742
    %v4672 = vpop.f32.mrb[0].mxu0
    %v4673 = vadd.f32 %v4512, %v4672
    %v4674 = vpop.f32.mrb[0].mxu0
    %v4675 = vpop.f32.mrb[0].mxu0
    %v4676 = vadd.f32 %v4515, %v4675
    %v4677 = vpop.f32.mrb[0].mxu0
    %4678 = vmatprep.mubr.bf16.mxu0 %v3745
    %4679 = vmatmul.mubr.bf16.gmra.mrb[0].mxu0 %v3744
    %v4680 = vpop.f32.mrb[0].mxu0
    %v4681 = vadd.f32 %v4520, %v4680
    %v4682 = vpop.f32.mrb[0].mxu0
    %v4683 = vpop.f32.mrb[0].mxu0
    %v4684 = vadd.f32 %v4523, %v4683
    %v4685 = vpop.f32.mrb[0].mxu0
    %4686 = vmatprep.mubr.bf16.mxu0 %v3747
    %4687 = vmatmul.mubr.bf16.gmra.mrb[0].mxu0 %v3746
    %v4688 = vpop.f32.mrb[0].mxu0
    %v4689 = vadd.f32 %v4528, %v4688
    %v4690 = vpop.f32.mrb[0].mxu0
    %v4691 = vpop.f32.mrb[0].mxu0
    %v4692 = vadd.f32 %v4531, %v4691
    %v4693 = vpop.f32.mrb[0].mxu0
    %4694 = vmatprep.mubr.bf16.mxu0 %v3749
    %4695 = vmatmul.mubr.bf16.gmra.mrb[0].mxu0 %v3748
    %v4696 = vpop.f32.mrb[0].mxu0
    %v4697 = vadd.f32 %v4536, %v4696
    %v4698 = vpop.f32.mrb[0].mxu0
    %v4699 = vpop.f32.mrb[0].mxu0
    %v4700 = vadd.f32 %v4539, %v4699
    %v4701 = vpop.f32.mrb[0].mxu0
    %4702 = vmatprep.mubr.bf16.mxu0 %v3751
    %4703 = vmatmul.mubr.bf16.gmra.mrb[0].mxu0 %v3750
    %v4704 = vpop.f32.mrb[0].mxu0
    %v4705 = vadd.f32 %v4544, %v4704
    %v4706 = vpop.f32.mrb[0].mxu0
    %v4707 = vpop.f32.mrb[0].mxu0
    %v4708 = vadd.f32 %v4547, %v4707
    %v4709 = vpop.f32.mrb[0].mxu0
    %4710 = vmatprep.mubr.bf16.mxu0 %v3753
    %4711 = vmatmul.mubr.bf16.gmra.mrb[0].mxu0 %v3752
    %v4712 = vpop.f32.mrb[0].mxu0
    %v4713 = vadd.f32 %v4552, %v4712
    %v4714 = vpop.f32.mrb[0].mxu0
    %v4715 = vpop.f32.mrb[0].mxu0
    %v4716 = vadd.f32 %v4555, %v4715
    %v4717 = vpop.f32.mrb[0].mxu0
    %4718 = vmatprep.mubr.bf16.mxu0 %v3755
    %4719 = vmatmul.mubr.bf16.gmra.mrb[0].mxu0 %v3754
    %v4720 = vpop.f32.mrb[0].mxu0
    %v4721 = vadd.f32 %v4560, %v4720
    %v4722 = vpop.f32.mrb[0].mxu0
    %v4723 = vpop.f32.mrb[0].mxu0
    %v4724 = vadd.f32 %v4563, %v4723
    %v4725 = vpop.f32.mrb[0].mxu0
    %4726 = vmatprep.mubr.bf16.mxu0 %v3757
    %4727 = vmatmul.mubr.bf16.gmra.mrb[0].mxu0 %v3756
    %v4728 = vpop.f32.mrb[0].mxu0
    %v4729 = vadd.f32 %v4568, %v4728
    %v4730 = vpop.f32.mrb[0].mxu0
    %v4731 = vpop.f32.mrb[0].mxu0
    %v4732 = vadd.f32 %v4571, %v4731
    %v4733 = vpop.f32.mrb[0].mxu0
    %4734 = vmatprep.mubr.bf16.mxu0 %v3759
    %4735 = vmatmul.mubr.bf16.gmra.mrb[0].mxu0 %v3758
    %v4736 = vpop.f32.mrb[0].mxu0
    %v4737 = vadd.f32 %v4576, %v4736
    %v4738 = vpop.f32.mrb[0].mxu0
    %v4739 = vpop.f32.mrb[0].mxu0
    %v4740 = vadd.f32 %v4579, %v4739
    %v4741 = vpop.f32.mrb[0].mxu0
    %4742 = vmatprep.mubr.bf16.mxu0 %v3761
    %4743 = vmatmul.mubr.bf16.gmra.mrb[0].mxu0 %v3760
    %v4744 = vpop.f32.mrb[0].mxu0
    %v4745 = vadd.f32 %v4584, %v4744
    %v4746 = vpop.f32.mrb[0].mxu0
    %v4747 = vpop.f32.mrb[0].mxu0
    %v4748 = vadd.f32 %v4587, %v4747
    %v4749 = vpop.f32.mrb[0].mxu0
    %4750 = vmatprep.mubr.bf16.mxu0 %v3763
    %4751 = vmatmul.mubr.bf16.gmra.mrb[0].mxu0 %v3762
    %v4752 = vpop.f32.mrb[0].mxu0
    %v4753 = vadd.f32 %v4592, %v4752
    %v4754 = vpop.f32.mrb[0].mxu0
    %v4755 = vpop.f32.mrb[0].mxu0
    %v4756 = vadd.f32 %v4595, %v4755
    %v4757 = vpop.f32.mrb[0].mxu0
    %4758 = vmatprep.mubr.bf16.mxu0 %v3765
    %4759 = vmatmul.mubr.bf16.gmra.mrb[0].mxu0 %v3764
    %v4760 = vpop.f32.mrb[0].mxu0
    %v4761 = vadd.f32 %v4600, %v4760
    %v4762 = vpop.f32.mrb[0].mxu0
    %v4763 = vpop.f32.mrb[0].mxu0
    %v4764 = vadd.f32 %v4603, %v4763
    %v4765 = vpop.f32.mrb[0].mxu0
    %4766 = vdwg.mxu0
    %4767 = vmatprep.subr.bf16.mxu0 0
    %4768 = vmatpush1.bf16.msra.mxu0 %v4381
    %4769 = vmatprep.subr.bf16.mxu0 0
    %4770 = vmatpush1.bf16.msra.mxu0 %v4382
    %4771 = vmatprep.subr.bf16.mxu0 0
    %4772 = vmatpush1.bf16.msra.mxu0 %v4383
    %4773 = vmatprep.subr.bf16.mxu0 0
    %4774 = vmatpush1.bf16.msra.mxu0 %v4384
    %4775 = vmatprep.subr.bf16.mxu0 0
    %4776 = vmatpush1.bf16.msra.mxu0 %v4385
    %4777 = vmatprep.subr.bf16.mxu0 0
    %4778 = vmatpush1.bf16.msra.mxu0 %v4386
    %4779 = vmatprep.subr.bf16.mxu0 0
    %4780 = vmatpush1.bf16.msra.mxu0 %v4387
    %4781 = vmatprep.subr.bf16.mxu0 0
    %4782 = vmatpush1.bf16.msra.mxu0 %v4388
    %4783 = vmatprep.subr.bf16.mxu0 0
    %4784 = vmatpush1.bf16.msra.mxu0 %v4389
    %4785 = vmatprep.subr.bf16.mxu0 0
    %4786 = vmatpush1.bf16.msra.mxu0 %v4390
    %4787 = vmatprep.subr.bf16.mxu0 0
    %4788 = vmatpush1.bf16.msra.mxu0 %v4391
    %4789 = vmatprep.subr.bf16.mxu0 0
    %4790 = vmatpush1.bf16.msra.mxu0 %v4392
    %4791 = vmatprep.subr.bf16.mxu0 0
    %4792 = vmatpush1.bf16.msra.mxu0 %v4393
    %4793 = vmatprep.subr.bf16.mxu0 0
    %4794 = vmatpush1.bf16.msra.mxu0 %v4394
    %4795 = vmatprep.subr.bf16.mxu0 0
    %4796 = vmatpush1.bf16.msra.mxu0 %v4395
    %4797 = vmatprep.subr.bf16.mxu0 0
    %4798 = vmatpush1.bf16.msra.mxu0 %v4396
    %4799 = vmatprep.mubr.bf16.mxu0 %v4023
    %4800 = vmatmul.mubr.bf16.gmra.mrb[0].mxu0 %v4022
    %v4801 = vpop.f32.mrb[0].mxu0
    %v4802 = vadd.f32 %v4641, %v4801
    %v4803 = vpop.f32.mrb[0].mxu0
    %v4804 = vpop.f32.mrb[0].mxu0
    %v4805 = vadd.f32 %v4644, %v4804
    %v4806 = vpop.f32.mrb[0].mxu0
    %4807 = vmatprep.mubr.bf16.mxu0 %v4025
    %4808 = vmatmul.mubr.bf16.gmra.mrb[0].mxu0 %v4024
    %v4809 = vpop.f32.mrb[0].mxu0
    %v4810 = vadd.f32 %v4649, %v4809
    %v4811 = vpop.f32.mrb[0].mxu0
    %v4812 = vpop.f32.mrb[0].mxu0
    %v4813 = vadd.f32 %v4652, %v4812
    %v4814 = vpop.f32.mrb[0].mxu0
    %4815 = vmatprep.mubr.bf16.mxu0 %v4027
    %4816 = vmatmul.mubr.bf16.gmra.mrb[0].mxu0 %v4026
    %v4817 = vpop.f32.mrb[0].mxu0
    %v4818 = vadd.f32 %v4657, %v4817
    %v4819 = vpop.f32.mrb[0].mxu0
    %v4820 = vpop.f32.mrb[0].mxu0
    %v4821 = vadd.f32 %v4660, %v4820
    %v4822 = vpop.f32.mrb[0].mxu0
    %4823 = vmatprep.mubr.bf16.mxu0 %v4029
    %4824 = vmatmul.mubr.bf16.gmra.mrb[0].mxu0 %v4028
    %v4825 = vpop.f32.mrb[0].mxu0
    %v4826 = vadd.f32 %v4665, %v4825
    %v4827 = vpop.f32.mrb[0].mxu0
    %v4828 = vpop.f32.mrb[0].mxu0
    %v4829 = vadd.f32 %v4668, %v4828
    %v4830 = vpop.f32.mrb[0].mxu0
    %4831 = vmatprep.mubr.bf16.mxu0 %v4031
    %4832 = vmatmul.mubr.bf16.gmra.mrb[0].mxu0 %v4030
    %v4833 = vpop.f32.mrb[0].mxu0
    %v4834 = vadd.f32 %v4673, %v4833
    %v4835 = vpop.f32.mrb[0].mxu0
    %v4836 = vpop.f32.mrb[0].mxu0
    %v4837 = vadd.f32 %v4676, %v4836
    %v4838 = vpop.f32.mrb[0].mxu0
    %4839 = vmatprep.mubr.bf16.mxu0 %v4033
    %4840 = vmatmul.mubr.bf16.gmra.mrb[0].mxu0 %v4032
    %v4841 = vpop.f32.mrb[0].mxu0
    %v4842 = vadd.f32 %v4681, %v4841
    %v4843 = vpop.f32.mrb[0].mxu0
    %v4844 = vpop.f32.mrb[0].mxu0
    %v4845 = vadd.f32 %v4684, %v4844
    %v4846 = vpop.f32.mrb[0].mxu0
    %4847 = vmatprep.mubr.bf16.mxu0 %v4035
    %4848 = vmatmul.mubr.bf16.gmra.mrb[0].mxu0 %v4034
    %v4849 = vpop.f32.mrb[0].mxu0
    %v4850 = vadd.f32 %v4689, %v4849
    %v4851 = vpop.f32.mrb[0].mxu0
    %v4852 = vpop.f32.mrb[0].mxu0
    %v4853 = vadd.f32 %v4692, %v4852
    %v4854 = vpop.f32.mrb[0].mxu0
    %4855 = vmatprep.mubr.bf16.mxu0 %v4037
    %4856 = vmatmul.mubr.bf16.gmra.mrb[0].mxu0 %v4036
    %v4857 = vpop.f32.mrb[0].mxu0
    %v4858 = vadd.f32 %v4697, %v4857
    %v4859 = vpop.f32.mrb[0].mxu0
    %v4860 = vpop.f32.mrb[0].mxu0
    %v4861 = vadd.f32 %v4700, %v4860
    %v4862 = vpop.f32.mrb[0].mxu0
    %4863 = vmatprep.mubr.bf16.mxu0 %v4039
    %4864 = vmatmul.mubr.bf16.gmra.mrb[0].mxu0 %v4038
    %v4865 = vpop.f32.mrb[0].mxu0
    %v4866 = vadd.f32 %v4705, %v4865
    %v4867 = vpop.f32.mrb[0].mxu0
    %v4868 = vpop.f32.mrb[0].mxu0
    %v4869 = vadd.f32 %v4708, %v4868
    %v4870 = vpop.f32.mrb[0].mxu0
    %4871 = vmatprep.mubr.bf16.mxu0 %v4041
    %4872 = vmatmul.mubr.bf16.gmra.mrb[0].mxu0 %v4040
    %v4873 = vpop.f32.mrb[0].mxu0
    %v4874 = vadd.f32 %v4713, %v4873
    %v4875 = vpop.f32.mrb[0].mxu0
    %v4876 = vpop.f32.mrb[0].mxu0
    %v4877 = vadd.f32 %v4716, %v4876
    %v4878 = vpop.f32.mrb[0].mxu0
    %4879 = vmatprep.mubr.bf16.mxu0 %v4043
    %4880 = vmatmul.mubr.bf16.gmra.mrb[0].mxu0 %v4042
    %v4881 = vpop.f32.mrb[0].mxu0
    %v4882 = vadd.f32 %v4721, %v4881
    %v4883 = vpop.f32.mrb[0].mxu0
    %v4884 = vpop.f32.mrb[0].mxu0
    %v4885 = vadd.f32 %v4724, %v4884
    %v4886 = vpop.f32.mrb[0].mxu0
    %4887 = vmatprep.mubr.bf16.mxu0 %v4045
    %4888 = vmatmul.mubr.bf16.gmra.mrb[0].mxu0 %v4044
    %v4889 = vpop.f32.mrb[0].mxu0
    %v4890 = vadd.f32 %v4729, %v4889
    %v4891 = vpop.f32.mrb[0].mxu0
    %v4892 = vpop.f32.mrb[0].mxu0
    %v4893 = vadd.f32 %v4732, %v4892
    %v4894 = vpop.f32.mrb[0].mxu0
    %4895 = vmatprep.mubr.bf16.mxu0 %v4047
    %4896 = vmatmul.mubr.bf16.gmra.mrb[0].mxu0 %v4046
    %v4897 = vpop.f32.mrb[0].mxu0
    %v4898 = vadd.f32 %v4737, %v4897
    %v4899 = vpop.f32.mrb[0].mxu0
    %v4900 = vpop.f32.mrb[0].mxu0
    %v4901 = vadd.f32 %v4740, %v4900
    %v4902 = vpop.f32.mrb[0].mxu0
    %4903 = vmatprep.mubr.bf16.mxu0 %v4049
    %4904 = vmatmul.mubr.bf16.gmra.mrb[0].mxu0 %v4048
    %v4905 = vpop.f32.mrb[0].mxu0
    %v4906 = vadd.f32 %v4745, %v4905
    %v4907 = vpop.f32.mrb[0].mxu0
    %v4908 = vpop.f32.mrb[0].mxu0
    %v4909 = vadd.f32 %v4748, %v4908
    %v4910 = vpop.f32.mrb[0].mxu0
    %4911 = vmatprep.mubr.bf16.mxu0 %v4051
    %4912 = vmatmul.mubr.bf16.gmra.mrb[0].mxu0 %v4050
    %v4913 = vpop.f32.mrb[0].mxu0
    %v4914 = vadd.f32 %v4753, %v4913
    %v4915 = vpop.f32.mrb[0].mxu0
    %v4916 = vpop.f32.mrb[0].mxu0
    %v4917 = vadd.f32 %v4756, %v4916
    %v4918 = vpop.f32.mrb[0].mxu0
    %4919 = vmatprep.mubr.bf16.mxu0 %v4053
    %4920 = vmatmul.mubr.bf16.gmra.mrb[0].mxu0 %v4052
    %v4921 = vpop.f32.mrb[0].mxu0
    %v4922 = vadd.f32 %v4761, %v4921
    %v4923 = vpop.f32.mrb[0].mxu0
    %v4924 = vpop.f32.mrb[0].mxu0
    %v4925 = vadd.f32 %v4764, %v4924
    %v4926 = vpop.f32.mrb[0].mxu0
    %4927 = vdwg.mxu0
    %v4928 = vmax.f32 %v4802, 0.0
    %v4929 = vmax.f32 %v4805, 0.0
    %v4930 = vmax.f32 %v4810, 0.0
    %v4931 = vmax.f32 %v4813, 0.0
    %v4932 = vmax.f32 %v4818, 0.0
    %v4933 = vmax.f32 %v4821, 0.0
    %v4934 = vmax.f32 %v4826, 0.0
    %v4935 = vmax.f32 %v4829, 0.0
    %v4936 = vmax.f32 %v4834, 0.0
    %v4937 = vmax.f32 %v4837, 0.0
    %v4938 = vmax.f32 %v4842, 0.0
    %v4939 = vmax.f32 %v4845, 0.0
    %v4940 = vmax.f32 %v4850, 0.0
    %v4941 = vmax.f32 %v4853, 0.0
    %v4942 = vmax.f32 %v4858, 0.0
    %v4943 = vmax.f32 %v4861, 0.0
    %v4944 = vmax.f32 %v4866, 0.0
    %v4945 = vmax.f32 %v4869, 0.0
    %v4946 = vmax.f32 %v4874, 0.0
    %v4947 = vmax.f32 %v4877, 0.0
    %v4948 = vmax.f32 %v4882, 0.0
    %v4949 = vmax.f32 %v4885, 0.0
    %v4950 = vmax.f32 %v4890, 0.0
    %v4951 = vmax.f32 %v4893, 0.0
    %v4952 = vmax.f32 %v4898, 0.0
    %v4953 = vmax.f32 %v4901, 0.0
    %v4954 = vmax.f32 %v4906, 0.0
    %v4955 = vmax.f32 %v4909, 0.0
    %v4956 = vmax.f32 %v4914, 0.0
    %v4957 = vmax.f32 %v4917, 0.0
    %v4958 = vmax.f32 %v4922, 0.0
    %v4959 = vmax.f32 %v4925, 0.0
    %v4960 = vld [vmem:[%s1] sm:$0xff]
    %v4961 = vld [vmem:[%s1 + $0x8] sm:$0xff]
    %v4962 = vpack.c.bf16 %v4929, %v4928
    %v4963 = vpack.c.bf16 %v4931, %v4930
    %v4964 = vpack.c.bf16 %v4933, %v4932
    %v4965 = vpack.c.bf16 %v4935, %v4934
    %v4966 = vpack.c.bf16 %v4937, %v4936
    %v4967 = vpack.c.bf16 %v4939, %v4938
    %v4968 = vpack.c.bf16 %v4941, %v4940
    %v4969 = vpack.c.bf16 %v4943, %v4942
    %v4970 = vpack.c.bf16 %v4945, %v4944
    %v4971 = vpack.c.bf16 %v4947, %v4946
    %v4972 = vpack.c.bf16 %v4949, %v4948
    %v4973 = vpack.c.bf16 %v4951, %v4950
    %v4974 = vpack.c.bf16 %v4953, %v4952
    %v4975 = vpack.c.bf16 %v4955, %v4954
    %v4976 = vpack.c.bf16 %v4957, %v4956
    %v4977 = vpack.c.bf16 %v4959, %v4958
    %v4980 = vunpack.c.l.b16 %v4960
    %v4981 = vunpack.c.h.b16 %v4960
    %v4982 = vunpack.c.l.b16 %v4961
    %v4983 = vunpack.c.h.b16 %v4961
    %v4984 = vpack.c.b16 %v4982, %v4980
    %v4985 = vpack.c.b16 %v4983, %v4981
    %4988 = vmatprep.subr.bf16.mxu0 0
    %4989 = vmatpush1.bf16.msra.mxu0 %v4962
    %4990 = vmatprep.subr.bf16.mxu0 0
    %4991 = vmatpush1.bf16.msra.mxu0 %v4963
    %4992 = vmatprep.subr.bf16.mxu0 0
    %4993 = vmatpush1.bf16.msra.mxu0 %v4964
    %4994 = vmatprep.subr.bf16.mxu0 0
    %4995 = vmatpush1.bf16.msra.mxu0 %v4965
    %4996 = vmatprep.subr.bf16.mxu0 0
    %4997 = vmatpush1.bf16.msra.mxu0 %v4966
    %4998 = vmatprep.subr.bf16.mxu0 0
    %4999 = vmatpush1.bf16.msra.mxu0 %v4967
    %5000 = vmatprep.subr.bf16.mxu0 0
    %5001 = vmatpush1.bf16.msra.mxu0 %v4968
    %5002 = vmatprep.subr.bf16.mxu0 0
    %5003 = vmatpush1.bf16.msra.mxu0 %v4969
    %5004 = vmatprep.subr.bf16.mxu0 0
    %5005 = vmatpush1.bf16.msra.mxu0 %v4970
    %5006 = vmatprep.subr.bf16.mxu0 0
    %5007 = vmatpush1.bf16.msra.mxu0 %v4971
    %5008 = vmatprep.subr.bf16.mxu0 0
    %5009 = vmatpush1.bf16.msra.mxu0 %v4972
    %5010 = vmatprep.subr.bf16.mxu0 0
    %5011 = vmatpush1.bf16.msra.mxu0 %v4973
    %5012 = vmatprep.subr.bf16.mxu0 0
    %5013 = vmatpush1.bf16.msra.mxu0 %v4974
    %5014 = vmatprep.subr.bf16.mxu0 0
    %5015 = vmatpush1.bf16.msra.mxu0 %v4975
    %5016 = vmatprep.subr.bf16.mxu0 0
    %5017 = vmatpush1.bf16.msra.mxu0 %v4976
    %5018 = vmatprep.subr.bf16.mxu0 0
    %5019 = vmatpush1.bf16.msra.mxu0 %v4977
    %5020 = vmatprep.mubr.bf16.mxu0 %v4985
    %5021 = vmatmul.mubr.bf16.gmra.mrb[0].mxu0 %v4984
    %v5022 = vpop.f32.mrb[0].mxu0
    %v5023 = vadd.f32 0.0, %v5022
    %v5024 = vpop.f32.mrb[0].mxu0
    %v5025 = vpop.f32.mrb[0].mxu0
    %v5026 = vadd.f32 0.0, %v5025
    %v5027 = vpop.f32.mrb[0].mxu0
    %5028 = vdwg.mxu0
    %v5029 = vpack.c.bf16 %v5026, %v5023
    %v5030 = vld [vmem:[%s8] sm:$0xf]
    %v5031 = vld [vmem:[%s8 + $0x4] sm:$0xf]
    %v5032 = vld [vmem:[%s8 + $0x8] sm:$0xf]
    %v5033 = vld [vmem:[%s8 + $0xc] sm:$0xf]
    %v5034 = vld [vmem:[%s8 + $0x10] sm:$0xf]
    %v5035 = vld [vmem:[%s8 + $0x14] sm:$0xf]
    %v5036 = vld [vmem:[%s8 + $0x18] sm:$0xf]
    %v5037 = vld [vmem:[%s8 + $0x1c] sm:$0xf]
    %v5038 = vld [vmem:[%s8 + $0x20] sm:$0xf]
    %v5039 = vld [vmem:[%s8 + $0x24] sm:$0xf]
    %v5040 = vld [vmem:[%s8 + $0x28] sm:$0xf]
    %v5041 = vld [vmem:[%s8 + $0x2c] sm:$0xf]
    %v5042 = vld [vmem:[%s8 + $0x30] sm:$0xf]
    %v5043 = vld [vmem:[%s8 + $0x34] sm:$0xf]
    %v5044 = vld [vmem:[%s8 + $0x38] sm:$0xf]
    %v5045 = vld [vmem:[%s8 + $0x3c] sm:$0xf]
    %v5046 = vld [vmem:[%s9] sm:$0x1]
    %v5048 = vlaneseq
    %v5049 = vshrl.u32 %v5048, 7
    %v5050 = vsub.s32 0, %v5049
    %v5051 = vrot.slane %v5046, %v5050
    %v5069 = vunpack.c.l.b16 %v5030
    %v5070 = vunpack.c.l.b16 %v5031
    %v5071 = vunpack.c.l.b16 %v5032
    %v5072 = vunpack.c.l.b16 %v5033
    %v5073 = vunpack.c.l.b16 %v5034
    %v5074 = vunpack.c.l.b16 %v5035
    %v5075 = vunpack.c.l.b16 %v5036
    %v5076 = vunpack.c.l.b16 %v5037
    %v5077 = vunpack.c.l.b16 %v5038
    %v5078 = vunpack.c.l.b16 %v5039
    %v5079 = vunpack.c.l.b16 %v5040
    %v5080 = vunpack.c.l.b16 %v5041
    %v5081 = vunpack.c.l.b16 %v5042
    %v5082 = vunpack.c.l.b16 %v5043
    %v5083 = vunpack.c.l.b16 %v5044
    %v5084 = vunpack.c.l.b16 %v5045
    %v5085 = vpack.c.b16 %v5070, %v5069
    %v5086 = vpack.c.b16 %v5072, %v5071
    %v5087 = vpack.c.b16 %v5074, %v5073
    %v5088 = vpack.c.b16 %v5076, %v5075
    %v5089 = vpack.c.b16 %v5078, %v5077
    %v5090 = vpack.c.b16 %v5080, %v5079
    %v5091 = vpack.c.b16 %v5082, %v5081
    %v5092 = vpack.c.b16 %v5084, %v5083
    %5101 = vmatprep.subr.bf16.mxu0 0
    %5102 = vmatpush1.bf16.msra.mxu0 %v5085
    %5103 = vmatprep.subr.bf16.mxu0 0
    %5104 = vmatpush1.bf16.msra.mxu0 %v5086
    %5105 = vmatprep.subr.bf16.mxu0 0
    %5106 = vmatpush1.bf16.msra.mxu0 %v5087
    %5107 = vmatprep.subr.bf16.mxu0 0
    %5108 = vmatpush1.bf16.msra.mxu0 %v5088
    %5109 = vmatprep.subr.bf16.mxu0 0
    %5110 = vmatpush1.bf16.msra.mxu0 %v5089
    %5111 = vmatprep.subr.bf16.mxu0 0
    %5112 = vmatpush1.bf16.msra.mxu0 %v5090
    %5113 = vmatprep.subr.bf16.mxu0 0
    %5114 = vmatpush1.bf16.msra.mxu0 %v5091
    %5115 = vmatprep.subr.bf16.mxu0 0
    %5116 = vmatpush1.bf16.msra.mxu0 %v5092
    %5117 = vmatprep.subr.bf16.mxu0 0
    %5118 = vmatpush1.bf16.msra.mxu0 0
    %5119 = vmatprep.subr.bf16.mxu0 0
    %5120 = vmatpush1.bf16.msra.mxu0 0
    %5121 = vmatprep.subr.bf16.mxu0 0
    %5122 = vmatpush1.bf16.msra.mxu0 0
    %5123 = vmatprep.subr.bf16.mxu0 0
    %5124 = vmatpush1.bf16.msra.mxu0 0
    %5125 = vmatprep.subr.bf16.mxu0 0
    %5126 = vmatpush1.bf16.msra.mxu0 0
    %5127 = vmatprep.subr.bf16.mxu0 0
    %5128 = vmatpush1.bf16.msra.mxu0 0
    %5129 = vmatprep.subr.bf16.mxu0 0
    %5130 = vmatpush1.bf16.msra.mxu0 0
    %5131 = vmatprep.subr.bf16.mxu0 0
    %5132 = vmatpush1.bf16.msra.mxu0 0
    %5133 = vmatprep.mubr.bf16.mxu0 0
    %5134 = vmatmul.mubr.bf16.gmra.mrb[0].mxu0 %v5029
    %v5135 = vpop.f32.mrb[0].mxu0
    %v5136 = vadd.f32 %v5051, %v5135
    %v5137 = vpop.f32.mrb[0].mxu0
    %v5138 = vpop.f32.mrb[0].mxu0
    %v5139 = vadd.f32 %v5051, %v5138
    %v5140 = vpop.f32.mrb[0].mxu0
    %5141 = vdwg.mxu0
    %5142 = vmax.xlane.f32.xlu0 %v5136
    %v5143 = vpop.xlane.xlu0 %5142
    %5144 = vmax.xlane.f32.xlu0 %v5139
    %v5145 = vpop.xlane.xlu0 %5144
    %v5146 = vsub.f32 %v5136, %v5143
    %v5147 = vsub.f32 %v5139, %v5145
    %v5148 = vmul.f32 %v5146, 1.442695
    %v5149 = vpow.pop %v5148
    %v5150 = vmul.f32 %v5147, 1.442695
    %v5151 = vpow.pop %v5150
    %5152 = vadd.xlane.f32.xlu0 %v5149
    %v5153 = vpop.xlane.xlu0 %5152
    %5154 = vadd.xlane.f32.xlu0 %v5151
    %v5155 = vpop.xlane.xlu0 %5154
    %v5156 = vlog2.pop %v5153
    %v5157 = vmul.f32 %v5156, 0.6931472
    %v5158 = vlog2.pop %v5155
    %v5159 = vmul.f32 %v5158, 0.6931472
    %v5160 = vsub.f32 %v5146, %v5157
    %v5161 = vsub.f32 %v5147, %v5159
    %5162 = vst [vmem:[#allocation7] sm:$0xff] %v5160
    %5163 = vst [vmem:[#allocation7 + $0x8] sm:$0xff] %v5161
    // Predicated region
    $region50: #{tpu_custom_call.1} parent=1 // pred_check
      _
    $region51: #{tpu_custom_call.1} parent=1 // pred_check_branch
      %5165 = sbr.rel (0) target = $region53
    $region52: #{tpu_custom_call.1} parent=1 // pred_region
      %s5167 = ssub.s32 256, 256
      %5168 = vsyncadd [#allocation4], %s5167
      %s5169 = sshll.u32 [#allocation7], 4
      %s5170 = int_to_ptr.vmem [resolvable:$true] %s5169
      %5175 = dma.vmem_to_hbm [thread:$0]  %s5170, 256, %s10, [#allocation4], 128, 128, 8
    $region53: #{tpu_custom_call.1} parent=1 // pred_fallthru
      _
    // Predicated region
    $region54: #{tpu_custom_call.1} parent=1 // pred_check
      _
    $region55: #{tpu_custom_call.1} parent=1 // pred_check_branch
      %5177 = sbr.rel (0) target = $region57
    $region56: #{tpu_custom_call.1} parent=1 // pred_region
      %5178 = dma.done [#allocation4], 256
    $region57: #{tpu_custom_call.1} parent=1 // pred_fallthru
      _
    %5179 = vsyncpa [#allocation3], 1
    %5180 = vsyncpa [#allocation6], 1
    %5181 = vsyncpa [#allocation4], 1

</llo_original>
